<compile_context>
chip_gen: v5e
topology: v5e:2x2
jax: 0.10.0
libtpu: 0.0.40
codegen_flags: <defaults>
</compile_context>

<pallas_src>
import functools

import jax
import jax.numpy as jnp
from jax.experimental import pallas as pl
from jax.experimental.pallas import tpu as pltpu

_BN_EPS = 1e-5
_MAX_TILE = 1024  # lanes (spatial positions) per output tile; multiple of 128


# ----------------------------------------------------------------------------
# Pallas kernel: sum_s  W_s (Cout, 9*Cin_s) @ patches_s (9*Cin_s, TILE)
#                -> + bias -> ReLU -> [+ residual]
# ----------------------------------------------------------------------------
def _make_conv_kernel(n_src, has_res):
    def kernel(*refs):
        # refs: taps_0..taps_{n-1}, w_0..w_{n-1}, bias, [res], out
        o_ref = refs[-1]
        bias = refs[2 * n_src][...]                       # (Cout, 1) f32
        acc = jnp.dot(refs[n_src][...], refs[0][0],
                      preferred_element_type=jnp.float32)
        for s in range(1, n_src):
            acc = acc + jnp.dot(refs[n_src + s][...], refs[s][0],
                                preferred_element_type=jnp.float32)
        out = jnp.maximum(acc + bias, 0.0)
        if has_res:
            out = out + refs[2 * n_src + 1][0]            # residual (f32)
        o_ref[0] = out.astype(o_ref.dtype)
    return kernel


def _pick_tile(hw):
    if hw <= _MAX_TILE:
        return hw            # full dim -> always a legal block
    return _MAX_TILE         # multiple of 128; ragged last tile is masked


def _im2col_cm(x, d):
    """x: (N, C, H, W) -> channel-major patches (N, 9*C, H*W) in bf16."""
    n, c, h, w = x.shape
    xb = x.astype(jnp.bfloat16)
    xp = jnp.pad(xb, ((0, 0), (0, 0), (d, d), (d, d)))
    taps = [xp[:, :, ky * d:ky * d + h, kx * d:kx * d + w]
            for ky in range(3) for kx in range(3)]
    return jnp.concatenate(taps, axis=1).reshape(n, 9 * c, h * w)


# ----------------------------------------------------------------------------
# REBNCONV = Conv2d(3x3, padding=d, dilation=d) + BatchNorm2d (eval) + ReLU
# `sources` is a list of NCHW tensors (the torch.cat inputs, in cat order).
# ----------------------------------------------------------------------------
def rebnconv(sources, p, dirate, residual=None):
    n, _, h, w_sp = sources[0].shape
    hw = h * w_sp
    cout = p["w"].shape[0]

    # Fold conv bias + eval-mode BatchNorm into per-channel scale / bias.
    scale = p["gamma"] / jnp.sqrt(p["rvar"] + _BN_EPS)            # (Cout,)
    bias = ((p["b"] - p["rmean"]) * scale + p["beta"])
    bias = bias.reshape(cout, 1).astype(jnp.float32)

    taps, weights, cins = [], [], []
    off = 0
    for src in sources:
        c = src.shape[1]
        w_slice = p["w"][:, off:off + c]                          # (Cout,c,3,3)
        off += c
        # (Cout, c, 3, 3) -> (Cout, ky, kx, c) -> (Cout, 9*c), tap-major
        w2 = jnp.transpose(w_slice, (0, 2, 3, 1)).reshape(cout, 9 * c)
        w2 = (w2 * scale[:, None]).astype(jnp.bfloat16)           # fold BN scale
        weights.append(w2)
        taps.append(_im2col_cm(src, dirate))
        cins.append(c)

    tile = _pick_tile(hw)
    grid = (n, pl.cdiv(hw, tile))

    tap_specs = [pl.BlockSpec((1, 9 * c, tile), lambda b, i: (b, 0, i))
                 for c in cins]
    w_specs = [pl.BlockSpec((cout, 9 * c), lambda b, i: (0, 0)) for c in cins]
    bias_spec = pl.BlockSpec((cout, 1), lambda b, i: (0, 0))
    in_specs = tap_specs + w_specs + [bias_spec]
    inputs = taps + weights + [bias]

    has_res = residual is not None
    if has_res:
        res = residual.reshape(n, cout, hw).astype(jnp.float32)
        in_specs.append(pl.BlockSpec((1, cout, tile), lambda b, i: (b, 0, i)))
        inputs.append(res)

    out_spec = pl.BlockSpec((1, cout, tile), lambda b, i: (b, 0, i))

    # Advisory cost estimate for XLA scheduling around the 9 pallas_calls.
    total_cin = sum(cins)
    flops = 2 * n * hw * 9 * total_cin * cout
    bytes_accessed = (sum(int(t.size) * 2 for t in taps)
                      + sum(int(wt.size) * 2 for wt in weights)
                      + cout * 4
                      + n * cout * hw * 4 * (2 if has_res else 1))
    cost = pl.CostEstimate(flops=flops, transcendentals=0,
                           bytes_accessed=bytes_accessed)

    # Rough per-step VMEM (double-buffered inputs/outputs, (8,128) padding).
    pad8 = lambda v: -(-v // 8) * 8
    pad128 = lambda v: -(-v // 128) * 128
    tile_p = pad128(tile)
    vmem = 0
    for c in cins:
        vmem += 2 * pad8(9 * c) * tile_p * 2          # bf16 patch tiles x2
        vmem += pad8(cout) * pad128(9 * c) * 2        # bf16 weights
    vmem += pad8(cout) * 128 * 4                      # bias
    vmem += 2 * pad8(cout) * tile_p * 4               # f32 output tiles x2
    if has_res:
        vmem += 2 * pad8(cout) * tile_p * 4
    vmem_limit = int(min(max(2 * vmem, 32 * 1024 * 1024), 48 * 1024 * 1024))

    out = pl.pallas_call(
        _make_conv_kernel(len(sources), has_res),
        out_shape=jax.ShapeDtypeStruct((n, cout, hw), jnp.float32),
        grid=grid,
        in_specs=in_specs,
        out_specs=out_spec,
        compiler_params=pltpu.CompilerParams(
            dimension_semantics=("parallel", "parallel"),
            vmem_limit_bytes=vmem_limit),
        cost_estimate=cost,
    )(*inputs)
    return out.reshape(n, cout, h, w_sp)


# ----------------------------------------------------------------------------
# Pooling / upsampling glue (plain JAX, NCHW)
# ----------------------------------------------------------------------------
def maxpool2x2_ceil(x):
    """MaxPool2d(kernel=2, stride=2, ceil_mode=True), NCHW."""
    n, c, h, w = x.shape
    ph, pw = (-h) % 2, (-w) % 2
    if ph or pw:
        x = jnp.pad(x, ((0, 0), (0, 0), (0, ph), (0, pw)),
                    constant_values=-jnp.inf)
    n, c, h2, w2 = x.shape
    return x.reshape(n, c, h2 // 2, 2, w2 // 2, 2).max(axis=(3, 5))


def upsample_bilinear(x, out_h, out_w):
    """F.upsample(mode='bilinear') semantics (align_corners=False), NCHW."""
    n, c, h, w = x.shape

    def coords(out_size, in_size):
        s = in_size / out_size
        src = (jnp.arange(out_size, dtype=jnp.float32) + 0.5) * s - 0.5
        src = jnp.maximum(src, 0.0)
        i0 = jnp.minimum(jnp.floor(src).astype(jnp.int32), in_size - 1)
        i1 = jnp.minimum(i0 + 1, in_size - 1)
        frac = src - i0.astype(jnp.float32)
        return i0, i1, frac

    y0, y1, fy = coords(out_h, h)
    x0, x1, fx = coords(out_w, w)
    fy = fy[None, None, :, None]
    fx = fx[None, None, None, :]

    row0 = x[:, :, y0, :]
    row1 = x[:, :, y1, :]
    top = row0[:, :, :, x0] * (1.0 - fx) + row0[:, :, :, x1] * fx
    bot = row1[:, :, :, x0] * (1.0 - fx) + row1[:, :, :, x1] * fx
    return top * (1.0 - fy) + bot * fy


# ----------------------------------------------------------------------------
# RSU4 forward (NCHW in, NCHW out)
# ----------------------------------------------------------------------------
def rsu4_forward(x_nchw, params):
    x = x_nchw.astype(jnp.float32)

    hxin = rebnconv([x], params["in"], 1)
    hx1 = rebnconv([hxin], params["c1"], 1)
    hx = maxpool2x2_ceil(hx1)
    hx2 = rebnconv([hx], params["c2"], 1)
    hx = maxpool2x2_ceil(hx2)
    hx3 = rebnconv([hx], params["c3"], 1)
    hx4 = rebnconv([hx3], params["c4"], 2)

    # decoder: torch.cat inputs passed as separate sources (no HBM concat)
    hx3d = rebnconv([hx4, hx3], params["d3"], 1)
    hx3dup = upsample_bilinear(hx3d, hx2.shape[2], hx2.shape[3])
    hx2d = rebnconv([hx3dup, hx2], params["d2"], 1)
    hx2dup = upsample_bilinear(hx2d, hx1.shape[2], hx1.shape[3])
    # final REBNCONV with the residual add (hx1d + hxin) fused in the kernel
    return rebnconv([hx2dup, hx1], params["d1"], 1, residual=hxin)


# ----------------------------------------------------------------------------
# Deterministic parameter init (shapes from RSU4.__init__)
# ----------------------------------------------------------------------------
def init_rebnconv_params(key, in_ch, out_ch):
    k1, k2, k3, k4, k5, k6 = jax.random.split(key, 6)
    return dict(
        w=jax.random.normal(k1, (out_ch, in_ch, 3, 3), jnp.float32) * 0.1,
        b=jax.random.normal(k2, (out_ch,), jnp.float32) * 0.1,
        gamma=1.0 + 0.1 * jax.random.normal(k3, (out_ch,), jnp.float32),
        beta=0.1 * jax.random.normal(k4, (out_ch,), jnp.float32),
        rmean=0.1 * jax.random.normal(k5, (out_ch,), jnp.float32),
        rvar=jax.random.uniform(k6, (out_ch,), jnp.float32, 0.5, 1.5),
    )


def init_rsu4_params(key, in_ch, mid_ch, out_ch):
    keys = jax.random.split(key, 8)
    return {
        "in": init_rebnconv_params(keys[0], in_ch, out_ch),
        "c1": init_rebnconv_params(keys[1], out_ch, mid_ch),
        "c2": init_rebnconv_params(keys[2], mid_ch, mid_ch),
        "c3": init_rebnconv_params(keys[3], mid_ch, mid_ch),
        "c4": init_rebnconv_params(keys[4], mid_ch, mid_ch),
        "d3": init_rebnconv_params(keys[5], mid_ch * 2, mid_ch),
        "d2": init_rebnconv_params(keys[6], mid_ch * 2, mid_ch),
        "d1": init_rebnconv_params(keys[7], mid_ch * 2, out_ch),
    }


if __name__ == "__main__":
    IN_CH, MID_CH, OUT_CH = 4, 8, 4
    N, H, W = 2, 16, 16

    root = jax.random.PRNGKey(0)
    k_params, k_x = jax.random.split(root)
    params = init_rsu4_params(k_params, IN_CH, MID_CH, OUT_CH)
    x = jax.random.normal(k_x, (N, IN_CH, H, W), jnp.float32)  # NCHW like torch

    fwd = jax.jit(functools.partial(rsu4_forward, params=params))
    out = fwd(x)
    jax.block_until_ready(out)

    assert out.shape == (N, OUT_CH, H, W), out.shape
    assert jnp.all(jnp.isfinite(out))
    print("KERNEL_OK")
</pallas_src>

<mosaic_0001>
module attributes {stable_mosaic.version = 11 : i64} {
  func.func @kernel(%arg0: i32, %arg1: i32, %arg2: memref<1x36x256xbf16, #tpu.memory_space<vmem>>, %arg3: memref<4x36xbf16, #tpu.memory_space<vmem>>, %arg4: memref<4x1xf32, #tpu.memory_space<vmem>>, %arg5: memref<1x4x256xf32, #tpu.memory_space<vmem>>) attributes {dimension_semantics = [#tpu.dimension_semantics<parallel>, #tpu.dimension_semantics<parallel>], iteration_bounds = array<i64: 2, 1>, scalar_prefetch = 0 : i64, scratch_operands = 0 : i64, tpu.core_type = #tpu.core_type<tc>, window_params = [{transform_indices = @transform_0, window_bounds = array<i64: 1, 36, 256>}, {pipeline_mode = #tpu.pipeline_mode<synchronous>, transform_indices = @transform_1, window_bounds = array<i64: 4, 36>}, {pipeline_mode = #tpu.pipeline_mode<synchronous>, transform_indices = @transform_2, window_bounds = array<i64: 4, 1>}, {transform_indices = @transform_3, window_bounds = array<i64: 1, 4, 256>}]} {
    %c0 = arith.constant 0 : index
    %c0_0 = arith.constant 0 : index
    %0 = vector.load %arg4[%c0, %c0_0] : memref<4x1xf32, #tpu.memory_space<vmem>>, vector<4x1xf32>
    %c0_1 = arith.constant 0 : index
    %c0_2 = arith.constant 0 : index
    %1 = vector.load %arg3[%c0_1, %c0_2] : memref<4x36xbf16, #tpu.memory_space<vmem>>, vector<4x36xbf16>
    %c0_3 = arith.constant 0 : index
    %c0_4 = arith.constant 0 : index
    %c0_5 = arith.constant 0 : index
    %2 = vector.load %arg2[%c0_3, %c0_4, %c0_5] : memref<1x36x256xbf16, #tpu.memory_space<vmem>>, vector<1x36x256xbf16>
    %3 = vector.shape_cast %2 : vector<1x36x256xbf16> to vector<36x256xbf16>
    %cst = arith.constant dense<0.000000e+00> : vector<4x256xf32>
    %4 = tpu.matmul %1, %3, %cst {dimension_numbers = #tpu.dot_dimension_numbers<[1], [0], [0], [1], [0, 0, 1, 1], [], []>} : vector<4x36xbf16>, vector<36x256xbf16>, vector<4x256xf32> -> vector<4x256xf32>
    %5 = vector.broadcast %0 : vector<4x1xf32> to vector<4x256xf32>
    %6 = arith.addf %4, %5 : vector<4x256xf32>
    %cst_6 = arith.constant 0.000000e+00 : f32
    %7 = vector.broadcast %cst_6 : f32 to vector<4x256xf32>
    %8 = arith.maximumf %6, %7 : vector<4x256xf32>
    %c0_7 = arith.constant 0 : index
    %c0_8 = arith.constant 0 : index
    %c0_9 = arith.constant 0 : index
    %9 = vector.load %arg5[%c0_7, %c0_8, %c0_9] : memref<1x4x256xf32, #tpu.memory_space<vmem>>, vector<1x4x256xf32>
    %10 = vector.shape_cast %9 : vector<1x4x256xf32> to vector<4x256xf32>
    %11 = vector.shape_cast %8 : vector<4x256xf32> to vector<1x4x256xf32>
    tpu.vector_store %arg5[%c0_7, %c0_8, %c0_9], %11 {strides = array<i32>} : memref<1x4x256xf32, #tpu.memory_space<vmem>>, vector<1x4x256xf32>,
    return
  }
  func.func @transform_0(%arg0: i32, %arg1: i32) -> (i32, i32, i32) {
    %c0_i32 = arith.constant 0 : i32
    %c0_i32_0 = arith.constant 0 : i32
    return %arg0, %c0_i32, %arg1 : i32, i32, i32
  }
  func.func @transform_1(%arg0: i32, %arg1: i32) -> (i32, i32) {
    %c0_i32 = arith.constant 0 : i32
    %c0_i32_0 = arith.constant 0 : i32
    %c0_i32_1 = arith.constant 0 : i32
    return %c0_i32, %c0_i32_0 : i32, i32
  }
  func.func @transform_2(%arg0: i32, %arg1: i32) -> (i32, i32) {
    %c0_i32 = arith.constant 0 : i32
    %c0_i32_0 = arith.constant 0 : i32
    %c0_i32_1 = arith.constant 0 : i32
    return %c0_i32, %c0_i32_0 : i32, i32
  }
  func.func @transform_3(%arg0: i32, %arg1: i32) -> (i32, i32, i32) {
    %c0_i32 = arith.constant 0 : i32
    %c0_i32_0 = arith.constant 0 : i32
    return %arg0, %c0_i32, %arg1 : i32, i32, i32
  }
}

module attributes {stable_mosaic.version = 11 : i64} {
  func.func @kernel(%arg0: i32, %arg1: i32, %arg2: memref<1x36x256xbf16, #tpu.memory_space<vmem>>, %arg3: memref<8x36xbf16, #tpu.memory_space<vmem>>, %arg4: memref<8x1xf32, #tpu.memory_space<vmem>>, %arg5: memref<1x8x256xf32, #tpu.memory_space<vmem>>) attributes {dimension_semantics = [#tpu.dimension_semantics<parallel>, #tpu.dimension_semantics<parallel>], iteration_bounds = array<i64: 2, 1>, scalar_prefetch = 0 : i64, scratch_operands = 0 : i64, tpu.core_type = #tpu.core_type<tc>, window_params = [{transform_indices = @transform_0, window_bounds = array<i64: 1, 36, 256>}, {pipeline_mode = #tpu.pipeline_mode<synchronous>, transform_indices = @transform_1, window_bounds = array<i64: 8, 36>}, {pipeline_mode = #tpu.pipeline_mode<synchronous>, transform_indices = @transform_2, window_bounds = array<i64: 8, 1>}, {transform_indices = @transform_3, window_bounds = array<i64: 1, 8, 256>}]} {
    %c0 = arith.constant 0 : index
    %c0_0 = arith.constant 0 : index
    %0 = vector.load %arg4[%c0, %c0_0] : memref<8x1xf32, #tpu.memory_space<vmem>>, vector<8x1xf32>
    %c0_1 = arith.constant 0 : index
    %c0_2 = arith.constant 0 : index
    %1 = vector.load %arg3[%c0_1, %c0_2] : memref<8x36xbf16, #tpu.memory_space<vmem>>, vector<8x36xbf16>
    %c0_3 = arith.constant 0 : index
    %c0_4 = arith.constant 0 : index
    %c0_5 = arith.constant 0 : index
    %2 = vector.load %arg2[%c0_3, %c0_4, %c0_5] : memref<1x36x256xbf16, #tpu.memory_space<vmem>>, vector<1x36x256xbf16>
    %3 = vector.shape_cast %2 : vector<1x36x256xbf16> to vector<36x256xbf16>
    %cst = arith.constant dense<0.000000e+00> : vector<8x256xf32>
    %4 = tpu.matmul %1, %3, %cst {dimension_numbers = #tpu.dot_dimension_numbers<[1], [0], [0], [1], [0, 0, 1, 1], [], []>} : vector<8x36xbf16>, vector<36x256xbf16>, vector<8x256xf32> -> vector<8x256xf32>
    %5 = vector.broadcast %0 : vector<8x1xf32> to vector<8x256xf32>
    %6 = arith.addf %4, %5 : vector<8x256xf32>
    %cst_6 = arith.constant 0.000000e+00 : f32
    %7 = vector.broadcast %cst_6 : f32 to vector<8x256xf32>
    %8 = arith.maximumf %6, %7 : vector<8x256xf32>
    %c0_7 = arith.constant 0 : index
    %c0_8 = arith.constant 0 : index
    %c0_9 = arith.constant 0 : index
    %9 = vector.load %arg5[%c0_7, %c0_8, %c0_9] : memref<1x8x256xf32, #tpu.memory_space<vmem>>, vector<1x8x256xf32>
    %10 = vector.shape_cast %9 : vector<1x8x256xf32> to vector<8x256xf32>
    %11 = vector.shape_cast %8 : vector<8x256xf32> to vector<1x8x256xf32>
    tpu.vector_store %arg5[%c0_7, %c0_8, %c0_9], %11 {strides = array<i32>} : memref<1x8x256xf32, #tpu.memory_space<vmem>>, vector<1x8x256xf32>,
    return
  }
  func.func @transform_0(%arg0: i32, %arg1: i32) -> (i32, i32, i32) {
    %c0_i32 = arith.constant 0 : i32
    %c0_i32_0 = arith.constant 0 : i32
    return %arg0, %c0_i32, %arg1 : i32, i32, i32
  }
  func.func @transform_1(%arg0: i32, %arg1: i32) -> (i32, i32) {
    %c0_i32 = arith.constant 0 : i32
    %c0_i32_0 = arith.constant 0 : i32
    %c0_i32_1 = arith.constant 0 : i32
    return %c0_i32, %c0_i32_0 : i32, i32
  }
  func.func @transform_2(%arg0: i32, %arg1: i32) -> (i32, i32) {
    %c0_i32 = arith.constant 0 : i32
    %c0_i32_0 = arith.constant 0 : i32
    %c0_i32_1 = arith.constant 0 : i32
    return %c0_i32, %c0_i32_0 : i32, i32
  }
  func.func @transform_3(%arg0: i32, %arg1: i32) -> (i32, i32, i32) {
    %c0_i32 = arith.constant 0 : i32
    %c0_i32_0 = arith.constant 0 : i32
    return %arg0, %c0_i32, %arg1 : i32, i32, i32
  }
}

module attributes {stable_mosaic.version = 11 : i64} {
  func.func @kernel(%arg0: i32, %arg1: i32, %arg2: memref<1x72x64xbf16, #tpu.memory_space<vmem>>, %arg3: memref<8x72xbf16, #tpu.memory_space<vmem>>, %arg4: memref<8x1xf32, #tpu.memory_space<vmem>>, %arg5: memref<1x8x64xf32, #tpu.memory_space<vmem>>) attributes {dimension_semantics = [#tpu.dimension_semantics<parallel>, #tpu.dimension_semantics<parallel>], iteration_bounds = array<i64: 2, 1>, scalar_prefetch = 0 : i64, scratch_operands = 0 : i64, tpu.core_type = #tpu.core_type<tc>, window_params = [{transform_indices = @transform_0, window_bounds = array<i64: 1, 72, 64>}, {pipeline_mode = #tpu.pipeline_mode<synchronous>, transform_indices = @transform_1, window_bounds = array<i64: 8, 72>}, {pipeline_mode = #tpu.pipeline_mode<synchronous>, transform_indices = @transform_2, window_bounds = array<i64: 8, 1>}, {transform_indices = @transform_3, window_bounds = array<i64: 1, 8, 64>}]} {
    %c0 = arith.constant 0 : index
    %c0_0 = arith.constant 0 : index
    %0 = vector.load %arg4[%c0, %c0_0] : memref<8x1xf32, #tpu.memory_space<vmem>>, vector<8x1xf32>
    %c0_1 = arith.constant 0 : index
    %c0_2 = arith.constant 0 : index
    %1 = vector.load %arg3[%c0_1, %c0_2] : memref<8x72xbf16, #tpu.memory_space<vmem>>, vector<8x72xbf16>
    %c0_3 = arith.constant 0 : index
    %c0_4 = arith.constant 0 : index
    %c0_5 = arith.constant 0 : index
    %2 = vector.load %arg2[%c0_3, %c0_4, %c0_5] : memref<1x72x64xbf16, #tpu.memory_space<vmem>>, vector<1x72x64xbf16>
    %3 = vector.shape_cast %2 : vector<1x72x64xbf16> to vector<72x64xbf16>
    %cst = arith.constant dense<0.000000e+00> : vector<8x64xf32>
    %4 = tpu.matmul %1, %3, %cst {dimension_numbers = #tpu.dot_dimension_numbers<[1], [0], [0], [1], [0, 0, 1, 1], [], []>} : vector<8x72xbf16>, vector<72x64xbf16>, vector<8x64xf32> -> vector<8x64xf32>
    %5 = vector.broadcast %0 : vector<8x1xf32> to vector<8x64xf32>
    %6 = arith.addf %4, %5 : vector<8x64xf32>
    %cst_6 = arith.constant 0.000000e+00 : f32
    %7 = vector.broadcast %cst_6 : f32 to vector<8x64xf32>
    %8 = arith.maximumf %6, %7 : vector<8x64xf32>
    %c0_7 = arith.constant 0 : index
    %c0_8 = arith.constant 0 : index
    %c0_9 = arith.constant 0 : index
    %9 = vector.load %arg5[%c0_7, %c0_8, %c0_9] : memref<1x8x64xf32, #tpu.memory_space<vmem>>, vector<1x8x64xf32>
    %10 = vector.shape_cast %9 : vector<1x8x64xf32> to vector<8x64xf32>
    %11 = vector.shape_cast %8 : vector<8x64xf32> to vector<1x8x64xf32>
    tpu.vector_store %arg5[%c0_7, %c0_8, %c0_9], %11 {strides = array<i32>} : memref<1x8x64xf32, #tpu.memory_space<vmem>>, vector<1x8x64xf32>,
    return
  }
  func.func @transform_0(%arg0: i32, %arg1: i32) -> (i32, i32, i32) {
    %c0_i32 = arith.constant 0 : i32
    %c0_i32_0 = arith.constant 0 : i32
    return %arg0, %c0_i32, %arg1 : i32, i32, i32
  }
  func.func @transform_1(%arg0: i32, %arg1: i32) -> (i32, i32) {
    %c0_i32 = arith.constant 0 : i32
    %c0_i32_0 = arith.constant 0 : i32
    %c0_i32_1 = arith.constant 0 : i32
    return %c0_i32, %c0_i32_0 : i32, i32
  }
  func.func @transform_2(%arg0: i32, %arg1: i32) -> (i32, i32) {
    %c0_i32 = arith.constant 0 : i32
    %c0_i32_0 = arith.constant 0 : i32
    %c0_i32_1 = arith.constant 0 : i32
    return %c0_i32, %c0_i32_0 : i32, i32
  }
  func.func @transform_3(%arg0: i32, %arg1: i32) -> (i32, i32, i32) {
    %c0_i32 = arith.constant 0 : i32
    %c0_i32_0 = arith.constant 0 : i32
    return %arg0, %c0_i32, %arg1 : i32, i32, i32
  }
}

module attributes {stable_mosaic.version = 11 : i64} {
  func.func @kernel(%arg0: i32, %arg1: i32, %arg2: memref<1x72x16xbf16, #tpu.memory_space<vmem>>, %arg3: memref<8x72xbf16, #tpu.memory_space<vmem>>, %arg4: memref<8x1xf32, #tpu.memory_space<vmem>>, %arg5: memref<1x8x16xf32, #tpu.memory_space<vmem>>) attributes {dimension_semantics = [#tpu.dimension_semantics<parallel>, #tpu.dimension_semantics<parallel>], iteration_bounds = array<i64: 2, 1>, scalar_prefetch = 0 : i64, scratch_operands = 0 : i64, tpu.core_type = #tpu.core_type<tc>, window_params = [{transform_indices = @transform_0, window_bounds = array<i64: 1, 72, 16>}, {pipeline_mode = #tpu.pipeline_mode<synchronous>, transform_indices = @transform_1, window_bounds = array<i64: 8, 72>}, {pipeline_mode = #tpu.pipeline_mode<synchronous>, transform_indices = @transform_2, window_bounds = array<i64: 8, 1>}, {transform_indices = @transform_3, window_bounds = array<i64: 1, 8, 16>}]} {
    %c0 = arith.constant 0 : index
    %c0_0 = arith.constant 0 : index
    %0 = vector.load %arg4[%c0, %c0_0] : memref<8x1xf32, #tpu.memory_space<vmem>>, vector<8x1xf32>
    %c0_1 = arith.constant 0 : index
    %c0_2 = arith.constant 0 : index
    %1 = vector.load %arg3[%c0_1, %c0_2] : memref<8x72xbf16, #tpu.memory_space<vmem>>, vector<8x72xbf16>
    %c0_3 = arith.constant 0 : index
    %c0_4 = arith.constant 0 : index
    %c0_5 = arith.constant 0 : index
    %2 = vector.load %arg2[%c0_3, %c0_4, %c0_5] : memref<1x72x16xbf16, #tpu.memory_space<vmem>>, vector<1x72x16xbf16>
    %3 = vector.shape_cast %2 : vector<1x72x16xbf16> to vector<72x16xbf16>
    %cst = arith.constant dense<0.000000e+00> : vector<8x16xf32>
    %4 = tpu.matmul %1, %3, %cst {dimension_numbers = #tpu.dot_dimension_numbers<[1], [0], [0], [1], [0, 0, 1, 1], [], []>} : vector<8x72xbf16>, vector<72x16xbf16>, vector<8x16xf32> -> vector<8x16xf32>
    %5 = vector.broadcast %0 : vector<8x1xf32> to vector<8x16xf32>
    %6 = arith.addf %4, %5 : vector<8x16xf32>
    %cst_6 = arith.constant 0.000000e+00 : f32
    %7 = vector.broadcast %cst_6 : f32 to vector<8x16xf32>
    %8 = arith.maximumf %6, %7 : vector<8x16xf32>
    %c0_7 = arith.constant 0 : index
    %c0_8 = arith.constant 0 : index
    %c0_9 = arith.constant 0 : index
    %9 = vector.load %arg5[%c0_7, %c0_8, %c0_9] : memref<1x8x16xf32, #tpu.memory_space<vmem>>, vector<1x8x16xf32>
    %10 = vector.shape_cast %9 : vector<1x8x16xf32> to vector<8x16xf32>
    %11 = vector.shape_cast %8 : vector<8x16xf32> to vector<1x8x16xf32>
    tpu.vector_store %arg5[%c0_7, %c0_8, %c0_9], %11 {strides = array<i32>} : memref<1x8x16xf32, #tpu.memory_space<vmem>>, vector<1x8x16xf32>,
    return
  }
  func.func @transform_0(%arg0: i32, %arg1: i32) -> (i32, i32, i32) {
    %c0_i32 = arith.constant 0 : i32
    %c0_i32_0 = arith.constant 0 : i32
    return %arg0, %c0_i32, %arg1 : i32, i32, i32
  }
  func.func @transform_1(%arg0: i32, %arg1: i32) -> (i32, i32) {
    %c0_i32 = arith.constant 0 : i32
    %c0_i32_0 = arith.constant 0 : i32
    %c0_i32_1 = arith.constant 0 : i32
    return %c0_i32, %c0_i32_0 : i32, i32
  }
  func.func @transform_2(%arg0: i32, %arg1: i32) -> (i32, i32) {
    %c0_i32 = arith.constant 0 : i32
    %c0_i32_0 = arith.constant 0 : i32
    %c0_i32_1 = arith.constant 0 : i32
    return %c0_i32, %c0_i32_0 : i32, i32
  }
  func.func @transform_3(%arg0: i32, %arg1: i32) -> (i32, i32, i32) {
    %c0_i32 = arith.constant 0 : i32
    %c0_i32_0 = arith.constant 0 : i32
    return %arg0, %c0_i32, %arg1 : i32, i32, i32
  }
}

module attributes {stable_mosaic.version = 11 : i64} {
  func.func @kernel(%arg0: i32, %arg1: i32, %arg2: memref<1x72x16xbf16, #tpu.memory_space<vmem>>, %arg3: memref<1x72x16xbf16, #tpu.memory_space<vmem>>, %arg4: memref<8x72xbf16, #tpu.memory_space<vmem>>, %arg5: memref<8x72xbf16, #tpu.memory_space<vmem>>, %arg6: memref<8x1xf32, #tpu.memory_space<vmem>>, %arg7: memref<1x8x16xf32, #tpu.memory_space<vmem>>) attributes {dimension_semantics = [#tpu.dimension_semantics<parallel>, #tpu.dimension_semantics<parallel>], iteration_bounds = array<i64: 2, 1>, scalar_prefetch = 0 : i64, scratch_operands = 0 : i64, tpu.core_type = #tpu.core_type<tc>, window_params = [{transform_indices = @transform_0, window_bounds = array<i64: 1, 72, 16>}, {transform_indices = @transform_1, window_bounds = array<i64: 1, 72, 16>}, {pipeline_mode = #tpu.pipeline_mode<synchronous>, transform_indices = @transform_2, window_bounds = array<i64: 8, 72>}, {pipeline_mode = #tpu.pipeline_mode<synchronous>, transform_indices = @transform_3, window_bounds = array<i64: 8, 72>}, {pipeline_mode = #tpu.pipeline_mode<synchronous>, transform_indices = @transform_4, window_bounds = array<i64: 8, 1>}, {transform_indices = @transform_5, window_bounds = array<i64: 1, 8, 16>}]} {
    %c0 = arith.constant 0 : index
    %c0_0 = arith.constant 0 : index
    %0 = vector.load %arg6[%c0, %c0_0] : memref<8x1xf32, #tpu.memory_space<vmem>>, vector<8x1xf32>
    %c0_1 = arith.constant 0 : index
    %c0_2 = arith.constant 0 : index
    %1 = vector.load %arg4[%c0_1, %c0_2] : memref<8x72xbf16, #tpu.memory_space<vmem>>, vector<8x72xbf16>
    %c0_3 = arith.constant 0 : index
    %c0_4 = arith.constant 0 : index
    %c0_5 = arith.constant 0 : index
    %2 = vector.load %arg2[%c0_3, %c0_4, %c0_5] : memref<1x72x16xbf16, #tpu.memory_space<vmem>>, vector<1x72x16xbf16>
    %3 = vector.shape_cast %2 : vector<1x72x16xbf16> to vector<72x16xbf16>
    %cst = arith.constant dense<0.000000e+00> : vector<8x16xf32>
    %4 = tpu.matmul %1, %3, %cst {dimension_numbers = #tpu.dot_dimension_numbers<[1], [0], [0], [1], [0, 0, 1, 1], [], []>} : vector<8x72xbf16>, vector<72x16xbf16>, vector<8x16xf32> -> vector<8x16xf32>
    %c0_6 = arith.constant 0 : index
    %c0_7 = arith.constant 0 : index
    %5 = vector.load %arg5[%c0_6, %c0_7] : memref<8x72xbf16, #tpu.memory_space<vmem>>, vector<8x72xbf16>
    %c0_8 = arith.constant 0 : index
    %c0_9 = arith.constant 0 : index
    %c0_10 = arith.constant 0 : index
    %6 = vector.load %arg3[%c0_8, %c0_9, %c0_10] : memref<1x72x16xbf16, #tpu.memory_space<vmem>>, vector<1x72x16xbf16>
    %7 = vector.shape_cast %6 : vector<1x72x16xbf16> to vector<72x16xbf16>
    %cst_11 = arith.constant dense<0.000000e+00> : vector<8x16xf32>
    %8 = tpu.matmul %5, %7, %cst_11 {dimension_numbers = #tpu.dot_dimension_numbers<[1], [0], [0], [1], [0, 0, 1, 1], [], []>} : vector<8x72xbf16>, vector<72x16xbf16>, vector<8x16xf32> -> vector<8x16xf32>
    %9 = arith.addf %4, %8 : vector<8x16xf32>
    %10 = vector.broadcast %0 : vector<8x1xf32> to vector<8x16xf32>
    %11 = arith.addf %9, %10 : vector<8x16xf32>
    %cst_12 = arith.constant 0.000000e+00 : f32
    %12 = vector.broadcast %cst_12 : f32 to vector<8x16xf32>
    %13 = arith.maximumf %11, %12 : vector<8x16xf32>
    %c0_13 = arith.constant 0 : index
    %c0_14 = arith.constant 0 : index
    %c0_15 = arith.constant 0 : index
    %14 = vector.load %arg7[%c0_13, %c0_14, %c0_15] : memref<1x8x16xf32, #tpu.memory_space<vmem>>, vector<1x8x16xf32>
    %15 = vector.shape_cast %14 : vector<1x8x16xf32> to vector<8x16xf32>
    %16 = vector.shape_cast %13 : vector<8x16xf32> to vector<1x8x16xf32>
    tpu.vector_store %arg7[%c0_13, %c0_14, %c0_15], %16 {strides = array<i32>} : memref<1x8x16xf32, #tpu.memory_space<vmem>>, vector<1x8x16xf32>,
    return
  }
  func.func @transform_0(%arg0: i32, %arg1: i32) -> (i32, i32, i32) {
    %c0_i32 = arith.constant 0 : i32
    %c0_i32_0 = arith.constant 0 : i32
    return %arg0, %c0_i32, %arg1 : i32, i32, i32
  }
  func.func @transform_1(%arg0: i32, %arg1: i32) -> (i32, i32, i32) {
    %c0_i32 = arith.constant 0 : i32
    %c0_i32_0 = arith.constant 0 : i32
    return %arg0, %c0_i32, %arg1 : i32, i32, i32
  }
  func.func @transform_2(%arg0: i32, %arg1: i32) -> (i32, i32) {
    %c0_i32 = arith.constant 0 : i32
    %c0_i32_0 = arith.constant 0 : i32
    %c0_i32_1 = arith.constant 0 : i32
    return %c0_i32, %c0_i32_0 : i32, i32
  }
  func.func @transform_3(%arg0: i32, %arg1: i32) -> (i32, i32) {
    %c0_i32 = arith.constant 0 : i32
    %c0_i32_0 = arith.constant 0 : i32
    %c0_i32_1 = arith.constant 0 : i32
    return %c0_i32, %c0_i32_0 : i32, i32
  }
  func.func @transform_4(%arg0: i32, %arg1: i32) -> (i32, i32) {
    %c0_i32 = arith.constant 0 : i32
    %c0_i32_0 = arith.constant 0 : i32
    %c0_i32_1 = arith.constant 0 : i32
    return %c0_i32, %c0_i32_0 : i32, i32
  }
  func.func @transform_5(%arg0: i32, %arg1: i32) -> (i32, i32, i32) {
    %c0_i32 = arith.constant 0 : i32
    %c0_i32_0 = arith.constant 0 : i32
    return %arg0, %c0_i32, %arg1 : i32, i32, i32
  }
}

module attributes {stable_mosaic.version = 11 : i64} {
  func.func @kernel(%arg0: i32, %arg1: i32, %arg2: memref<1x72x64xbf16, #tpu.memory_space<vmem>>, %arg3: memref<1x72x64xbf16, #tpu.memory_space<vmem>>, %arg4: memref<8x72xbf16, #tpu.memory_space<vmem>>, %arg5: memref<8x72xbf16, #tpu.memory_space<vmem>>, %arg6: memref<8x1xf32, #tpu.memory_space<vmem>>, %arg7: memref<1x8x64xf32, #tpu.memory_space<vmem>>) attributes {dimension_semantics = [#tpu.dimension_semantics<parallel>, #tpu.dimension_semantics<parallel>], iteration_bounds = array<i64: 2, 1>, scalar_prefetch = 0 : i64, scratch_operands = 0 : i64, tpu.core_type = #tpu.core_type<tc>, window_params = [{transform_indices = @transform_0, window_bounds = array<i64: 1, 72, 64>}, {transform_indices = @transform_1, window_bounds = array<i64: 1, 72, 64>}, {pipeline_mode = #tpu.pipeline_mode<synchronous>, transform_indices = @transform_2, window_bounds = array<i64: 8, 72>}, {pipeline_mode = #tpu.pipeline_mode<synchronous>, transform_indices = @transform_3, window_bounds = array<i64: 8, 72>}, {pipeline_mode = #tpu.pipeline_mode<synchronous>, transform_indices = @transform_4, window_bounds = array<i64: 8, 1>}, {transform_indices = @transform_5, window_bounds = array<i64: 1, 8, 64>}]} {
    %c0 = arith.constant 0 : index
    %c0_0 = arith.constant 0 : index
    %0 = vector.load %arg6[%c0, %c0_0] : memref<8x1xf32, #tpu.memory_space<vmem>>, vector<8x1xf32>
    %c0_1 = arith.constant 0 : index
    %c0_2 = arith.constant 0 : index
    %1 = vector.load %arg4[%c0_1, %c0_2] : memref<8x72xbf16, #tpu.memory_space<vmem>>, vector<8x72xbf16>
    %c0_3 = arith.constant 0 : index
    %c0_4 = arith.constant 0 : index
    %c0_5 = arith.constant 0 : index
    %2 = vector.load %arg2[%c0_3, %c0_4, %c0_5] : memref<1x72x64xbf16, #tpu.memory_space<vmem>>, vector<1x72x64xbf16>
    %3 = vector.shape_cast %2 : vector<1x72x64xbf16> to vector<72x64xbf16>
    %cst = arith.constant dense<0.000000e+00> : vector<8x64xf32>
    %4 = tpu.matmul %1, %3, %cst {dimension_numbers = #tpu.dot_dimension_numbers<[1], [0], [0], [1], [0, 0, 1, 1], [], []>} : vector<8x72xbf16>, vector<72x64xbf16>, vector<8x64xf32> -> vector<8x64xf32>
    %c0_6 = arith.constant 0 : index
    %c0_7 = arith.constant 0 : index
    %5 = vector.load %arg5[%c0_6, %c0_7] : memref<8x72xbf16, #tpu.memory_space<vmem>>, vector<8x72xbf16>
    %c0_8 = arith.constant 0 : index
    %c0_9 = arith.constant 0 : index
    %c0_10 = arith.constant 0 : index
    %6 = vector.load %arg3[%c0_8, %c0_9, %c0_10] : memref<1x72x64xbf16, #tpu.memory_space<vmem>>, vector<1x72x64xbf16>
    %7 = vector.shape_cast %6 : vector<1x72x64xbf16> to vector<72x64xbf16>
    %cst_11 = arith.constant dense<0.000000e+00> : vector<8x64xf32>
    %8 = tpu.matmul %5, %7, %cst_11 {dimension_numbers = #tpu.dot_dimension_numbers<[1], [0], [0], [1], [0, 0, 1, 1], [], []>} : vector<8x72xbf16>, vector<72x64xbf16>, vector<8x64xf32> -> vector<8x64xf32>
    %9 = arith.addf %4, %8 : vector<8x64xf32>
    %10 = vector.broadcast %0 : vector<8x1xf32> to vector<8x64xf32>
    %11 = arith.addf %9, %10 : vector<8x64xf32>
    %cst_12 = arith.constant 0.000000e+00 : f32
    %12 = vector.broadcast %cst_12 : f32 to vector<8x64xf32>
    %13 = arith.maximumf %11, %12 : vector<8x64xf32>
    %c0_13 = arith.constant 0 : index
    %c0_14 = arith.constant 0 : index
    %c0_15 = arith.constant 0 : index
    %14 = vector.load %arg7[%c0_13, %c0_14, %c0_15] : memref<1x8x64xf32, #tpu.memory_space<vmem>>, vector<1x8x64xf32>
    %15 = vector.shape_cast %14 : vector<1x8x64xf32> to vector<8x64xf32>
    %16 = vector.shape_cast %13 : vector<8x64xf32> to vector<1x8x64xf32>
    tpu.vector_store %arg7[%c0_13, %c0_14, %c0_15], %16 {strides = array<i32>} : memref<1x8x64xf32, #tpu.memory_space<vmem>>, vector<1x8x64xf32>,
    return
  }
  func.func @transform_0(%arg0: i32, %arg1: i32) -> (i32, i32, i32) {
    %c0_i32 = arith.constant 0 : i32
    %c0_i32_0 = arith.constant 0 : i32
    return %arg0, %c0_i32, %arg1 : i32, i32, i32
  }
  func.func @transform_1(%arg0: i32, %arg1: i32) -> (i32, i32, i32) {
    %c0_i32 = arith.constant 0 : i32
    %c0_i32_0 = arith.constant 0 : i32
    return %arg0, %c0_i32, %arg1 : i32, i32, i32
  }
  func.func @transform_2(%arg0: i32, %arg1: i32) -> (i32, i32) {
    %c0_i32 = arith.constant 0 : i32
    %c0_i32_0 = arith.constant 0 : i32
    %c0_i32_1 = arith.constant 0 : i32
    return %c0_i32, %c0_i32_0 : i32, i32
  }
  func.func @transform_3(%arg0: i32, %arg1: i32) -> (i32, i32) {
    %c0_i32 = arith.constant 0 : i32
    %c0_i32_0 = arith.constant 0 : i32
    %c0_i32_1 = arith.constant 0 : i32
    return %c0_i32, %c0_i32_0 : i32, i32
  }
  func.func @transform_4(%arg0: i32, %arg1: i32) -> (i32, i32) {
    %c0_i32 = arith.constant 0 : i32
    %c0_i32_0 = arith.constant 0 : i32
    %c0_i32_1 = arith.constant 0 : i32
    return %c0_i32, %c0_i32_0 : i32, i32
  }
  func.func @transform_5(%arg0: i32, %arg1: i32) -> (i32, i32, i32) {
    %c0_i32 = arith.constant 0 : i32
    %c0_i32_0 = arith.constant 0 : i32
    return %arg0, %c0_i32, %arg1 : i32, i32, i32
  }
}

module attributes {stable_mosaic.version = 11 : i64} {
  func.func @kernel(%arg0: i32, %arg1: i32, %arg2: memref<1x72x256xbf16, #tpu.memory_space<vmem>>, %arg3: memref<1x72x256xbf16, #tpu.memory_space<vmem>>, %arg4: memref<4x72xbf16, #tpu.memory_space<vmem>>, %arg5: memref<4x72xbf16, #tpu.memory_space<vmem>>, %arg6: memref<4x1xf32, #tpu.memory_space<vmem>>, %arg7: memref<1x4x256xf32, #tpu.memory_space<vmem>>, %arg8: memref<1x4x256xf32, #tpu.memory_space<vmem>>) attributes {dimension_semantics = [#tpu.dimension_semantics<parallel>, #tpu.dimension_semantics<parallel>], iteration_bounds = array<i64: 2, 1>, scalar_prefetch = 0 : i64, scratch_operands = 0 : i64, tpu.core_type = #tpu.core_type<tc>, window_params = [{transform_indices = @transform_0, window_bounds = array<i64: 1, 72, 256>}, {transform_indices = @transform_1, window_bounds = array<i64: 1, 72, 256>}, {pipeline_mode = #tpu.pipeline_mode<synchronous>, transform_indices = @transform_2, window_bounds = array<i64: 4, 72>}, {pipeline_mode = #tpu.pipeline_mode<synchronous>, transform_indices = @transform_3, window_bounds = array<i64: 4, 72>}, {pipeline_mode = #tpu.pipeline_mode<synchronous>, transform_indices = @transform_4, window_bounds = array<i64: 4, 1>}, {transform_indices = @transform_5, window_bounds = array<i64: 1, 4, 256>}, {transform_indices = @transform_6, window_bounds = array<i64: 1, 4, 256>}]} {
    %c0 = arith.constant 0 : index
    %c0_0 = arith.constant 0 : index
    %0 = vector.load %arg6[%c0, %c0_0] : memref<4x1xf32, #tpu.memory_space<vmem>>, vector<4x1xf32>
    %c0_1 = arith.constant 0 : index
    %c0_2 = arith.constant 0 : index
    %1 = vector.load %arg4[%c0_1, %c0_2] : memref<4x72xbf16, #tpu.memory_space<vmem>>, vector<4x72xbf16>
    %c0_3 = arith.constant 0 : index
    %c0_4 = arith.constant 0 : index
    %c0_5 = arith.constant 0 : index
    %2 = vector.load %arg2[%c0_3, %c0_4, %c0_5] : memref<1x72x256xbf16, #tpu.memory_space<vmem>>, vector<1x72x256xbf16>
    %3 = vector.shape_cast %2 : vector<1x72x256xbf16> to vector<72x256xbf16>
    %cst = arith.constant dense<0.000000e+00> : vector<4x256xf32>
    %4 = tpu.matmul %1, %3, %cst {dimension_numbers = #tpu.dot_dimension_numbers<[1], [0], [0], [1], [0, 0, 1, 1], [], []>} : vector<4x72xbf16>, vector<72x256xbf16>, vector<4x256xf32> -> vector<4x256xf32>
    %c0_6 = arith.constant 0 : index
    %c0_7 = arith.constant 0 : index
    %5 = vector.load %arg5[%c0_6, %c0_7] : memref<4x72xbf16, #tpu.memory_space<vmem>>, vector<4x72xbf16>
    %c0_8 = arith.constant 0 : index
    %c0_9 = arith.constant 0 : index
    %c0_10 = arith.constant 0 : index
    %6 = vector.load %arg3[%c0_8, %c0_9, %c0_10] : memref<1x72x256xbf16, #tpu.memory_space<vmem>>, vector<1x72x256xbf16>
    %7 = vector.shape_cast %6 : vector<1x72x256xbf16> to vector<72x256xbf16>
    %cst_11 = arith.constant dense<0.000000e+00> : vector<4x256xf32>
    %8 = tpu.matmul %5, %7, %cst_11 {dimension_numbers = #tpu.dot_dimension_numbers<[1], [0], [0], [1], [0, 0, 1, 1], [], []>} : vector<4x72xbf16>, vector<72x256xbf16>, vector<4x256xf32> -> vector<4x256xf32>
    %9 = arith.addf %4, %8 : vector<4x256xf32>
    %10 = vector.broadcast %0 : vector<4x1xf32> to vector<4x256xf32>
    %11 = arith.addf %9, %10 : vector<4x256xf32>
    %cst_12 = arith.constant 0.000000e+00 : f32
    %12 = vector.broadcast %cst_12 : f32 to vector<4x256xf32>
    %13 = arith.maximumf %11, %12 : vector<4x256xf32>
    %c0_13 = arith.constant 0 : index
    %c0_14 = arith.constant 0 : index
    %c0_15 = arith.constant 0 : index
    %14 = vector.load %arg7[%c0_13, %c0_14, %c0_15] : memref<1x4x256xf32, #tpu.memory_space<vmem>>, vector<1x4x256xf32>
    %15 = vector.shape_cast %14 : vector<1x4x256xf32> to vector<4x256xf32>
    %16 = arith.addf %13, %15 : vector<4x256xf32>
    %c0_16 = arith.constant 0 : index
    %c0_17 = arith.constant 0 : index
    %c0_18 = arith.constant 0 : index
    %17 = vector.load %arg8[%c0_16, %c0_17, %c0_18] : memref<1x4x256xf32, #tpu.memory_space<vmem>>, vector<1x4x256xf32>
    %18 = vector.shape_cast %17 : vector<1x4x256xf32> to vector<4x256xf32>
    %19 = vector.shape_cast %16 : vector<4x256xf32> to vector<1x4x256xf32>
    tpu.vector_store %arg8[%c0_16, %c0_17, %c0_18], %19 {strides = array<i32>} : memref<1x4x256xf32, #tpu.memory_space<vmem>>, vector<1x4x256xf32>,
    return
  }
  func.func @transform_0(%arg0: i32, %arg1: i32) -> (i32, i32, i32) {
    %c0_i32 = arith.constant 0 : i32
    %c0_i32_0 = arith.constant 0 : i32
    return %arg0, %c0_i32, %arg1 : i32, i32, i32
  }
  func.func @transform_1(%arg0: i32, %arg1: i32) -> (i32, i32, i32) {
    %c0_i32 = arith.constant 0 : i32
    %c0_i32_0 = arith.constant 0 : i32
    return %arg0, %c0_i32, %arg1 : i32, i32, i32
  }
  func.func @transform_2(%arg0: i32, %arg1: i32) -> (i32, i32) {
    %c0_i32 = arith.constant 0 : i32
    %c0_i32_0 = arith.constant 0 : i32
    %c0_i32_1 = arith.constant 0 : i32
    return %c0_i32, %c0_i32_0 : i32, i32
  }
  func.func @transform_3(%arg0: i32, %arg1: i32) -> (i32, i32) {
    %c0_i32 = arith.constant 0 : i32
    %c0_i32_0 = arith.constant 0 : i32
    %c0_i32_1 = arith.constant 0 : i32
    return %c0_i32, %c0_i32_0 : i32, i32
  }
  func.func @transform_4(%arg0: i32, %arg1: i32) -> (i32, i32) {
    %c0_i32 = arith.constant 0 : i32
    %c0_i32_0 = arith.constant 0 : i32
    %c0_i32_1 = arith.constant 0 : i32
    return %c0_i32, %c0_i32_0 : i32, i32
  }
  func.func @transform_5(%arg0: i32, %arg1: i32) -> (i32, i32, i32) {
    %c0_i32 = arith.constant 0 : i32
    %c0_i32_0 = arith.constant 0 : i32
    return %arg0, %c0_i32, %arg1 : i32, i32, i32
  }
  func.func @transform_6(%arg0: i32, %arg1: i32) -> (i32, i32, i32) {
    %c0_i32 = arith.constant 0 : i32
    %c0_i32_0 = arith.constant 0 : i32
    return %arg0, %c0_i32, %arg1 : i32, i32, i32
  }
}

</mosaic_0001>

<llo_original>
// kernel: rsu4_forward.8
$region0: #{rsu4_forward.8}
  #allocation0 [shape = 'u32[]', space=smem, size = 0x4, offset = 0x4, fixed_abs, tag = 'smem constant byte address 0x4 - core index']
  #allocation1 [shape = 'u32[72,128]{1,0:T(1,128)}', space=vmem, size = 0x9000, scoped, tag = 'internal scratch']
  %s0 = inlined_call_operand.vmem [shape: bf16[2,36,256], index: 0, kind: input, shape index: {}]
  %s1 = inlined_call_operand.vmem [shape: bf16[4,36], index: 1, kind: input, shape index: {}]
  %s2 = inlined_call_operand.vmem [shape: f32[4,1], index: 2, kind: input, shape index: {}]
  %s3 = inlined_call_operand.vmem [shape: f32[2,4,256], index: 3, kind: output, shape index: {}]
  %s4 = sld [smem:[#allocation0]]
  $region45: #{rsu4_forward.8} parent=0
    _
  %s6 = ssub.s32 1, %s4
  %s7 = scalar_select 0, %s6, %s4
  loop: start=0, step=1, limit=4
  $region2: #{rsu4_forward.8} parent=0 // loop_pre_header
    _
  $region3: #{rsu4_forward.8} parent=0 // loop_header
    %s9 = sphi 0, %s13
    %p10 = scmp.ge.s32.totalorder %s9, 4
    %s16 = sphi 0, %s28
    %s17 = sphi 0, %s24
    %s18 = sphi 0, %s16
    %s19 = sphi 0, %s17
    %s20 = sphi 0, %s18
    %s21 = sphi 0, %s19
    %s33 = sphi 0, %s35
    %s36 = sphi 0, %s33
    %s37 = sphi 0, %s36
    %s53 = sphi 0, %s37
    %s57 = sphi 0, %s57
    %s59 = sphi 0, %s57
    %s60 = sphi 0, %s59
    %s74 = sphi 0, %s60
    %s78 = sphi 0, %s78
    %s80 = sphi 0, %s78
    %s81 = sphi 0, %s80
    %s95 = sphi 0, %s81
    %s103 = sphi 0, %s105
    %s106 = sphi 0, %s103
    %s107 = sphi 0, %s106
    %s123 = sphi 0, %s107
  $region4: #{rsu4_forward.8} parent=0 // loop_header_branch
    %12 = sbr.rel (%p10) target = $region8
  $region5: #{rsu4_forward.8} parent=0 // loop_body
    %s14 = ssub.s32 %s9, 1
    %s15 = ssub.s32 %s9, 2
    %s22 = sadd.s32 1, %s17
    %p23 = scmp.ge.s32.totalorder %s22, 1
    %s24 = scalar_select %p23, 0, %s22
    %s25 = sadd.s32 1, %s16
    %s26 = scalar_select %p23, %s25, %s16
    %p27 = scmp.ge.s32.totalorder %s26, 2
    %s28 = scalar_select %p27, 0, %s26
    %s29 = ssub.s32 %s16, %s28
    %s30 = ssub.s32 %s17, %s24
    %s31 = sor.u32 %s29, %s30
    %p32 = scmp.eq.s32.totalorder %s31, 0
    %s34 = sadd.s32 %s33, 1
    %s35 = scalar_select %p32, %s33, %s34
    %p38 = pneg %p32
    %p39 = scmp.eq.s32.totalorder %s9, 1
    %p40 = por %p38, %p39
    %p41 = scmp.ne.s32.totalorder %s33, %s36
    %p42 = scmp.eq.s32.totalorder %s9, 0
    %p43 = por %p41, %p42
    %p44 = scmp.ne.s32.totalorder %s33, %s36
    %p45 = scmp.eq.s32.totalorder %s14, 1
    %p46 = por %p44, %p45
    %p47 = scmp.ne.s32.totalorder %s36, %s37
    %p48 = scmp.eq.s32.totalorder %s14, 0
    %p49 = por %p47, %p48
    %p50 = scmp.ne.s32.totalorder %s36, %s37
    %p51 = scmp.eq.s32.totalorder %s15, 1
    %p52 = por %p50, %p51
    %p54 = scmp.ne.s32.totalorder %s37, %s53
    %p55 = scmp.eq.s32.totalorder %s15, 0
    %p56 = por %p54, %p55
    %s58 = sadd.s32 %s57, 1
    %p61 = scmp.eq.s32.totalorder %s9, 1
    %p62 = scmp.ne.s32.totalorder %s57, %s59
    %p63 = scmp.eq.s32.totalorder %s9, 0
    %p64 = por %p62, %p63
    %p65 = scmp.ne.s32.totalorder %s57, %s59
    %p66 = scmp.eq.s32.totalorder %s14, 1
    %p67 = por %p65, %p66
    %p68 = scmp.ne.s32.totalorder %s59, %s60
    %p69 = scmp.eq.s32.totalorder %s14, 0
    %p70 = por %p68, %p69
    %p71 = scmp.ne.s32.totalorder %s59, %s60
    %p72 = scmp.eq.s32.totalorder %s15, 1
    %p73 = por %p71, %p72
    %p75 = scmp.ne.s32.totalorder %s60, %s74
    %p76 = scmp.eq.s32.totalorder %s15, 0
    %p77 = por %p75, %p76
    %s79 = sadd.s32 %s78, 1
    %p82 = scmp.eq.s32.totalorder %s9, 1
    %p83 = scmp.ne.s32.totalorder %s78, %s80
    %p84 = scmp.eq.s32.totalorder %s9, 0
    %p85 = por %p83, %p84
    %p86 = scmp.ne.s32.totalorder %s78, %s80
    %p87 = scmp.eq.s32.totalorder %s14, 1
    %p88 = por %p86, %p87
    %p89 = scmp.ne.s32.totalorder %s80, %s81
    %p90 = scmp.eq.s32.totalorder %s14, 0
    %p91 = por %p89, %p90
    %p92 = scmp.ne.s32.totalorder %s80, %s81
    %p93 = scmp.eq.s32.totalorder %s15, 1
    %p94 = por %p92, %p93
    %p96 = scmp.ne.s32.totalorder %s81, %s95
    %p97 = scmp.eq.s32.totalorder %s15, 0
    %p98 = por %p96, %p97
    %s99 = ssub.s32 %s16, %s28
    %s100 = ssub.s32 %s17, %s24
    %s101 = sor.u32 %s99, %s100
    %p102 = scmp.eq.s32.totalorder %s101, 0
    %s104 = sadd.s32 %s103, 1
    %s105 = scalar_select %p102, %s103, %s104
    %p108 = pneg %p102
    %p109 = scmp.eq.s32.totalorder %s9, 1
    %p110 = por %p108, %p109
    %p111 = scmp.ne.s32.totalorder %s103, %s106
    %p112 = scmp.eq.s32.totalorder %s9, 0
    %p113 = por %p111, %p112
    %p114 = scmp.ne.s32.totalorder %s103, %s106
    %p115 = scmp.eq.s32.totalorder %s14, 1
    %p116 = por %p114, %p115
    %p117 = scmp.ne.s32.totalorder %s106, %s107
    %p118 = scmp.eq.s32.totalorder %s14, 0
    %p119 = por %p117, %p118
    %p120 = scmp.ne.s32.totalorder %s106, %s107
    %p121 = scmp.eq.s32.totalorder %s15, 1
    %p122 = por %p120, %p121
    %p124 = scmp.ne.s32.totalorder %s107, %s123
    %p125 = scmp.eq.s32.totalorder %s15, 0
    %p126 = por %p124, %p125
    %p127 = scmp.le.s32.totalorder 1, %s9
    %p128 = scmp.lt.s32.totalorder %s9, 3
    %p129 = pnand %p127, %p128
    %p130 = pneg %p129
    // Predicated region
    $region9: #{rsu4_forward.8} parent=5 // pred_check
      _
    $region10: #{rsu4_forward.8} parent=5 // pred_check_branch
      %132 = sbr.rel (%p129) target = $region12
    $region11: #{rsu4_forward.8} parent=5 // pred_region
      %s133 = ssub.s32 %s9, 1
      // Predicated region
      $region13: #{rsu4_forward.8} parent=11 // pred_check
        %p134 = pneg %p70
      $region14: #{rsu4_forward.8} parent=11 // pred_check_branch
        %136 = sbr.rel (%p134) target = $region16
      $region15: #{rsu4_forward.8} parent=11 // pred_region
        _
      $region16: #{rsu4_forward.8} parent=11 // pred_fallthru
        _
      // Predicated region
      $region17: #{rsu4_forward.8} parent=11 // pred_check
        %p137 = pneg %p91
      $region18: #{rsu4_forward.8} parent=11 // pred_check_branch
        %139 = sbr.rel (%p137) target = $region20
      $region19: #{rsu4_forward.8} parent=11 // pred_region
        _
      $region20: #{rsu4_forward.8} parent=11 // pred_fallthru
        _
    $region12: #{rsu4_forward.8} parent=5 // pred_fallthru
      _
    %p140 = scmp.lt.s32.totalorder %s9, 2
    // Predicated region
    $region21: #{rsu4_forward.8} parent=5 // pred_check
      %p141 = pneg %p140
    $region22: #{rsu4_forward.8} parent=5 // pred_check_branch
      %143 = sbr.rel (%p141) target = $region24
    $region23: #{rsu4_forward.8} parent=5 // pred_region
      // Predicated region
      $region25: #{rsu4_forward.8} parent=23 // pred_check
        %p144 = pneg %p43
      $region26: #{rsu4_forward.8} parent=23 // pred_check_branch
        %146 = sbr.rel (%p144) target = $region28
      $region27: #{rsu4_forward.8} parent=23 // pred_region
        %s147 = smul.u32 2, %s17
        %p148 = scmp.lt.s32.totalorder %s16, 1
        %s149 = scalar_select %p148, %s16, 1
        %p150 = scmp.lt.s32.totalorder %s147, 1
        %s151 = scalar_select %p150, %s147, 1
        %s152 = smul.addr %s149, 10
        %s153 = sadd.s32 %s151, %s152
        %s154 = smul.addr %s153, 4
        %s155 = scalar_lea.vmem %s0, %s154
        %s156 = smul.u32 2, %s17
      $region28: #{rsu4_forward.8} parent=23 // pred_fallthru
        _
    $region24: #{rsu4_forward.8} parent=5 // pred_fallthru
      _
    %p157 = scmp.le.s32.totalorder 1, %s9
    %p158 = scmp.lt.s32.totalorder %s9, 3
    %p159 = pnand %p157, %p158
    %p160 = pneg %p159
    // Predicated region
    $region29: #{rsu4_forward.8} parent=5 // pred_check
      _
    $region30: #{rsu4_forward.8} parent=5 // pred_check_branch
      %162 = sbr.rel (%p159) target = $region32
    $region31: #{rsu4_forward.8} parent=5 // pred_region
      %s163 = ssub.s32 %s9, 1
      %s164 = smul.u32 2, %s19
      %p165 = scmp.lt.s32.totalorder %s18, 1
      %s166 = scalar_select %p165, %s18, 1
      %p167 = scmp.lt.s32.totalorder %s164, 1
      %s168 = scalar_select %p167, %s164, 1
      %s169 = smul.addr %s166, 10
      %s170 = sadd.s32 %s168, %s169
      %s171 = smul.addr %s170, 4
      %s172 = scalar_lea.vmem %s0, %s171
      %p173 = pneg %p49
      %p174 = pneg %p46
      %p175 = pneg %p70
      %p176 = pneg %p67
      %p177 = pneg %p91
      %p178 = pneg %p88
      %p179 = pneg %p119
      %p180 = pneg %p116
      %s181 = smul.u32 2, %s19
      %p182 = scmp.lt.s32.totalorder %s18, 1
      %s183 = scalar_select %p182, %s18, 1
      %p184 = scmp.lt.s32.totalorder %s181, 1
      %s185 = scalar_select %p184, %s181, 1
      %s186 = smul.addr %s183, 2
      %s187 = sadd.s32 %s185, %s186
      %s188 = smul.addr %s187, 4
      %s189 = scalar_lea.vmem %s3, %s188
      %s190 = smul.u32 2, %s19
      %p191 = scmp.lt.s32.totalorder %s18, 1
      %s192 = scalar_select %p191, %s18, 1
      %p193 = scmp.lt.s32.totalorder %s190, 1
      %s194 = scalar_select %p193, %s190, 1
      %s195 = smul.addr %s192, 10
      %s196 = sadd.s32 %s194, %s195
      %s197 = smul.addr %s196, 4
      %s198 = scalar_lea.vmem %s0, %s197
      %s199 = smul.u32 2, %s19
      %s200 = smul.u32 2, %s19
      %p201 = scmp.lt.s32.totalorder %s18, 1
      %s202 = scalar_select %p201, %s18, 1
      %p203 = scmp.lt.s32.totalorder %s200, 1
      %s204 = scalar_select %p203, %s200, 1
      %s205 = smul.addr %s202, 2
      %s206 = sadd.s32 %s204, %s205
      %s207 = smul.addr %s206, 4
      %s208 = scalar_lea.vmem %s3, %s207
      %s209 = smul.u32 2, %s19
      %v211 = vld [vmem:[%s2] sm:$0xf]
      %v212 = vld [vmem:[%s1] sm:$0x3]
      %v213 = vld [vmem:[%s198] sm:$0xff]
      %v214 = vld [vmem:[%s198 + $0x8] sm:$0xff]
      %v215 = vld [vmem:[%s198 + $0x10] sm:$0xff]
      %v216 = vld [vmem:[%s198 + $0x18] sm:$0xff]
      %v217 = vld [vmem:[%s198 + $0x20] sm:$0x33]
      %219 = vset.pattern.permute.xlu0 0
      %220 = vperm.xlu0 %219, %v211
      %v221 = vpop.permute.xlu0 %220
      %v228 = vunpack.c.l.b16 %v213
      %v229 = vunpack.c.h.b16 %v213
      %v230 = vunpack.c.l.b16 %v214
      %v231 = vunpack.c.h.b16 %v214
      %v232 = vunpack.c.l.b16 %v215
      %v233 = vunpack.c.h.b16 %v215
      %v234 = vunpack.c.l.b16 %v216
      %v235 = vunpack.c.h.b16 %v216
      %v236 = vunpack.c.l.b16 %v217
      %v237 = vunpack.c.h.b16 %v217
      %v238 = vpack.c.b16 %v230, %v228
      %v239 = vpack.c.b16 %v231, %v229
      %v240 = vpack.c.b16 %v234, %v232
      %v241 = vpack.c.b16 %v235, %v233
      %v242 = vpack.c.b16 %v236, %v236
      %v243 = vpack.c.b16 %v237, %v237
      %vm248 = vcmask 293888
      %v250 = vsel %vm248, %v212, 0
      %vm252 = vcmask 1041408
      %v254 = vsel %vm252, %v242, 0
      %v257 = vsel %vm252, %v243, 0
      %259 = vmatpush.bf16.msra.mxu0 0
      %260 = vmatpush.bf16.msra.mxu0 0
      %261 = vmatpush.bf16.msra.mxu0 0
      %262 = vmatpush.bf16.msra.mxu0 0
      %263 = vmatpush.bf16.msra.mxu0 0
      %264 = vmatpush.bf16.msra.mxu0 %v254
      %265 = vmatpush.bf16.msra.mxu0 %v240
      %266 = vmatpush.bf16.msra.mxu0 %v238
      %267 = vmatmul.bf16.gmra.mxu0 %v250
      %v268 = vpop.f32.mrf.mxu0
      %v269 = vadd.f32 %v221, %v268
      %v270 = vpop.f32.mrf.mxu0
      %271 = vdwg.mxu0
      %272 = vmatpush.bf16.msra.mxu0 0
      %273 = vmatpush.bf16.msra.mxu0 0
      %274 = vmatpush.bf16.msra.mxu0 0
      %275 = vmatpush.bf16.msra.mxu0 0
      %276 = vmatpush.bf16.msra.mxu0 0
      %277 = vmatpush.bf16.msra.mxu0 %v257
      %278 = vmatpush.bf16.msra.mxu0 %v241
      %279 = vmatpush.bf16.msra.mxu0 %v239
      %280 = vmatmul.bf16.gmra.mxu0 %v250
      %v281 = vpop.f32.mrf.mxu0
      %v282 = vadd.f32 %v221, %v281
      %v283 = vpop.f32.mrf.mxu0
      %284 = vdwg.mxu0
      %v285 = vmax.f32 %v269, 0.0
      %v286 = vmax.f32 %v282, 0.0
      %v289 = vrot.slane %v286, 4
      %vm290 = vcmask 1043456
      %v291 = vsel %vm290, %v285, %v289
      %293 = vst [vmem:[%s208] sm:$0xff] %v291
      %s294 = smul.u32 2, %s19
      %p295 = scmp.lt.s32.totalorder %s18, 1
      %s296 = scalar_select %p295, %s18, 1
      %p297 = scmp.lt.s32.totalorder %s294, 1
      %s298 = scalar_select %p297, %s294, 1
      %s299 = smul.addr %s296, 2
      %s300 = sadd.s32 %s298, %s299
      %s301 = smul.addr %s300, 4
      %s302 = scalar_lea.vmem %s3, %s301
      // Predicated region
      $region33: #{rsu4_forward.8} parent=31 // pred_check
        %p303 = pneg %p116
      $region34: #{rsu4_forward.8} parent=31 // pred_check_branch
        %305 = sbr.rel (%p303) target = $region36
      $region35: #{rsu4_forward.8} parent=31 // pred_region
        %s306 = smul.u32 2, %s19
      $region36: #{rsu4_forward.8} parent=31 // pred_fallthru
        _
    $region32: #{rsu4_forward.8} parent=5 // pred_fallthru
      _
    %p307 = scmp.le.s32.totalorder 2, %s9
    // Predicated region
    $region37: #{rsu4_forward.8} parent=5 // pred_check
      %p308 = pneg %p307
    $region38: #{rsu4_forward.8} parent=5 // pred_check_branch
      %310 = sbr.rel (%p308) target = $region40
    $region39: #{rsu4_forward.8} parent=5 // pred_region
      %s311 = ssub.s32 %s9, 2
      // Predicated region
      $region41: #{rsu4_forward.8} parent=39 // pred_check
        %p312 = pneg %p122
      $region42: #{rsu4_forward.8} parent=39 // pred_check_branch
        %314 = sbr.rel (%p312) target = $region44
      $region43: #{rsu4_forward.8} parent=39 // pred_region
        %s315 = smul.u32 2, %s21
        %p316 = scmp.lt.s32.totalorder %s20, 1
        %s317 = scalar_select %p316, %s20, 1
        %p318 = scmp.lt.s32.totalorder %s315, 1
        %s319 = scalar_select %p318, %s315, 1
        %s320 = smul.addr %s317, 2
        %s321 = sadd.s32 %s319, %s320
        %s322 = smul.addr %s321, 4
        %s323 = scalar_lea.vmem %s3, %s322
      $region44: #{rsu4_forward.8} parent=39 // pred_fallthru
        _
    $region40: #{rsu4_forward.8} parent=5 // pred_fallthru
      _
  $region6: #{rsu4_forward.8} parent=0 // loop_footer
    %s13 = sadd.s32 1, %s9
  $region7: #{rsu4_forward.8} parent=0 // loop_footer_branch
    %8 = sbr.rel target = $region3
  $region8: #{rsu4_forward.8} parent=0 // loop_exit
    _

// kernel: rsu4_forward.9
$region0: #{rsu4_forward.9}
  #allocation0 [shape = 'u32[]', space=smem, size = 0x4, offset = 0x4, fixed_abs, tag = 'smem constant byte address 0x4 - core index']
  #allocation1 [shape = 'u32[72,128]{1,0:T(1,128)}', space=vmem, size = 0x9000, scoped, tag = 'internal scratch']
  %s0 = inlined_call_operand.vmem [shape: bf16[2,36,256], index: 0, kind: input, shape index: {}]
  %s1 = inlined_call_operand.vmem [shape: bf16[8,36], index: 1, kind: input, shape index: {}]
  %s2 = inlined_call_operand.vmem [shape: f32[8,1], index: 2, kind: input, shape index: {}]
  %s3 = inlined_call_operand.vmem [shape: f32[2,8,256], index: 3, kind: output, shape index: {}]
  %s4 = sld [smem:[#allocation0]]
  $region45: #{rsu4_forward.9} parent=0
    _
  %s6 = ssub.s32 1, %s4
  %s7 = scalar_select 0, %s6, %s4
  loop: start=0, step=1, limit=4
  $region2: #{rsu4_forward.9} parent=0 // loop_pre_header
    _
  $region3: #{rsu4_forward.9} parent=0 // loop_header
    %s9 = sphi 0, %s13
    %p10 = scmp.ge.s32.totalorder %s9, 4
    %s16 = sphi 0, %s28
    %s17 = sphi 0, %s24
    %s18 = sphi 0, %s16
    %s19 = sphi 0, %s17
    %s20 = sphi 0, %s18
    %s21 = sphi 0, %s19
    %s33 = sphi 0, %s35
    %s36 = sphi 0, %s33
    %s37 = sphi 0, %s36
    %s53 = sphi 0, %s37
    %s57 = sphi 0, %s57
    %s59 = sphi 0, %s57
    %s60 = sphi 0, %s59
    %s74 = sphi 0, %s60
    %s78 = sphi 0, %s78
    %s80 = sphi 0, %s78
    %s81 = sphi 0, %s80
    %s95 = sphi 0, %s81
    %s103 = sphi 0, %s105
    %s106 = sphi 0, %s103
    %s107 = sphi 0, %s106
    %s123 = sphi 0, %s107
  $region4: #{rsu4_forward.9} parent=0 // loop_header_branch
    %12 = sbr.rel (%p10) target = $region8
  $region5: #{rsu4_forward.9} parent=0 // loop_body
    %s14 = ssub.s32 %s9, 1
    %s15 = ssub.s32 %s9, 2
    %s22 = sadd.s32 1, %s17
    %p23 = scmp.ge.s32.totalorder %s22, 1
    %s24 = scalar_select %p23, 0, %s22
    %s25 = sadd.s32 1, %s16
    %s26 = scalar_select %p23, %s25, %s16
    %p27 = scmp.ge.s32.totalorder %s26, 2
    %s28 = scalar_select %p27, 0, %s26
    %s29 = ssub.s32 %s16, %s28
    %s30 = ssub.s32 %s17, %s24
    %s31 = sor.u32 %s29, %s30
    %p32 = scmp.eq.s32.totalorder %s31, 0
    %s34 = sadd.s32 %s33, 1
    %s35 = scalar_select %p32, %s33, %s34
    %p38 = pneg %p32
    %p39 = scmp.eq.s32.totalorder %s9, 1
    %p40 = por %p38, %p39
    %p41 = scmp.ne.s32.totalorder %s33, %s36
    %p42 = scmp.eq.s32.totalorder %s9, 0
    %p43 = por %p41, %p42
    %p44 = scmp.ne.s32.totalorder %s33, %s36
    %p45 = scmp.eq.s32.totalorder %s14, 1
    %p46 = por %p44, %p45
    %p47 = scmp.ne.s32.totalorder %s36, %s37
    %p48 = scmp.eq.s32.totalorder %s14, 0
    %p49 = por %p47, %p48
    %p50 = scmp.ne.s32.totalorder %s36, %s37
    %p51 = scmp.eq.s32.totalorder %s15, 1
    %p52 = por %p50, %p51
    %p54 = scmp.ne.s32.totalorder %s37, %s53
    %p55 = scmp.eq.s32.totalorder %s15, 0
    %p56 = por %p54, %p55
    %s58 = sadd.s32 %s57, 1
    %p61 = scmp.eq.s32.totalorder %s9, 1
    %p62 = scmp.ne.s32.totalorder %s57, %s59
    %p63 = scmp.eq.s32.totalorder %s9, 0
    %p64 = por %p62, %p63
    %p65 = scmp.ne.s32.totalorder %s57, %s59
    %p66 = scmp.eq.s32.totalorder %s14, 1
    %p67 = por %p65, %p66
    %p68 = scmp.ne.s32.totalorder %s59, %s60
    %p69 = scmp.eq.s32.totalorder %s14, 0
    %p70 = por %p68, %p69
    %p71 = scmp.ne.s32.totalorder %s59, %s60
    %p72 = scmp.eq.s32.totalorder %s15, 1
    %p73 = por %p71, %p72
    %p75 = scmp.ne.s32.totalorder %s60, %s74
    %p76 = scmp.eq.s32.totalorder %s15, 0
    %p77 = por %p75, %p76
    %s79 = sadd.s32 %s78, 1
    %p82 = scmp.eq.s32.totalorder %s9, 1
    %p83 = scmp.ne.s32.totalorder %s78, %s80
    %p84 = scmp.eq.s32.totalorder %s9, 0
    %p85 = por %p83, %p84
    %p86 = scmp.ne.s32.totalorder %s78, %s80
    %p87 = scmp.eq.s32.totalorder %s14, 1
    %p88 = por %p86, %p87
    %p89 = scmp.ne.s32.totalorder %s80, %s81
    %p90 = scmp.eq.s32.totalorder %s14, 0
    %p91 = por %p89, %p90
    %p92 = scmp.ne.s32.totalorder %s80, %s81
    %p93 = scmp.eq.s32.totalorder %s15, 1
    %p94 = por %p92, %p93
    %p96 = scmp.ne.s32.totalorder %s81, %s95
    %p97 = scmp.eq.s32.totalorder %s15, 0
    %p98 = por %p96, %p97
    %s99 = ssub.s32 %s16, %s28
    %s100 = ssub.s32 %s17, %s24
    %s101 = sor.u32 %s99, %s100
    %p102 = scmp.eq.s32.totalorder %s101, 0
    %s104 = sadd.s32 %s103, 1
    %s105 = scalar_select %p102, %s103, %s104
    %p108 = pneg %p102
    %p109 = scmp.eq.s32.totalorder %s9, 1
    %p110 = por %p108, %p109
    %p111 = scmp.ne.s32.totalorder %s103, %s106
    %p112 = scmp.eq.s32.totalorder %s9, 0
    %p113 = por %p111, %p112
    %p114 = scmp.ne.s32.totalorder %s103, %s106
    %p115 = scmp.eq.s32.totalorder %s14, 1
    %p116 = por %p114, %p115
    %p117 = scmp.ne.s32.totalorder %s106, %s107
    %p118 = scmp.eq.s32.totalorder %s14, 0
    %p119 = por %p117, %p118
    %p120 = scmp.ne.s32.totalorder %s106, %s107
    %p121 = scmp.eq.s32.totalorder %s15, 1
    %p122 = por %p120, %p121
    %p124 = scmp.ne.s32.totalorder %s107, %s123
    %p125 = scmp.eq.s32.totalorder %s15, 0
    %p126 = por %p124, %p125
    %p127 = scmp.le.s32.totalorder 1, %s9
    %p128 = scmp.lt.s32.totalorder %s9, 3
    %p129 = pnand %p127, %p128
    %p130 = pneg %p129
    // Predicated region
    $region9: #{rsu4_forward.9} parent=5 // pred_check
      _
    $region10: #{rsu4_forward.9} parent=5 // pred_check_branch
      %132 = sbr.rel (%p129) target = $region12
    $region11: #{rsu4_forward.9} parent=5 // pred_region
      %s133 = ssub.s32 %s9, 1
      // Predicated region
      $region13: #{rsu4_forward.9} parent=11 // pred_check
        %p134 = pneg %p70
      $region14: #{rsu4_forward.9} parent=11 // pred_check_branch
        %136 = sbr.rel (%p134) target = $region16
      $region15: #{rsu4_forward.9} parent=11 // pred_region
        _
      $region16: #{rsu4_forward.9} parent=11 // pred_fallthru
        _
      // Predicated region
      $region17: #{rsu4_forward.9} parent=11 // pred_check
        %p137 = pneg %p91
      $region18: #{rsu4_forward.9} parent=11 // pred_check_branch
        %139 = sbr.rel (%p137) target = $region20
      $region19: #{rsu4_forward.9} parent=11 // pred_region
        _
      $region20: #{rsu4_forward.9} parent=11 // pred_fallthru
        _
    $region12: #{rsu4_forward.9} parent=5 // pred_fallthru
      _
    %p140 = scmp.lt.s32.totalorder %s9, 2
    // Predicated region
    $region21: #{rsu4_forward.9} parent=5 // pred_check
      %p141 = pneg %p140
    $region22: #{rsu4_forward.9} parent=5 // pred_check_branch
      %143 = sbr.rel (%p141) target = $region24
    $region23: #{rsu4_forward.9} parent=5 // pred_region
      // Predicated region
      $region25: #{rsu4_forward.9} parent=23 // pred_check
        %p144 = pneg %p43
      $region26: #{rsu4_forward.9} parent=23 // pred_check_branch
        %146 = sbr.rel (%p144) target = $region28
      $region27: #{rsu4_forward.9} parent=23 // pred_region
        %s147 = smul.u32 2, %s17
        %p148 = scmp.lt.s32.totalorder %s16, 1
        %s149 = scalar_select %p148, %s16, 1
        %p150 = scmp.lt.s32.totalorder %s147, 1
        %s151 = scalar_select %p150, %s147, 1
        %s152 = smul.addr %s149, 10
        %s153 = sadd.s32 %s151, %s152
        %s154 = smul.addr %s153, 4
        %s155 = scalar_lea.vmem %s0, %s154
        %s156 = smul.u32 2, %s17
      $region28: #{rsu4_forward.9} parent=23 // pred_fallthru
        _
    $region24: #{rsu4_forward.9} parent=5 // pred_fallthru
      _
    %p157 = scmp.le.s32.totalorder 1, %s9
    %p158 = scmp.lt.s32.totalorder %s9, 3
    %p159 = pnand %p157, %p158
    %p160 = pneg %p159
    // Predicated region
    $region29: #{rsu4_forward.9} parent=5 // pred_check
      _
    $region30: #{rsu4_forward.9} parent=5 // pred_check_branch
      %162 = sbr.rel (%p159) target = $region32
    $region31: #{rsu4_forward.9} parent=5 // pred_region
      %s163 = ssub.s32 %s9, 1
      %s164 = smul.u32 2, %s19
      %p165 = scmp.lt.s32.totalorder %s18, 1
      %s166 = scalar_select %p165, %s18, 1
      %p167 = scmp.lt.s32.totalorder %s164, 1
      %s168 = scalar_select %p167, %s164, 1
      %s169 = smul.addr %s166, 10
      %s170 = sadd.s32 %s168, %s169
      %s171 = smul.addr %s170, 4
      %s172 = scalar_lea.vmem %s0, %s171
      %p173 = pneg %p49
      %p174 = pneg %p46
      %p175 = pneg %p70
      %p176 = pneg %p67
      %p177 = pneg %p91
      %p178 = pneg %p88
      %p179 = pneg %p119
      %p180 = pneg %p116
      %s181 = smul.u32 2, %s19
      %p182 = scmp.lt.s32.totalorder %s18, 1
      %s183 = scalar_select %p182, %s18, 1
      %p184 = scmp.lt.s32.totalorder %s181, 1
      %s185 = scalar_select %p184, %s181, 1
      %s186 = smul.addr %s183, 2
      %s187 = sadd.s32 %s185, %s186
      %s188 = smul.addr %s187, 8
      %s189 = scalar_lea.vmem %s3, %s188
      %s190 = smul.u32 2, %s19
      %p191 = scmp.lt.s32.totalorder %s18, 1
      %s192 = scalar_select %p191, %s18, 1
      %p193 = scmp.lt.s32.totalorder %s190, 1
      %s194 = scalar_select %p193, %s190, 1
      %s195 = smul.addr %s192, 10
      %s196 = sadd.s32 %s194, %s195
      %s197 = smul.addr %s196, 4
      %s198 = scalar_lea.vmem %s0, %s197
      %s199 = smul.u32 2, %s19
      %s200 = smul.u32 2, %s19
      %p201 = scmp.lt.s32.totalorder %s18, 1
      %s202 = scalar_select %p201, %s18, 1
      %p203 = scmp.lt.s32.totalorder %s200, 1
      %s204 = scalar_select %p203, %s200, 1
      %s205 = smul.addr %s202, 2
      %s206 = sadd.s32 %s204, %s205
      %s207 = smul.addr %s206, 8
      %s208 = scalar_lea.vmem %s3, %s207
      %s209 = smul.u32 2, %s19
      %v211 = vld [vmem:[%s2] sm:$0xff]
      %v212 = vld [vmem:[%s1] sm:$0xf]
      %v213 = vld [vmem:[%s198] sm:$0xff]
      %v214 = vld [vmem:[%s198 + $0x8] sm:$0xff]
      %v215 = vld [vmem:[%s198 + $0x10] sm:$0xff]
      %v216 = vld [vmem:[%s198 + $0x18] sm:$0xff]
      %v217 = vld [vmem:[%s198 + $0x20] sm:$0x33]
      %219 = vset.pattern.permute.xlu0 0
      %220 = vperm.xlu0 %219, %v211
      %v221 = vpop.permute.xlu0 %220
      %v228 = vunpack.c.l.b16 %v213
      %v229 = vunpack.c.h.b16 %v213
      %v230 = vunpack.c.l.b16 %v214
      %v231 = vunpack.c.h.b16 %v214
      %v232 = vunpack.c.l.b16 %v215
      %v233 = vunpack.c.h.b16 %v215
      %v234 = vunpack.c.l.b16 %v216
      %v235 = vunpack.c.h.b16 %v216
      %v236 = vunpack.c.l.b16 %v217
      %v237 = vunpack.c.h.b16 %v217
      %v238 = vpack.c.b16 %v230, %v228
      %v239 = vpack.c.b16 %v231, %v229
      %v240 = vpack.c.b16 %v234, %v232
      %v241 = vpack.c.b16 %v235, %v233
      %v242 = vpack.c.b16 %v236, %v236
      %v243 = vpack.c.b16 %v237, %v237
      %vm248 = vcmask 293888
      %v250 = vsel %vm248, %v212, 0
      %vm252 = vcmask 1041408
      %v254 = vsel %vm252, %v242, 0
      %v257 = vsel %vm252, %v243, 0
      %259 = vmatpush.bf16.msra.mxu0 0
      %260 = vmatpush.bf16.msra.mxu0 0
      %261 = vmatpush.bf16.msra.mxu0 0
      %262 = vmatpush.bf16.msra.mxu0 0
      %263 = vmatpush.bf16.msra.mxu0 0
      %264 = vmatpush.bf16.msra.mxu0 %v254
      %265 = vmatpush.bf16.msra.mxu0 %v240
      %266 = vmatpush.bf16.msra.mxu0 %v238
      %267 = vmatmul.bf16.gmra.mxu0 %v250
      %v268 = vpop.f32.mrf.mxu0
      %v269 = vadd.f32 %v221, %v268
      %v270 = vpop.f32.mrf.mxu0
      %271 = vdwg.mxu0
      %272 = vmatpush.bf16.msra.mxu0 0
      %273 = vmatpush.bf16.msra.mxu0 0
      %274 = vmatpush.bf16.msra.mxu0 0
      %275 = vmatpush.bf16.msra.mxu0 0
      %276 = vmatpush.bf16.msra.mxu0 0
      %277 = vmatpush.bf16.msra.mxu0 %v257
      %278 = vmatpush.bf16.msra.mxu0 %v241
      %279 = vmatpush.bf16.msra.mxu0 %v239
      %280 = vmatmul.bf16.gmra.mxu0 %v250
      %v281 = vpop.f32.mrf.mxu0
      %v282 = vadd.f32 %v221, %v281
      %v283 = vpop.f32.mrf.mxu0
      %284 = vdwg.mxu0
      %v285 = vmax.f32 %v269, 0.0
      %v286 = vmax.f32 %v282, 0.0
      %287 = vst [vmem:[%s208] sm:$0xff] %v285
      %288 = vst [vmem:[%s208 + $0x8] sm:$0xff] %v286
      %s289 = smul.u32 2, %s19
      %p290 = scmp.lt.s32.totalorder %s18, 1
      %s291 = scalar_select %p290, %s18, 1
      %p292 = scmp.lt.s32.totalorder %s289, 1
      %s293 = scalar_select %p292, %s289, 1
      %s294 = smul.addr %s291, 2
      %s295 = sadd.s32 %s293, %s294
      %s296 = smul.addr %s295, 8
      %s297 = scalar_lea.vmem %s3, %s296
      // Predicated region
      $region33: #{rsu4_forward.9} parent=31 // pred_check
        %p298 = pneg %p116
      $region34: #{rsu4_forward.9} parent=31 // pred_check_branch
        %300 = sbr.rel (%p298) target = $region36
      $region35: #{rsu4_forward.9} parent=31 // pred_region
        %s301 = smul.u32 2, %s19
      $region36: #{rsu4_forward.9} parent=31 // pred_fallthru
        _
    $region32: #{rsu4_forward.9} parent=5 // pred_fallthru
      _
    %p302 = scmp.le.s32.totalorder 2, %s9
    // Predicated region
    $region37: #{rsu4_forward.9} parent=5 // pred_check
      %p303 = pneg %p302
    $region38: #{rsu4_forward.9} parent=5 // pred_check_branch
      %305 = sbr.rel (%p303) target = $region40
    $region39: #{rsu4_forward.9} parent=5 // pred_region
      %s306 = ssub.s32 %s9, 2
      // Predicated region
      $region41: #{rsu4_forward.9} parent=39 // pred_check
        %p307 = pneg %p122
      $region42: #{rsu4_forward.9} parent=39 // pred_check_branch
        %309 = sbr.rel (%p307) target = $region44
      $region43: #{rsu4_forward.9} parent=39 // pred_region
        %s310 = smul.u32 2, %s21
        %p311 = scmp.lt.s32.totalorder %s20, 1
        %s312 = scalar_select %p311, %s20, 1
        %p313 = scmp.lt.s32.totalorder %s310, 1
        %s314 = scalar_select %p313, %s310, 1
        %s315 = smul.addr %s312, 2
        %s316 = sadd.s32 %s314, %s315
        %s317 = smul.addr %s316, 8
        %s318 = scalar_lea.vmem %s3, %s317
      $region44: #{rsu4_forward.9} parent=39 // pred_fallthru
        _
    $region40: #{rsu4_forward.9} parent=5 // pred_fallthru
      _
  $region6: #{rsu4_forward.9} parent=0 // loop_footer
    %s13 = sadd.s32 1, %s9
  $region7: #{rsu4_forward.9} parent=0 // loop_footer_branch
    %8 = sbr.rel target = $region3
  $region8: #{rsu4_forward.9} parent=0 // loop_exit
    _

// kernel: rsu4_forward.10
$region0: #{rsu4_forward.10}
  #allocation0 [shape = 'u32[]', space=smem, size = 0x4, offset = 0x4, fixed_abs, tag = 'smem constant byte address 0x4 - core index']
  #allocation1 [shape = 'u32[72,128]{1,0:T(1,128)}', space=vmem, size = 0x9000, scoped, tag = 'internal scratch']
  %s0 = inlined_call_operand.vmem [shape: bf16[2,72,64], index: 0, kind: input, shape index: {}]
  %s1 = inlined_call_operand.vmem [shape: bf16[8,72], index: 1, kind: input, shape index: {}]
  %s2 = inlined_call_operand.vmem [shape: f32[8,1], index: 2, kind: input, shape index: {}]
  %s3 = inlined_call_operand.vmem [shape: f32[2,8,64], index: 3, kind: output, shape index: {}]
  %s4 = sld [smem:[#allocation0]]
  $region45: #{rsu4_forward.10} parent=0
    _
  %s6 = ssub.s32 1, %s4
  %s7 = scalar_select 0, %s6, %s4
  loop: start=0, step=1, limit=4
  $region2: #{rsu4_forward.10} parent=0 // loop_pre_header
    _
  $region3: #{rsu4_forward.10} parent=0 // loop_header
    %s9 = sphi 0, %s13
    %p10 = scmp.ge.s32.totalorder %s9, 4
    %s16 = sphi 0, %s28
    %s17 = sphi 0, %s24
    %s18 = sphi 0, %s16
    %s19 = sphi 0, %s17
    %s20 = sphi 0, %s18
    %s21 = sphi 0, %s19
    %s33 = sphi 0, %s35
    %s36 = sphi 0, %s33
    %s37 = sphi 0, %s36
    %s53 = sphi 0, %s37
    %s57 = sphi 0, %s57
    %s59 = sphi 0, %s57
    %s60 = sphi 0, %s59
    %s74 = sphi 0, %s60
    %s78 = sphi 0, %s78
    %s80 = sphi 0, %s78
    %s81 = sphi 0, %s80
    %s95 = sphi 0, %s81
    %s103 = sphi 0, %s105
    %s106 = sphi 0, %s103
    %s107 = sphi 0, %s106
    %s123 = sphi 0, %s107
  $region4: #{rsu4_forward.10} parent=0 // loop_header_branch
    %12 = sbr.rel (%p10) target = $region8
  $region5: #{rsu4_forward.10} parent=0 // loop_body
    %s14 = ssub.s32 %s9, 1
    %s15 = ssub.s32 %s9, 2
    %s22 = sadd.s32 1, %s17
    %p23 = scmp.ge.s32.totalorder %s22, 1
    %s24 = scalar_select %p23, 0, %s22
    %s25 = sadd.s32 1, %s16
    %s26 = scalar_select %p23, %s25, %s16
    %p27 = scmp.ge.s32.totalorder %s26, 2
    %s28 = scalar_select %p27, 0, %s26
    %s29 = ssub.s32 %s16, %s28
    %s30 = ssub.s32 %s17, %s24
    %s31 = sor.u32 %s29, %s30
    %p32 = scmp.eq.s32.totalorder %s31, 0
    %s34 = sadd.s32 %s33, 1
    %s35 = scalar_select %p32, %s33, %s34
    %p38 = pneg %p32
    %p39 = scmp.eq.s32.totalorder %s9, 1
    %p40 = por %p38, %p39
    %p41 = scmp.ne.s32.totalorder %s33, %s36
    %p42 = scmp.eq.s32.totalorder %s9, 0
    %p43 = por %p41, %p42
    %p44 = scmp.ne.s32.totalorder %s33, %s36
    %p45 = scmp.eq.s32.totalorder %s14, 1
    %p46 = por %p44, %p45
    %p47 = scmp.ne.s32.totalorder %s36, %s37
    %p48 = scmp.eq.s32.totalorder %s14, 0
    %p49 = por %p47, %p48
    %p50 = scmp.ne.s32.totalorder %s36, %s37
    %p51 = scmp.eq.s32.totalorder %s15, 1
    %p52 = por %p50, %p51
    %p54 = scmp.ne.s32.totalorder %s37, %s53
    %p55 = scmp.eq.s32.totalorder %s15, 0
    %p56 = por %p54, %p55
    %s58 = sadd.s32 %s57, 1
    %p61 = scmp.eq.s32.totalorder %s9, 1
    %p62 = scmp.ne.s32.totalorder %s57, %s59
    %p63 = scmp.eq.s32.totalorder %s9, 0
    %p64 = por %p62, %p63
    %p65 = scmp.ne.s32.totalorder %s57, %s59
    %p66 = scmp.eq.s32.totalorder %s14, 1
    %p67 = por %p65, %p66
    %p68 = scmp.ne.s32.totalorder %s59, %s60
    %p69 = scmp.eq.s32.totalorder %s14, 0
    %p70 = por %p68, %p69
    %p71 = scmp.ne.s32.totalorder %s59, %s60
    %p72 = scmp.eq.s32.totalorder %s15, 1
    %p73 = por %p71, %p72
    %p75 = scmp.ne.s32.totalorder %s60, %s74
    %p76 = scmp.eq.s32.totalorder %s15, 0
    %p77 = por %p75, %p76
    %s79 = sadd.s32 %s78, 1
    %p82 = scmp.eq.s32.totalorder %s9, 1
    %p83 = scmp.ne.s32.totalorder %s78, %s80
    %p84 = scmp.eq.s32.totalorder %s9, 0
    %p85 = por %p83, %p84
    %p86 = scmp.ne.s32.totalorder %s78, %s80
    %p87 = scmp.eq.s32.totalorder %s14, 1
    %p88 = por %p86, %p87
    %p89 = scmp.ne.s32.totalorder %s80, %s81
    %p90 = scmp.eq.s32.totalorder %s14, 0
    %p91 = por %p89, %p90
    %p92 = scmp.ne.s32.totalorder %s80, %s81
    %p93 = scmp.eq.s32.totalorder %s15, 1
    %p94 = por %p92, %p93
    %p96 = scmp.ne.s32.totalorder %s81, %s95
    %p97 = scmp.eq.s32.totalorder %s15, 0
    %p98 = por %p96, %p97
    %s99 = ssub.s32 %s16, %s28
    %s100 = ssub.s32 %s17, %s24
    %s101 = sor.u32 %s99, %s100
    %p102 = scmp.eq.s32.totalorder %s101, 0
    %s104 = sadd.s32 %s103, 1
    %s105 = scalar_select %p102, %s103, %s104
    %p108 = pneg %p102
    %p109 = scmp.eq.s32.totalorder %s9, 1
    %p110 = por %p108, %p109
    %p111 = scmp.ne.s32.totalorder %s103, %s106
    %p112 = scmp.eq.s32.totalorder %s9, 0
    %p113 = por %p111, %p112
    %p114 = scmp.ne.s32.totalorder %s103, %s106
    %p115 = scmp.eq.s32.totalorder %s14, 1
    %p116 = por %p114, %p115
    %p117 = scmp.ne.s32.totalorder %s106, %s107
    %p118 = scmp.eq.s32.totalorder %s14, 0
    %p119 = por %p117, %p118
    %p120 = scmp.ne.s32.totalorder %s106, %s107
    %p121 = scmp.eq.s32.totalorder %s15, 1
    %p122 = por %p120, %p121
    %p124 = scmp.ne.s32.totalorder %s107, %s123
    %p125 = scmp.eq.s32.totalorder %s15, 0
    %p126 = por %p124, %p125
    %p127 = scmp.le.s32.totalorder 1, %s9
    %p128 = scmp.lt.s32.totalorder %s9, 3
    %p129 = pnand %p127, %p128
    %p130 = pneg %p129
    // Predicated region
    $region9: #{rsu4_forward.10} parent=5 // pred_check
      _
    $region10: #{rsu4_forward.10} parent=5 // pred_check_branch
      %132 = sbr.rel (%p129) target = $region12
    $region11: #{rsu4_forward.10} parent=5 // pred_region
      %s133 = ssub.s32 %s9, 1
      // Predicated region
      $region13: #{rsu4_forward.10} parent=11 // pred_check
        %p134 = pneg %p70
      $region14: #{rsu4_forward.10} parent=11 // pred_check_branch
        %136 = sbr.rel (%p134) target = $region16
      $region15: #{rsu4_forward.10} parent=11 // pred_region
        _
      $region16: #{rsu4_forward.10} parent=11 // pred_fallthru
        _
      // Predicated region
      $region17: #{rsu4_forward.10} parent=11 // pred_check
        %p137 = pneg %p91
      $region18: #{rsu4_forward.10} parent=11 // pred_check_branch
        %139 = sbr.rel (%p137) target = $region20
      $region19: #{rsu4_forward.10} parent=11 // pred_region
        _
      $region20: #{rsu4_forward.10} parent=11 // pred_fallthru
        _
    $region12: #{rsu4_forward.10} parent=5 // pred_fallthru
      _
    %p140 = scmp.lt.s32.totalorder %s9, 2
    // Predicated region
    $region21: #{rsu4_forward.10} parent=5 // pred_check
      %p141 = pneg %p140
    $region22: #{rsu4_forward.10} parent=5 // pred_check_branch
      %143 = sbr.rel (%p141) target = $region24
    $region23: #{rsu4_forward.10} parent=5 // pred_region
      // Predicated region
      $region25: #{rsu4_forward.10} parent=23 // pred_check
        %p144 = pneg %p43
      $region26: #{rsu4_forward.10} parent=23 // pred_check_branch
        %146 = sbr.rel (%p144) target = $region28
      $region27: #{rsu4_forward.10} parent=23 // pred_region
        %p147 = scmp.lt.s32.totalorder %s16, 1
        %s148 = scalar_select %p147, %s16, 1
        %p149 = scmp.lt.s32.totalorder %s17, 0
        %s150 = scalar_select %p149, %s17, 0
        %s151 = smul.addr %s148, 9
        %s152 = sadd.s32 %s150, %s151
        %s153 = smul.addr %s152, 4
        %s154 = scalar_lea.vmem %s0, %s153
      $region28: #{rsu4_forward.10} parent=23 // pred_fallthru
        _
    $region24: #{rsu4_forward.10} parent=5 // pred_fallthru
      _
    %p155 = scmp.le.s32.totalorder 1, %s9
    %p156 = scmp.lt.s32.totalorder %s9, 3
    %p157 = pnand %p155, %p156
    %p158 = pneg %p157
    // Predicated region
    $region29: #{rsu4_forward.10} parent=5 // pred_check
      _
    $region30: #{rsu4_forward.10} parent=5 // pred_check_branch
      %160 = sbr.rel (%p157) target = $region32
    $region31: #{rsu4_forward.10} parent=5 // pred_region
      %s161 = ssub.s32 %s9, 1
      %p162 = scmp.lt.s32.totalorder %s18, 1
      %s163 = scalar_select %p162, %s18, 1
      %p164 = scmp.lt.s32.totalorder %s19, 0
      %s165 = scalar_select %p164, %s19, 0
      %s166 = smul.addr %s163, 9
      %s167 = sadd.s32 %s165, %s166
      %s168 = smul.addr %s167, 4
      %s169 = scalar_lea.vmem %s0, %s168
      %p170 = pneg %p49
      %p171 = pneg %p46
      %p172 = pneg %p70
      %p173 = pneg %p67
      %p174 = pneg %p91
      %p175 = pneg %p88
      %p176 = pneg %p119
      %p177 = pneg %p116
      %p178 = scmp.lt.s32.totalorder %s18, 1
      %s179 = scalar_select %p178, %s18, 1
      %p180 = scmp.lt.s32.totalorder %s19, 0
      %s181 = scalar_select %p180, %s19, 0
      %s182 = sadd.s32 %s181, %s179
      %s183 = smul.addr %s182, 8
      %s184 = scalar_lea.vmem %s3, %s183
      %p185 = scmp.lt.s32.totalorder %s18, 1
      %s186 = scalar_select %p185, %s18, 1
      %p187 = scmp.lt.s32.totalorder %s19, 0
      %s188 = scalar_select %p187, %s19, 0
      %s189 = smul.addr %s186, 9
      %s190 = sadd.s32 %s188, %s189
      %s191 = smul.addr %s190, 4
      %s192 = scalar_lea.vmem %s0, %s191
      %p193 = scmp.lt.s32.totalorder %s18, 1
      %s194 = scalar_select %p193, %s18, 1
      %p195 = scmp.lt.s32.totalorder %s19, 0
      %s196 = scalar_select %p195, %s19, 0
      %s197 = sadd.s32 %s196, %s194
      %s198 = smul.addr %s197, 8
      %s199 = scalar_lea.vmem %s3, %s198
      %v201 = vld [vmem:[%s2] sm:$0xff]
      %v202 = vld [vmem:[%s1] sm:$0xf]
      %v203 = vld [vmem:[%s192] sm:$0xf]
      %v204 = vld [vmem:[%s192 + $0x4] sm:$0xf]
      %v205 = vld [vmem:[%s192 + $0x8] sm:$0xf]
      %v206 = vld [vmem:[%s192 + $0xc] sm:$0xf]
      %v207 = vld [vmem:[%s192 + $0x10] sm:$0xf]
      %v208 = vld [vmem:[%s192 + $0x14] sm:$0xf]
      %v209 = vld [vmem:[%s192 + $0x18] sm:$0xf]
      %v210 = vld [vmem:[%s192 + $0x1c] sm:$0xf]
      %v211 = vld [vmem:[%s192 + $0x20] sm:$0xf]
      %213 = vset.pattern.permute.xlu0 0
      %214 = vperm.xlu0 %213, %v201
      %v215 = vpop.permute.xlu0 %214
      %v226 = vunpack.c.l.b16 %v203
      %v227 = vunpack.c.l.b16 %v204
      %v228 = vunpack.c.l.b16 %v205
      %v229 = vunpack.c.l.b16 %v206
      %v230 = vunpack.c.l.b16 %v207
      %v231 = vunpack.c.l.b16 %v208
      %v232 = vunpack.c.l.b16 %v209
      %v233 = vunpack.c.l.b16 %v210
      %v234 = vunpack.c.l.b16 %v211
      %v235 = vpack.c.b16 %v227, %v226
      %v236 = vpack.c.b16 %v229, %v228
      %v237 = vpack.c.b16 %v231, %v230
      %v238 = vpack.c.b16 %v233, %v232
      %v239 = vpack.c.b16 %v234, %v234
      %vm244 = vcmask 588800
      %v246 = vsel %vm244, %v202, 0
      %vm248 = vcmask 1043456
      %v250 = vsel %vm248, %v239, 0
      %252 = vmatpush.bf16.msra.mxu0 0
      %253 = vmatpush.bf16.msra.mxu0 0
      %254 = vmatpush.bf16.msra.mxu0 0
      %255 = vmatpush.bf16.msra.mxu0 %v250
      %256 = vmatpush.bf16.msra.mxu0 %v238
      %257 = vmatpush.bf16.msra.mxu0 %v237
      %258 = vmatpush.bf16.msra.mxu0 %v236
      %259 = vmatpush.bf16.msra.mxu0 %v235
      %260 = vmatmul.bf16.gmra.mxu0 %v246
      %v261 = vpop.f32.mrf.mxu0
      %v262 = vadd.f32 %v215, %v261
      %v263 = vpop.f32.mrf.mxu0
      %264 = vdwg.mxu0
      %v265 = vmax.f32 %v262, 0.0
      %vm266 = vcmask 523264
      %267 = vst.msk [vmem:[%s199] sm:$0xff] %vm266, %v265
      %p268 = scmp.lt.s32.totalorder %s18, 1
      %s269 = scalar_select %p268, %s18, 1
      %p270 = scmp.lt.s32.totalorder %s19, 0
      %s271 = scalar_select %p270, %s19, 0
      %s272 = sadd.s32 %s271, %s269
      %s273 = smul.addr %s272, 8
      %s274 = scalar_lea.vmem %s3, %s273
      // Predicated region
      $region33: #{rsu4_forward.10} parent=31 // pred_check
        %p275 = pneg %p116
      $region34: #{rsu4_forward.10} parent=31 // pred_check_branch
        %277 = sbr.rel (%p275) target = $region36
      $region35: #{rsu4_forward.10} parent=31 // pred_region
        _
      $region36: #{rsu4_forward.10} parent=31 // pred_fallthru
        _
    $region32: #{rsu4_forward.10} parent=5 // pred_fallthru
      _
    %p278 = scmp.le.s32.totalorder 2, %s9
    // Predicated region
    $region37: #{rsu4_forward.10} parent=5 // pred_check
      %p279 = pneg %p278
    $region38: #{rsu4_forward.10} parent=5 // pred_check_branch
      %281 = sbr.rel (%p279) target = $region40
    $region39: #{rsu4_forward.10} parent=5 // pred_region
      %s282 = ssub.s32 %s9, 2
      // Predicated region
      $region41: #{rsu4_forward.10} parent=39 // pred_check
        %p283 = pneg %p122
      $region42: #{rsu4_forward.10} parent=39 // pred_check_branch
        %285 = sbr.rel (%p283) target = $region44
      $region43: #{rsu4_forward.10} parent=39 // pred_region
        %p286 = scmp.lt.s32.totalorder %s20, 1
        %s287 = scalar_select %p286, %s20, 1
        %p288 = scmp.lt.s32.totalorder %s21, 0
        %s289 = scalar_select %p288, %s21, 0
        %s290 = sadd.s32 %s289, %s287
        %s291 = smul.addr %s290, 8
        %s292 = scalar_lea.vmem %s3, %s291
      $region44: #{rsu4_forward.10} parent=39 // pred_fallthru
        _
    $region40: #{rsu4_forward.10} parent=5 // pred_fallthru
      _
  $region6: #{rsu4_forward.10} parent=0 // loop_footer
    %s13 = sadd.s32 1, %s9
  $region7: #{rsu4_forward.10} parent=0 // loop_footer_branch
    %8 = sbr.rel target = $region3
  $region8: #{rsu4_forward.10} parent=0 // loop_exit
    _

// kernel: rsu4_forward.11
$region0: #{rsu4_forward.11}
  #allocation0 [shape = 'u32[]', space=smem, size = 0x4, offset = 0x4, fixed_abs, tag = 'smem constant byte address 0x4 - core index']
  #allocation1 [shape = 'u32[72,128]{1,0:T(1,128)}', space=vmem, size = 0x9000, scoped, tag = 'internal scratch']
  %s0 = inlined_call_operand.vmem [shape: bf16[2,72,16], index: 0, kind: input, shape index: {}]
  %s1 = inlined_call_operand.vmem [shape: bf16[8,72], index: 1, kind: input, shape index: {}]
  %s2 = inlined_call_operand.vmem [shape: f32[8,1], index: 2, kind: input, shape index: {}]
  %s3 = inlined_call_operand.vmem [shape: f32[2,8,16], index: 3, kind: output, shape index: {}]
  %s4 = sld [smem:[#allocation0]]
  $region45: #{rsu4_forward.11} parent=0
    _
  %s6 = ssub.s32 1, %s4
  %s7 = scalar_select 0, %s6, %s4
  loop: start=0, step=1, limit=4
  $region2: #{rsu4_forward.11} parent=0 // loop_pre_header
    _
  $region3: #{rsu4_forward.11} parent=0 // loop_header
    %s9 = sphi 0, %s13
    %p10 = scmp.ge.s32.totalorder %s9, 4
    %s16 = sphi 0, %s28
    %s17 = sphi 0, %s24
    %s18 = sphi 0, %s16
    %s19 = sphi 0, %s17
    %s20 = sphi 0, %s18
    %s21 = sphi 0, %s19
    %s33 = sphi 0, %s35
    %s36 = sphi 0, %s33
    %s37 = sphi 0, %s36
    %s53 = sphi 0, %s37
    %s57 = sphi 0, %s57
    %s59 = sphi 0, %s57
    %s60 = sphi 0, %s59
    %s74 = sphi 0, %s60
    %s78 = sphi 0, %s78
    %s80 = sphi 0, %s78
    %s81 = sphi 0, %s80
    %s95 = sphi 0, %s81
    %s103 = sphi 0, %s105
    %s106 = sphi 0, %s103
    %s107 = sphi 0, %s106
    %s123 = sphi 0, %s107
  $region4: #{rsu4_forward.11} parent=0 // loop_header_branch
    %12 = sbr.rel (%p10) target = $region8
  $region5: #{rsu4_forward.11} parent=0 // loop_body
    %s14 = ssub.s32 %s9, 1
    %s15 = ssub.s32 %s9, 2
    %s22 = sadd.s32 1, %s17
    %p23 = scmp.ge.s32.totalorder %s22, 1
    %s24 = scalar_select %p23, 0, %s22
    %s25 = sadd.s32 1, %s16
    %s26 = scalar_select %p23, %s25, %s16
    %p27 = scmp.ge.s32.totalorder %s26, 2
    %s28 = scalar_select %p27, 0, %s26
    %s29 = ssub.s32 %s16, %s28
    %s30 = ssub.s32 %s17, %s24
    %s31 = sor.u32 %s29, %s30
    %p32 = scmp.eq.s32.totalorder %s31, 0
    %s34 = sadd.s32 %s33, 1
    %s35 = scalar_select %p32, %s33, %s34
    %p38 = pneg %p32
    %p39 = scmp.eq.s32.totalorder %s9, 1
    %p40 = por %p38, %p39
    %p41 = scmp.ne.s32.totalorder %s33, %s36
    %p42 = scmp.eq.s32.totalorder %s9, 0
    %p43 = por %p41, %p42
    %p44 = scmp.ne.s32.totalorder %s33, %s36
    %p45 = scmp.eq.s32.totalorder %s14, 1
    %p46 = por %p44, %p45
    %p47 = scmp.ne.s32.totalorder %s36, %s37
    %p48 = scmp.eq.s32.totalorder %s14, 0
    %p49 = por %p47, %p48
    %p50 = scmp.ne.s32.totalorder %s36, %s37
    %p51 = scmp.eq.s32.totalorder %s15, 1
    %p52 = por %p50, %p51
    %p54 = scmp.ne.s32.totalorder %s37, %s53
    %p55 = scmp.eq.s32.totalorder %s15, 0
    %p56 = por %p54, %p55
    %s58 = sadd.s32 %s57, 1
    %p61 = scmp.eq.s32.totalorder %s9, 1
    %p62 = scmp.ne.s32.totalorder %s57, %s59
    %p63 = scmp.eq.s32.totalorder %s9, 0
    %p64 = por %p62, %p63
    %p65 = scmp.ne.s32.totalorder %s57, %s59
    %p66 = scmp.eq.s32.totalorder %s14, 1
    %p67 = por %p65, %p66
    %p68 = scmp.ne.s32.totalorder %s59, %s60
    %p69 = scmp.eq.s32.totalorder %s14, 0
    %p70 = por %p68, %p69
    %p71 = scmp.ne.s32.totalorder %s59, %s60
    %p72 = scmp.eq.s32.totalorder %s15, 1
    %p73 = por %p71, %p72
    %p75 = scmp.ne.s32.totalorder %s60, %s74
    %p76 = scmp.eq.s32.totalorder %s15, 0
    %p77 = por %p75, %p76
    %s79 = sadd.s32 %s78, 1
    %p82 = scmp.eq.s32.totalorder %s9, 1
    %p83 = scmp.ne.s32.totalorder %s78, %s80
    %p84 = scmp.eq.s32.totalorder %s9, 0
    %p85 = por %p83, %p84
    %p86 = scmp.ne.s32.totalorder %s78, %s80
    %p87 = scmp.eq.s32.totalorder %s14, 1
    %p88 = por %p86, %p87
    %p89 = scmp.ne.s32.totalorder %s80, %s81
    %p90 = scmp.eq.s32.totalorder %s14, 0
    %p91 = por %p89, %p90
    %p92 = scmp.ne.s32.totalorder %s80, %s81
    %p93 = scmp.eq.s32.totalorder %s15, 1
    %p94 = por %p92, %p93
    %p96 = scmp.ne.s32.totalorder %s81, %s95
    %p97 = scmp.eq.s32.totalorder %s15, 0
    %p98 = por %p96, %p97
    %s99 = ssub.s32 %s16, %s28
    %s100 = ssub.s32 %s17, %s24
    %s101 = sor.u32 %s99, %s100
    %p102 = scmp.eq.s32.totalorder %s101, 0
    %s104 = sadd.s32 %s103, 1
    %s105 = scalar_select %p102, %s103, %s104
    %p108 = pneg %p102
    %p109 = scmp.eq.s32.totalorder %s9, 1
    %p110 = por %p108, %p109
    %p111 = scmp.ne.s32.totalorder %s103, %s106
    %p112 = scmp.eq.s32.totalorder %s9, 0
    %p113 = por %p111, %p112
    %p114 = scmp.ne.s32.totalorder %s103, %s106
    %p115 = scmp.eq.s32.totalorder %s14, 1
    %p116 = por %p114, %p115
    %p117 = scmp.ne.s32.totalorder %s106, %s107
    %p118 = scmp.eq.s32.totalorder %s14, 0
    %p119 = por %p117, %p118
    %p120 = scmp.ne.s32.totalorder %s106, %s107
    %p121 = scmp.eq.s32.totalorder %s15, 1
    %p122 = por %p120, %p121
    %p124 = scmp.ne.s32.totalorder %s107, %s123
    %p125 = scmp.eq.s32.totalorder %s15, 0
    %p126 = por %p124, %p125
    %p127 = scmp.le.s32.totalorder 1, %s9
    %p128 = scmp.lt.s32.totalorder %s9, 3
    %p129 = pnand %p127, %p128
    %p130 = pneg %p129
    // Predicated region
    $region9: #{rsu4_forward.11} parent=5 // pred_check
      _
    $region10: #{rsu4_forward.11} parent=5 // pred_check_branch
      %132 = sbr.rel (%p129) target = $region12
    $region11: #{rsu4_forward.11} parent=5 // pred_region
      %s133 = ssub.s32 %s9, 1
      // Predicated region
      $region13: #{rsu4_forward.11} parent=11 // pred_check
        %p134 = pneg %p70
      $region14: #{rsu4_forward.11} parent=11 // pred_check_branch
        %136 = sbr.rel (%p134) target = $region16
      $region15: #{rsu4_forward.11} parent=11 // pred_region
        _
      $region16: #{rsu4_forward.11} parent=11 // pred_fallthru
        _
      // Predicated region
      $region17: #{rsu4_forward.11} parent=11 // pred_check
        %p137 = pneg %p91
      $region18: #{rsu4_forward.11} parent=11 // pred_check_branch
        %139 = sbr.rel (%p137) target = $region20
      $region19: #{rsu4_forward.11} parent=11 // pred_region
        _
      $region20: #{rsu4_forward.11} parent=11 // pred_fallthru
        _
    $region12: #{rsu4_forward.11} parent=5 // pred_fallthru
      _
    %p140 = scmp.lt.s32.totalorder %s9, 2
    // Predicated region
    $region21: #{rsu4_forward.11} parent=5 // pred_check
      %p141 = pneg %p140
    $region22: #{rsu4_forward.11} parent=5 // pred_check_branch
      %143 = sbr.rel (%p141) target = $region24
    $region23: #{rsu4_forward.11} parent=5 // pred_region
      // Predicated region
      $region25: #{rsu4_forward.11} parent=23 // pred_check
        %p144 = pneg %p43
      $region26: #{rsu4_forward.11} parent=23 // pred_check_branch
        %146 = sbr.rel (%p144) target = $region28
      $region27: #{rsu4_forward.11} parent=23 // pred_region
        %p147 = scmp.lt.s32.totalorder %s16, 1
        %s148 = scalar_select %p147, %s16, 1
        %p149 = scmp.lt.s32.totalorder %s17, 0
        %s150 = scalar_select %p149, %s17, 0
        %s151 = smul.addr %s148, 9
        %s152 = sadd.s32 %s150, %s151
        %s153 = smul.addr %s152, 4
        %s154 = scalar_lea.vmem %s0, %s153
      $region28: #{rsu4_forward.11} parent=23 // pred_fallthru
        _
    $region24: #{rsu4_forward.11} parent=5 // pred_fallthru
      _
    %p155 = scmp.le.s32.totalorder 1, %s9
    %p156 = scmp.lt.s32.totalorder %s9, 3
    %p157 = pnand %p155, %p156
    %p158 = pneg %p157
    // Predicated region
    $region29: #{rsu4_forward.11} parent=5 // pred_check
      _
    $region30: #{rsu4_forward.11} parent=5 // pred_check_branch
      %160 = sbr.rel (%p157) target = $region32
    $region31: #{rsu4_forward.11} parent=5 // pred_region
      %s161 = ssub.s32 %s9, 1
      %p162 = scmp.lt.s32.totalorder %s18, 1
      %s163 = scalar_select %p162, %s18, 1
      %p164 = scmp.lt.s32.totalorder %s19, 0
      %s165 = scalar_select %p164, %s19, 0
      %s166 = smul.addr %s163, 9
      %s167 = sadd.s32 %s165, %s166
      %s168 = smul.addr %s167, 4
      %s169 = scalar_lea.vmem %s0, %s168
      %p170 = pneg %p49
      %p171 = pneg %p46
      %p172 = pneg %p70
      %p173 = pneg %p67
      %p174 = pneg %p91
      %p175 = pneg %p88
      %p176 = pneg %p119
      %p177 = pneg %p116
      %p178 = scmp.lt.s32.totalorder %s18, 1
      %s179 = scalar_select %p178, %s18, 1
      %p180 = scmp.lt.s32.totalorder %s19, 0
      %s181 = scalar_select %p180, %s19, 0
      %s182 = sadd.s32 %s181, %s179
      %s183 = smul.addr %s182, 8
      %s184 = scalar_lea.vmem %s3, %s183
      %p185 = scmp.lt.s32.totalorder %s18, 1
      %s186 = scalar_select %p185, %s18, 1
      %p187 = scmp.lt.s32.totalorder %s19, 0
      %s188 = scalar_select %p187, %s19, 0
      %s189 = smul.addr %s186, 9
      %s190 = sadd.s32 %s188, %s189
      %s191 = smul.addr %s190, 4
      %s192 = scalar_lea.vmem %s0, %s191
      %p193 = scmp.lt.s32.totalorder %s18, 1
      %s194 = scalar_select %p193, %s18, 1
      %p195 = scmp.lt.s32.totalorder %s19, 0
      %s196 = scalar_select %p195, %s19, 0
      %s197 = sadd.s32 %s196, %s194
      %s198 = smul.addr %s197, 8
      %s199 = scalar_lea.vmem %s3, %s198
      %v201 = vld [vmem:[%s2] sm:$0xff]
      %v202 = vld [vmem:[%s1] sm:$0xf]
      %v203 = vld [vmem:[%s192] sm:$0xf]
      %v204 = vld [vmem:[%s192 + $0x4] sm:$0xf]
      %v205 = vld [vmem:[%s192 + $0x8] sm:$0xf]
      %v206 = vld [vmem:[%s192 + $0xc] sm:$0xf]
      %v207 = vld [vmem:[%s192 + $0x10] sm:$0xf]
      %v208 = vld [vmem:[%s192 + $0x14] sm:$0xf]
      %v209 = vld [vmem:[%s192 + $0x18] sm:$0xf]
      %v210 = vld [vmem:[%s192 + $0x1c] sm:$0xf]
      %v211 = vld [vmem:[%s192 + $0x20] sm:$0xf]
      %213 = vset.pattern.permute.xlu0 0
      %214 = vperm.xlu0 %213, %v201
      %v215 = vpop.permute.xlu0 %214
      %v226 = vunpack.c.l.b16 %v203
      %v227 = vunpack.c.l.b16 %v204
      %v228 = vunpack.c.l.b16 %v205
      %v229 = vunpack.c.l.b16 %v206
      %v230 = vunpack.c.l.b16 %v207
      %v231 = vunpack.c.l.b16 %v208
      %v232 = vunpack.c.l.b16 %v209
      %v233 = vunpack.c.l.b16 %v210
      %v234 = vunpack.c.l.b16 %v211
      %v235 = vpack.c.b16 %v227, %v226
      %v236 = vpack.c.b16 %v229, %v228
      %v237 = vpack.c.b16 %v231, %v230
      %v238 = vpack.c.b16 %v233, %v232
      %v239 = vpack.c.b16 %v234, %v234
      %vm244 = vcmask 588800
      %v246 = vsel %vm244, %v202, 0
      %vm248 = vcmask 1043456
      %v250 = vsel %vm248, %v239, 0
      %252 = vmatpush.bf16.msra.mxu0 0
      %253 = vmatpush.bf16.msra.mxu0 0
      %254 = vmatpush.bf16.msra.mxu0 0
      %255 = vmatpush.bf16.msra.mxu0 %v250
      %256 = vmatpush.bf16.msra.mxu0 %v238
      %257 = vmatpush.bf16.msra.mxu0 %v237
      %258 = vmatpush.bf16.msra.mxu0 %v236
      %259 = vmatpush.bf16.msra.mxu0 %v235
      %260 = vmatmul.bf16.gmra.mxu0 %v246
      %v261 = vpop.f32.mrf.mxu0
      %v262 = vadd.f32 %v215, %v261
      %v263 = vpop.f32.mrf.mxu0
      %264 = vdwg.mxu0
      %v265 = vmax.f32 %v262, 0.0
      %vm266 = vcmask 130048
      %267 = vst.msk [vmem:[%s199] sm:$0xff] %vm266, %v265
      %p268 = scmp.lt.s32.totalorder %s18, 1
      %s269 = scalar_select %p268, %s18, 1
      %p270 = scmp.lt.s32.totalorder %s19, 0
      %s271 = scalar_select %p270, %s19, 0
      %s272 = sadd.s32 %s271, %s269
      %s273 = smul.addr %s272, 8
      %s274 = scalar_lea.vmem %s3, %s273
      // Predicated region
      $region33: #{rsu4_forward.11} parent=31 // pred_check
        %p275 = pneg %p116
      $region34: #{rsu4_forward.11} parent=31 // pred_check_branch
        %277 = sbr.rel (%p275) target = $region36
      $region35: #{rsu4_forward.11} parent=31 // pred_region
        _
      $region36: #{rsu4_forward.11} parent=31 // pred_fallthru
        _
    $region32: #{rsu4_forward.11} parent=5 // pred_fallthru
      _
    %p278 = scmp.le.s32.totalorder 2, %s9
    // Predicated region
    $region37: #{rsu4_forward.11} parent=5 // pred_check
      %p279 = pneg %p278
    $region38: #{rsu4_forward.11} parent=5 // pred_check_branch
      %281 = sbr.rel (%p279) target = $region40
    $region39: #{rsu4_forward.11} parent=5 // pred_region
      %s282 = ssub.s32 %s9, 2
      // Predicated region
      $region41: #{rsu4_forward.11} parent=39 // pred_check
        %p283 = pneg %p122
      $region42: #{rsu4_forward.11} parent=39 // pred_check_branch
        %285 = sbr.rel (%p283) target = $region44
      $region43: #{rsu4_forward.11} parent=39 // pred_region
        %p286 = scmp.lt.s32.totalorder %s20, 1
        %s287 = scalar_select %p286, %s20, 1
        %p288 = scmp.lt.s32.totalorder %s21, 0
        %s289 = scalar_select %p288, %s21, 0
        %s290 = sadd.s32 %s289, %s287
        %s291 = smul.addr %s290, 8
        %s292 = scalar_lea.vmem %s3, %s291
      $region44: #{rsu4_forward.11} parent=39 // pred_fallthru
        _
    $region40: #{rsu4_forward.11} parent=5 // pred_fallthru
      _
  $region6: #{rsu4_forward.11} parent=0 // loop_footer
    %s13 = sadd.s32 1, %s9
  $region7: #{rsu4_forward.11} parent=0 // loop_footer_branch
    %8 = sbr.rel target = $region3
  $region8: #{rsu4_forward.11} parent=0 // loop_exit
    _

// kernel: rsu4_forward.13
$region0: #{rsu4_forward.13}
  #allocation0 [shape = 'u32[]', space=smem, size = 0x4, offset = 0x4, fixed_abs, tag = 'smem constant byte address 0x4 - core index']
  #allocation1 [shape = 'u32[72,128]{1,0:T(1,128)}', space=vmem, size = 0x9000, scoped, tag = 'internal scratch']
  %s0 = inlined_call_operand.vmem [shape: bf16[2,72,16], index: 0, kind: input, shape index: {}]
  %s1 = inlined_call_operand.vmem [shape: bf16[2,72,16], index: 1, kind: input, shape index: {}]
  %s2 = inlined_call_operand.vmem [shape: bf16[8,72], index: 2, kind: input, shape index: {}]
  %s3 = inlined_call_operand.vmem [shape: bf16[8,72], index: 3, kind: input, shape index: {}]
  %s4 = inlined_call_operand.vmem [shape: f32[8,1], index: 4, kind: input, shape index: {}]
  %s5 = inlined_call_operand.vmem [shape: f32[2,8,16], index: 5, kind: output, shape index: {}]
  %s6 = sld [smem:[#allocation0]]
  $region53: #{rsu4_forward.13} parent=0
    _
  %s8 = ssub.s32 1, %s6
  %s9 = scalar_select 0, %s8, %s6
  loop: start=0, step=1, limit=4
  $region2: #{rsu4_forward.13} parent=0 // loop_pre_header
    _
  $region3: #{rsu4_forward.13} parent=0 // loop_header
    %s11 = sphi 0, %s15
    %p12 = scmp.ge.s32.totalorder %s11, 4
    %s18 = sphi 0, %s30
    %s19 = sphi 0, %s26
    %s20 = sphi 0, %s18
    %s21 = sphi 0, %s19
    %s22 = sphi 0, %s20
    %s23 = sphi 0, %s21
    %s35 = sphi 0, %s37
    %s38 = sphi 0, %s35
    %s39 = sphi 0, %s38
    %s55 = sphi 0, %s39
    %s63 = sphi 0, %s65
    %s66 = sphi 0, %s63
    %s67 = sphi 0, %s66
    %s83 = sphi 0, %s67
    %s87 = sphi 0, %s87
    %s89 = sphi 0, %s87
    %s90 = sphi 0, %s89
    %s104 = sphi 0, %s90
    %s108 = sphi 0, %s108
    %s110 = sphi 0, %s108
    %s111 = sphi 0, %s110
    %s125 = sphi 0, %s111
    %s129 = sphi 0, %s129
    %s131 = sphi 0, %s129
    %s132 = sphi 0, %s131
    %s146 = sphi 0, %s132
    %s154 = sphi 0, %s156
    %s157 = sphi 0, %s154
    %s158 = sphi 0, %s157
    %s174 = sphi 0, %s158
  $region4: #{rsu4_forward.13} parent=0 // loop_header_branch
    %14 = sbr.rel (%p12) target = $region8
  $region5: #{rsu4_forward.13} parent=0 // loop_body
    %s16 = ssub.s32 %s11, 1
    %s17 = ssub.s32 %s11, 2
    %s24 = sadd.s32 1, %s19
    %p25 = scmp.ge.s32.totalorder %s24, 1
    %s26 = scalar_select %p25, 0, %s24
    %s27 = sadd.s32 1, %s18
    %s28 = scalar_select %p25, %s27, %s18
    %p29 = scmp.ge.s32.totalorder %s28, 2
    %s30 = scalar_select %p29, 0, %s28
    %s31 = ssub.s32 %s18, %s30
    %s32 = ssub.s32 %s19, %s26
    %s33 = sor.u32 %s31, %s32
    %p34 = scmp.eq.s32.totalorder %s33, 0
    %s36 = sadd.s32 %s35, 1
    %s37 = scalar_select %p34, %s35, %s36
    %p40 = pneg %p34
    %p41 = scmp.eq.s32.totalorder %s11, 1
    %p42 = por %p40, %p41
    %p43 = scmp.ne.s32.totalorder %s35, %s38
    %p44 = scmp.eq.s32.totalorder %s11, 0
    %p45 = por %p43, %p44
    %p46 = scmp.ne.s32.totalorder %s35, %s38
    %p47 = scmp.eq.s32.totalorder %s16, 1
    %p48 = por %p46, %p47
    %p49 = scmp.ne.s32.totalorder %s38, %s39
    %p50 = scmp.eq.s32.totalorder %s16, 0
    %p51 = por %p49, %p50
    %p52 = scmp.ne.s32.totalorder %s38, %s39
    %p53 = scmp.eq.s32.totalorder %s17, 1
    %p54 = por %p52, %p53
    %p56 = scmp.ne.s32.totalorder %s39, %s55
    %p57 = scmp.eq.s32.totalorder %s17, 0
    %p58 = por %p56, %p57
    %s59 = ssub.s32 %s18, %s30
    %s60 = ssub.s32 %s19, %s26
    %s61 = sor.u32 %s59, %s60
    %p62 = scmp.eq.s32.totalorder %s61, 0
    %s64 = sadd.s32 %s63, 1
    %s65 = scalar_select %p62, %s63, %s64
    %p68 = pneg %p62
    %p69 = scmp.eq.s32.totalorder %s11, 1
    %p70 = por %p68, %p69
    %p71 = scmp.ne.s32.totalorder %s63, %s66
    %p72 = scmp.eq.s32.totalorder %s11, 0
    %p73 = por %p71, %p72
    %p74 = scmp.ne.s32.totalorder %s63, %s66
    %p75 = scmp.eq.s32.totalorder %s16, 1
    %p76 = por %p74, %p75
    %p77 = scmp.ne.s32.totalorder %s66, %s67
    %p78 = scmp.eq.s32.totalorder %s16, 0
    %p79 = por %p77, %p78
    %p80 = scmp.ne.s32.totalorder %s66, %s67
    %p81 = scmp.eq.s32.totalorder %s17, 1
    %p82 = por %p80, %p81
    %p84 = scmp.ne.s32.totalorder %s67, %s83
    %p85 = scmp.eq.s32.totalorder %s17, 0
    %p86 = por %p84, %p85
    %s88 = sadd.s32 %s87, 1
    %p91 = scmp.eq.s32.totalorder %s11, 1
    %p92 = scmp.ne.s32.totalorder %s87, %s89
    %p93 = scmp.eq.s32.totalorder %s11, 0
    %p94 = por %p92, %p93
    %p95 = scmp.ne.s32.totalorder %s87, %s89
    %p96 = scmp.eq.s32.totalorder %s16, 1
    %p97 = por %p95, %p96
    %p98 = scmp.ne.s32.totalorder %s89, %s90
    %p99 = scmp.eq.s32.totalorder %s16, 0
    %p100 = por %p98, %p99
    %p101 = scmp.ne.s32.totalorder %s89, %s90
    %p102 = scmp.eq.s32.totalorder %s17, 1
    %p103 = por %p101, %p102
    %p105 = scmp.ne.s32.totalorder %s90, %s104
    %p106 = scmp.eq.s32.totalorder %s17, 0
    %p107 = por %p105, %p106
    %s109 = sadd.s32 %s108, 1
    %p112 = scmp.eq.s32.totalorder %s11, 1
    %p113 = scmp.ne.s32.totalorder %s108, %s110
    %p114 = scmp.eq.s32.totalorder %s11, 0
    %p115 = por %p113, %p114
    %p116 = scmp.ne.s32.totalorder %s108, %s110
    %p117 = scmp.eq.s32.totalorder %s16, 1
    %p118 = por %p116, %p117
    %p119 = scmp.ne.s32.totalorder %s110, %s111
    %p120 = scmp.eq.s32.totalorder %s16, 0
    %p121 = por %p119, %p120
    %p122 = scmp.ne.s32.totalorder %s110, %s111
    %p123 = scmp.eq.s32.totalorder %s17, 1
    %p124 = por %p122, %p123
    %p126 = scmp.ne.s32.totalorder %s111, %s125
    %p127 = scmp.eq.s32.totalorder %s17, 0
    %p128 = por %p126, %p127
    %s130 = sadd.s32 %s129, 1
    %p133 = scmp.eq.s32.totalorder %s11, 1
    %p134 = scmp.ne.s32.totalorder %s129, %s131
    %p135 = scmp.eq.s32.totalorder %s11, 0
    %p136 = por %p134, %p135
    %p137 = scmp.ne.s32.totalorder %s129, %s131
    %p138 = scmp.eq.s32.totalorder %s16, 1
    %p139 = por %p137, %p138
    %p140 = scmp.ne.s32.totalorder %s131, %s132
    %p141 = scmp.eq.s32.totalorder %s16, 0
    %p142 = por %p140, %p141
    %p143 = scmp.ne.s32.totalorder %s131, %s132
    %p144 = scmp.eq.s32.totalorder %s17, 1
    %p145 = por %p143, %p144
    %p147 = scmp.ne.s32.totalorder %s132, %s146
    %p148 = scmp.eq.s32.totalorder %s17, 0
    %p149 = por %p147, %p148
    %s150 = ssub.s32 %s18, %s30
    %s151 = ssub.s32 %s19, %s26
    %s152 = sor.u32 %s150, %s151
    %p153 = scmp.eq.s32.totalorder %s152, 0
    %s155 = sadd.s32 %s154, 1
    %s156 = scalar_select %p153, %s154, %s155
    %p159 = pneg %p153
    %p160 = scmp.eq.s32.totalorder %s11, 1
    %p161 = por %p159, %p160
    %p162 = scmp.ne.s32.totalorder %s154, %s157
    %p163 = scmp.eq.s32.totalorder %s11, 0
    %p164 = por %p162, %p163
    %p165 = scmp.ne.s32.totalorder %s154, %s157
    %p166 = scmp.eq.s32.totalorder %s16, 1
    %p167 = por %p165, %p166
    %p168 = scmp.ne.s32.totalorder %s157, %s158
    %p169 = scmp.eq.s32.totalorder %s16, 0
    %p170 = por %p168, %p169
    %p171 = scmp.ne.s32.totalorder %s157, %s158
    %p172 = scmp.eq.s32.totalorder %s17, 1
    %p173 = por %p171, %p172
    %p175 = scmp.ne.s32.totalorder %s158, %s174
    %p176 = scmp.eq.s32.totalorder %s17, 0
    %p177 = por %p175, %p176
    %p178 = scmp.le.s32.totalorder 1, %s11
    %p179 = scmp.lt.s32.totalorder %s11, 3
    %p180 = pnand %p178, %p179
    %p181 = pneg %p180
    // Predicated region
    $region9: #{rsu4_forward.13} parent=5 // pred_check
      _
    $region10: #{rsu4_forward.13} parent=5 // pred_check_branch
      %183 = sbr.rel (%p180) target = $region12
    $region11: #{rsu4_forward.13} parent=5 // pred_region
      %s184 = ssub.s32 %s11, 1
      // Predicated region
      $region13: #{rsu4_forward.13} parent=11 // pred_check
        %p185 = pneg %p100
      $region14: #{rsu4_forward.13} parent=11 // pred_check_branch
        %187 = sbr.rel (%p185) target = $region16
      $region15: #{rsu4_forward.13} parent=11 // pred_region
        _
      $region16: #{rsu4_forward.13} parent=11 // pred_fallthru
        _
      // Predicated region
      $region17: #{rsu4_forward.13} parent=11 // pred_check
        %p188 = pneg %p121
      $region18: #{rsu4_forward.13} parent=11 // pred_check_branch
        %190 = sbr.rel (%p188) target = $region20
      $region19: #{rsu4_forward.13} parent=11 // pred_region
        _
      $region20: #{rsu4_forward.13} parent=11 // pred_fallthru
        _
      // Predicated region
      $region21: #{rsu4_forward.13} parent=11 // pred_check
        %p191 = pneg %p142
      $region22: #{rsu4_forward.13} parent=11 // pred_check_branch
        %193 = sbr.rel (%p191) target = $region24
      $region23: #{rsu4_forward.13} parent=11 // pred_region
        _
      $region24: #{rsu4_forward.13} parent=11 // pred_fallthru
        _
    $region12: #{rsu4_forward.13} parent=5 // pred_fallthru
      _
    %p194 = scmp.lt.s32.totalorder %s11, 2
    // Predicated region
    $region25: #{rsu4_forward.13} parent=5 // pred_check
      %p195 = pneg %p194
    $region26: #{rsu4_forward.13} parent=5 // pred_check_branch
      %197 = sbr.rel (%p195) target = $region28
    $region27: #{rsu4_forward.13} parent=5 // pred_region
      // Predicated region
      $region29: #{rsu4_forward.13} parent=27 // pred_check
        %p198 = pneg %p45
      $region30: #{rsu4_forward.13} parent=27 // pred_check_branch
        %200 = sbr.rel (%p198) target = $region32
      $region31: #{rsu4_forward.13} parent=27 // pred_region
        %p201 = scmp.lt.s32.totalorder %s18, 1
        %s202 = scalar_select %p201, %s18, 1
        %p203 = scmp.lt.s32.totalorder %s19, 0
        %s204 = scalar_select %p203, %s19, 0
        %s205 = smul.addr %s202, 9
        %s206 = sadd.s32 %s204, %s205
        %s207 = smul.addr %s206, 4
        %s208 = scalar_lea.vmem %s0, %s207
      $region32: #{rsu4_forward.13} parent=27 // pred_fallthru
        _
      // Predicated region
      $region33: #{rsu4_forward.13} parent=27 // pred_check
        %p209 = pneg %p73
      $region34: #{rsu4_forward.13} parent=27 // pred_check_branch
        %211 = sbr.rel (%p209) target = $region36
      $region35: #{rsu4_forward.13} parent=27 // pred_region
        %p212 = scmp.lt.s32.totalorder %s18, 1
        %s213 = scalar_select %p212, %s18, 1
        %p214 = scmp.lt.s32.totalorder %s19, 0
        %s215 = scalar_select %p214, %s19, 0
        %s216 = smul.addr %s213, 9
        %s217 = sadd.s32 %s215, %s216
        %s218 = smul.addr %s217, 4
        %s219 = scalar_lea.vmem %s1, %s218
      $region36: #{rsu4_forward.13} parent=27 // pred_fallthru
        _
    $region28: #{rsu4_forward.13} parent=5 // pred_fallthru
      _
    %p220 = scmp.le.s32.totalorder 1, %s11
    %p221 = scmp.lt.s32.totalorder %s11, 3
    %p222 = pnand %p220, %p221
    %p223 = pneg %p222
    // Predicated region
    $region37: #{rsu4_forward.13} parent=5 // pred_check
      _
    $region38: #{rsu4_forward.13} parent=5 // pred_check_branch
      %225 = sbr.rel (%p222) target = $region40
    $region39: #{rsu4_forward.13} parent=5 // pred_region
      %s226 = ssub.s32 %s11, 1
      %p227 = scmp.lt.s32.totalorder %s20, 1
      %s228 = scalar_select %p227, %s20, 1
      %p229 = scmp.lt.s32.totalorder %s21, 0
      %s230 = scalar_select %p229, %s21, 0
      %s231 = smul.addr %s228, 9
      %s232 = sadd.s32 %s230, %s231
      %s233 = smul.addr %s232, 4
      %s234 = scalar_lea.vmem %s0, %s233
      %p235 = pneg %p51
      %p236 = pneg %p48
      %p237 = scmp.lt.s32.totalorder %s20, 1
      %s238 = scalar_select %p237, %s20, 1
      %p239 = scmp.lt.s32.totalorder %s21, 0
      %s240 = scalar_select %p239, %s21, 0
      %s241 = smul.addr %s238, 9
      %s242 = sadd.s32 %s240, %s241
      %s243 = smul.addr %s242, 4
      %s244 = scalar_lea.vmem %s1, %s243
      %p245 = pneg %p79
      %p246 = pneg %p76
      %p247 = pneg %p100
      %p248 = pneg %p97
      %p249 = pneg %p121
      %p250 = pneg %p118
      %p251 = pneg %p142
      %p252 = pneg %p139
      %p253 = pneg %p170
      %p254 = pneg %p167
      %p255 = scmp.lt.s32.totalorder %s20, 1
      %s256 = scalar_select %p255, %s20, 1
      %p257 = scmp.lt.s32.totalorder %s21, 0
      %s258 = scalar_select %p257, %s21, 0
      %s259 = sadd.s32 %s258, %s256
      %s260 = smul.addr %s259, 8
      %s261 = scalar_lea.vmem %s5, %s260
      %p262 = scmp.lt.s32.totalorder %s20, 1
      %s263 = scalar_select %p262, %s20, 1
      %p264 = scmp.lt.s32.totalorder %s21, 0
      %s265 = scalar_select %p264, %s21, 0
      %s266 = smul.addr %s263, 9
      %s267 = sadd.s32 %s265, %s266
      %s268 = smul.addr %s267, 4
      %s269 = scalar_lea.vmem %s0, %s268
      %p270 = scmp.lt.s32.totalorder %s20, 1
      %s271 = scalar_select %p270, %s20, 1
      %p272 = scmp.lt.s32.totalorder %s21, 0
      %s273 = scalar_select %p272, %s21, 0
      %s274 = smul.addr %s271, 9
      %s275 = sadd.s32 %s273, %s274
      %s276 = smul.addr %s275, 4
      %s277 = scalar_lea.vmem %s1, %s276
      %p278 = scmp.lt.s32.totalorder %s20, 1
      %s279 = scalar_select %p278, %s20, 1
      %p280 = scmp.lt.s32.totalorder %s21, 0
      %s281 = scalar_select %p280, %s21, 0
      %s282 = sadd.s32 %s281, %s279
      %s283 = smul.addr %s282, 8
      %s284 = scalar_lea.vmem %s5, %s283
      %v286 = vld [vmem:[%s4] sm:$0xff]
      %v287 = vld [vmem:[%s2] sm:$0xf]
      %v288 = vld [vmem:[%s269] sm:$0xf]
      %v289 = vld [vmem:[%s269 + $0x4] sm:$0xf]
      %v290 = vld [vmem:[%s269 + $0x8] sm:$0xf]
      %v291 = vld [vmem:[%s269 + $0xc] sm:$0xf]
      %v292 = vld [vmem:[%s269 + $0x10] sm:$0xf]
      %v293 = vld [vmem:[%s269 + $0x14] sm:$0xf]
      %v294 = vld [vmem:[%s269 + $0x18] sm:$0xf]
      %v295 = vld [vmem:[%s269 + $0x1c] sm:$0xf]
      %v296 = vld [vmem:[%s269 + $0x20] sm:$0xf]
      %v297 = vld [vmem:[%s3] sm:$0xf]
      %v298 = vld [vmem:[%s277] sm:$0xf]
      %v299 = vld [vmem:[%s277 + $0x4] sm:$0xf]
      %v300 = vld [vmem:[%s277 + $0x8] sm:$0xf]
      %v301 = vld [vmem:[%s277 + $0xc] sm:$0xf]
      %v302 = vld [vmem:[%s277 + $0x10] sm:$0xf]
      %v303 = vld [vmem:[%s277 + $0x14] sm:$0xf]
      %v304 = vld [vmem:[%s277 + $0x18] sm:$0xf]
      %v305 = vld [vmem:[%s277 + $0x1c] sm:$0xf]
      %v306 = vld [vmem:[%s277 + $0x20] sm:$0xf]
      %v316 = vunpack.c.l.b16 %v298
      %v317 = vunpack.c.l.b16 %v299
      %v318 = vunpack.c.l.b16 %v300
      %v319 = vunpack.c.l.b16 %v301
      %v320 = vunpack.c.l.b16 %v302
      %v321 = vunpack.c.l.b16 %v303
      %v322 = vunpack.c.l.b16 %v304
      %v323 = vunpack.c.l.b16 %v305
      %v324 = vunpack.c.l.b16 %v306
      %v325 = vpack.c.b16 %v317, %v316
      %v326 = vpack.c.b16 %v319, %v318
      %v327 = vpack.c.b16 %v321, %v320
      %v328 = vpack.c.b16 %v323, %v322
      %v329 = vpack.c.b16 %v324, %v324
      %vm334 = vcmask 588800
      %v336 = vsel %vm334, %v297, 0
      %vm338 = vcmask 1043456
      %v340 = vsel %vm338, %v329, 0
      %342 = vmatpush.bf16.msra.mxu0 0
      %343 = vmatpush.bf16.msra.mxu0 0
      %344 = vmatpush.bf16.msra.mxu0 0
      %345 = vmatpush.bf16.msra.mxu0 %v340
      %346 = vmatpush.bf16.msra.mxu0 %v328
      %347 = vmatpush.bf16.msra.mxu0 %v327
      %348 = vmatpush.bf16.msra.mxu0 %v326
      %349 = vmatpush.bf16.msra.mxu0 %v325
      %350 = vmatmul.bf16.gmra.mxu0 %v336
      %v351 = vpop.f32.mrf.mxu0
      %v352 = vadd.f32 0.0, %v351
      %v353 = vpop.f32.mrf.mxu0
      %354 = vdwg.mxu0
      %v364 = vunpack.c.l.b16 %v288
      %v365 = vunpack.c.l.b16 %v289
      %v366 = vunpack.c.l.b16 %v290
      %v367 = vunpack.c.l.b16 %v291
      %v368 = vunpack.c.l.b16 %v292
      %v369 = vunpack.c.l.b16 %v293
      %v370 = vunpack.c.l.b16 %v294
      %v371 = vunpack.c.l.b16 %v295
      %v372 = vunpack.c.l.b16 %v296
      %v373 = vpack.c.b16 %v365, %v364
      %v374 = vpack.c.b16 %v367, %v366
      %v375 = vpack.c.b16 %v369, %v368
      %v376 = vpack.c.b16 %v371, %v370
      %v377 = vpack.c.b16 %v372, %v372
      %v383 = vsel %vm334, %v287, 0
      %v386 = vsel %vm338, %v377, 0
      %388 = vmatpush.bf16.msra.mxu0 0
      %389 = vmatpush.bf16.msra.mxu0 0
      %390 = vmatpush.bf16.msra.mxu0 0
      %391 = vmatpush.bf16.msra.mxu0 %v386
      %392 = vmatpush.bf16.msra.mxu0 %v376
      %393 = vmatpush.bf16.msra.mxu0 %v375
      %394 = vmatpush.bf16.msra.mxu0 %v374
      %395 = vmatpush.bf16.msra.mxu0 %v373
      %396 = vmatmul.bf16.gmra.mxu0 %v383
      %v397 = vpop.f32.mrf.mxu0
      %v398 = vadd.f32 %v352, %v397
      %v399 = vpop.f32.mrf.mxu0
      %400 = vdwg.mxu0
      %402 = vset.pattern.permute.xlu0 0
      %403 = vperm.xlu0 %402, %v286
      %v404 = vpop.permute.xlu0 %403
      %v406 = vadd.f32 %v398, %v404
      %v407 = vmax.f32 %v406, 0.0
      %vm408 = vcmask 130048
      %409 = vst.msk [vmem:[%s284] sm:$0xff] %vm408, %v407
      %p410 = scmp.lt.s32.totalorder %s20, 1
      %s411 = scalar_select %p410, %s20, 1
      %p412 = scmp.lt.s32.totalorder %s21, 0
      %s413 = scalar_select %p412, %s21, 0
      %s414 = sadd.s32 %s413, %s411
      %s415 = smul.addr %s414, 8
      %s416 = scalar_lea.vmem %s5, %s415
      // Predicated region
      $region41: #{rsu4_forward.13} parent=39 // pred_check
        %p417 = pneg %p167
      $region42: #{rsu4_forward.13} parent=39 // pred_check_branch
        %419 = sbr.rel (%p417) target = $region44
      $region43: #{rsu4_forward.13} parent=39 // pred_region
        _
      $region44: #{rsu4_forward.13} parent=39 // pred_fallthru
        _
    $region40: #{rsu4_forward.13} parent=5 // pred_fallthru
      _
    %p420 = scmp.le.s32.totalorder 2, %s11
    // Predicated region
    $region45: #{rsu4_forward.13} parent=5 // pred_check
      %p421 = pneg %p420
    $region46: #{rsu4_forward.13} parent=5 // pred_check_branch
      %423 = sbr.rel (%p421) target = $region48
    $region47: #{rsu4_forward.13} parent=5 // pred_region
      %s424 = ssub.s32 %s11, 2
      // Predicated region
      $region49: #{rsu4_forward.13} parent=47 // pred_check
        %p425 = pneg %p173
      $region50: #{rsu4_forward.13} parent=47 // pred_check_branch
        %427 = sbr.rel (%p425) target = $region52
      $region51: #{rsu4_forward.13} parent=47 // pred_region
        %p428 = scmp.lt.s32.totalorder %s22, 1
        %s429 = scalar_select %p428, %s22, 1
        %p430 = scmp.lt.s32.totalorder %s23, 0
        %s431 = scalar_select %p430, %s23, 0
        %s432 = sadd.s32 %s431, %s429
        %s433 = smul.addr %s432, 8
        %s434 = scalar_lea.vmem %s5, %s433
      $region52: #{rsu4_forward.13} parent=47 // pred_fallthru
        _
    $region48: #{rsu4_forward.13} parent=5 // pred_fallthru
      _
  $region6: #{rsu4_forward.13} parent=0 // loop_footer
    %s15 = sadd.s32 1, %s11
  $region7: #{rsu4_forward.13} parent=0 // loop_footer_branch
    %10 = sbr.rel target = $region3
  $region8: #{rsu4_forward.13} parent=0 // loop_exit
    _

// kernel: rsu4_forward.14
$region0: #{rsu4_forward.14}
  #allocation0 [shape = 'u32[]', space=smem, size = 0x4, offset = 0x4, fixed_abs, tag = 'smem constant byte address 0x4 - core index']
  #allocation1 [shape = 'u32[72,128]{1,0:T(1,128)}', space=vmem, size = 0x9000, scoped, tag = 'internal scratch']
  %s0 = inlined_call_operand.vmem [shape: bf16[2,72,64], index: 0, kind: input, shape index: {}]
  %s1 = inlined_call_operand.vmem [shape: bf16[2,72,64], index: 1, kind: input, shape index: {}]
  %s2 = inlined_call_operand.vmem [shape: bf16[8,72], index: 2, kind: input, shape index: {}]
  %s3 = inlined_call_operand.vmem [shape: bf16[8,72], index: 3, kind: input, shape index: {}]
  %s4 = inlined_call_operand.vmem [shape: f32[8,1], index: 4, kind: input, shape index: {}]
  %s5 = inlined_call_operand.vmem [shape: f32[2,8,64], index: 5, kind: output, shape index: {}]
  %s6 = sld [smem:[#allocation0]]
  $region53: #{rsu4_forward.14} parent=0
    _
  %s8 = ssub.s32 1, %s6
  %s9 = scalar_select 0, %s8, %s6
  loop: start=0, step=1, limit=4
  $region2: #{rsu4_forward.14} parent=0 // loop_pre_header
    _
  $region3: #{rsu4_forward.14} parent=0 // loop_header
    %s11 = sphi 0, %s15
    %p12 = scmp.ge.s32.totalorder %s11, 4
    %s18 = sphi 0, %s30
    %s19 = sphi 0, %s26
    %s20 = sphi 0, %s18
    %s21 = sphi 0, %s19
    %s22 = sphi 0, %s20
    %s23 = sphi 0, %s21
    %s35 = sphi 0, %s37
    %s38 = sphi 0, %s35
    %s39 = sphi 0, %s38
    %s55 = sphi 0, %s39
    %s63 = sphi 0, %s65
    %s66 = sphi 0, %s63
    %s67 = sphi 0, %s66
    %s83 = sphi 0, %s67
    %s87 = sphi 0, %s87
    %s89 = sphi 0, %s87
    %s90 = sphi 0, %s89
    %s104 = sphi 0, %s90
    %s108 = sphi 0, %s108
    %s110 = sphi 0, %s108
    %s111 = sphi 0, %s110
    %s125 = sphi 0, %s111
    %s129 = sphi 0, %s129
    %s131 = sphi 0, %s129
    %s132 = sphi 0, %s131
    %s146 = sphi 0, %s132
    %s154 = sphi 0, %s156
    %s157 = sphi 0, %s154
    %s158 = sphi 0, %s157
    %s174 = sphi 0, %s158
  $region4: #{rsu4_forward.14} parent=0 // loop_header_branch
    %14 = sbr.rel (%p12) target = $region8
  $region5: #{rsu4_forward.14} parent=0 // loop_body
    %s16 = ssub.s32 %s11, 1
    %s17 = ssub.s32 %s11, 2
    %s24 = sadd.s32 1, %s19
    %p25 = scmp.ge.s32.totalorder %s24, 1
    %s26 = scalar_select %p25, 0, %s24
    %s27 = sadd.s32 1, %s18
    %s28 = scalar_select %p25, %s27, %s18
    %p29 = scmp.ge.s32.totalorder %s28, 2
    %s30 = scalar_select %p29, 0, %s28
    %s31 = ssub.s32 %s18, %s30
    %s32 = ssub.s32 %s19, %s26
    %s33 = sor.u32 %s31, %s32
    %p34 = scmp.eq.s32.totalorder %s33, 0
    %s36 = sadd.s32 %s35, 1
    %s37 = scalar_select %p34, %s35, %s36
    %p40 = pneg %p34
    %p41 = scmp.eq.s32.totalorder %s11, 1
    %p42 = por %p40, %p41
    %p43 = scmp.ne.s32.totalorder %s35, %s38
    %p44 = scmp.eq.s32.totalorder %s11, 0
    %p45 = por %p43, %p44
    %p46 = scmp.ne.s32.totalorder %s35, %s38
    %p47 = scmp.eq.s32.totalorder %s16, 1
    %p48 = por %p46, %p47
    %p49 = scmp.ne.s32.totalorder %s38, %s39
    %p50 = scmp.eq.s32.totalorder %s16, 0
    %p51 = por %p49, %p50
    %p52 = scmp.ne.s32.totalorder %s38, %s39
    %p53 = scmp.eq.s32.totalorder %s17, 1
    %p54 = por %p52, %p53
    %p56 = scmp.ne.s32.totalorder %s39, %s55
    %p57 = scmp.eq.s32.totalorder %s17, 0
    %p58 = por %p56, %p57
    %s59 = ssub.s32 %s18, %s30
    %s60 = ssub.s32 %s19, %s26
    %s61 = sor.u32 %s59, %s60
    %p62 = scmp.eq.s32.totalorder %s61, 0
    %s64 = sadd.s32 %s63, 1
    %s65 = scalar_select %p62, %s63, %s64
    %p68 = pneg %p62
    %p69 = scmp.eq.s32.totalorder %s11, 1
    %p70 = por %p68, %p69
    %p71 = scmp.ne.s32.totalorder %s63, %s66
    %p72 = scmp.eq.s32.totalorder %s11, 0
    %p73 = por %p71, %p72
    %p74 = scmp.ne.s32.totalorder %s63, %s66
    %p75 = scmp.eq.s32.totalorder %s16, 1
    %p76 = por %p74, %p75
    %p77 = scmp.ne.s32.totalorder %s66, %s67
    %p78 = scmp.eq.s32.totalorder %s16, 0
    %p79 = por %p77, %p78
    %p80 = scmp.ne.s32.totalorder %s66, %s67
    %p81 = scmp.eq.s32.totalorder %s17, 1
    %p82 = por %p80, %p81
    %p84 = scmp.ne.s32.totalorder %s67, %s83
    %p85 = scmp.eq.s32.totalorder %s17, 0
    %p86 = por %p84, %p85
    %s88 = sadd.s32 %s87, 1
    %p91 = scmp.eq.s32.totalorder %s11, 1
    %p92 = scmp.ne.s32.totalorder %s87, %s89
    %p93 = scmp.eq.s32.totalorder %s11, 0
    %p94 = por %p92, %p93
    %p95 = scmp.ne.s32.totalorder %s87, %s89
    %p96 = scmp.eq.s32.totalorder %s16, 1
    %p97 = por %p95, %p96
    %p98 = scmp.ne.s32.totalorder %s89, %s90
    %p99 = scmp.eq.s32.totalorder %s16, 0
    %p100 = por %p98, %p99
    %p101 = scmp.ne.s32.totalorder %s89, %s90
    %p102 = scmp.eq.s32.totalorder %s17, 1
    %p103 = por %p101, %p102
    %p105 = scmp.ne.s32.totalorder %s90, %s104
    %p106 = scmp.eq.s32.totalorder %s17, 0
    %p107 = por %p105, %p106
    %s109 = sadd.s32 %s108, 1
    %p112 = scmp.eq.s32.totalorder %s11, 1
    %p113 = scmp.ne.s32.totalorder %s108, %s110
    %p114 = scmp.eq.s32.totalorder %s11, 0
    %p115 = por %p113, %p114
    %p116 = scmp.ne.s32.totalorder %s108, %s110
    %p117 = scmp.eq.s32.totalorder %s16, 1
    %p118 = por %p116, %p117
    %p119 = scmp.ne.s32.totalorder %s110, %s111
    %p120 = scmp.eq.s32.totalorder %s16, 0
    %p121 = por %p119, %p120
    %p122 = scmp.ne.s32.totalorder %s110, %s111
    %p123 = scmp.eq.s32.totalorder %s17, 1
    %p124 = por %p122, %p123
    %p126 = scmp.ne.s32.totalorder %s111, %s125
    %p127 = scmp.eq.s32.totalorder %s17, 0
    %p128 = por %p126, %p127
    %s130 = sadd.s32 %s129, 1
    %p133 = scmp.eq.s32.totalorder %s11, 1
    %p134 = scmp.ne.s32.totalorder %s129, %s131
    %p135 = scmp.eq.s32.totalorder %s11, 0
    %p136 = por %p134, %p135
    %p137 = scmp.ne.s32.totalorder %s129, %s131
    %p138 = scmp.eq.s32.totalorder %s16, 1
    %p139 = por %p137, %p138
    %p140 = scmp.ne.s32.totalorder %s131, %s132
    %p141 = scmp.eq.s32.totalorder %s16, 0
    %p142 = por %p140, %p141
    %p143 = scmp.ne.s32.totalorder %s131, %s132
    %p144 = scmp.eq.s32.totalorder %s17, 1
    %p145 = por %p143, %p144
    %p147 = scmp.ne.s32.totalorder %s132, %s146
    %p148 = scmp.eq.s32.totalorder %s17, 0
    %p149 = por %p147, %p148
    %s150 = ssub.s32 %s18, %s30
    %s151 = ssub.s32 %s19, %s26
    %s152 = sor.u32 %s150, %s151
    %p153 = scmp.eq.s32.totalorder %s152, 0
    %s155 = sadd.s32 %s154, 1
    %s156 = scalar_select %p153, %s154, %s155
    %p159 = pneg %p153
    %p160 = scmp.eq.s32.totalorder %s11, 1
    %p161 = por %p159, %p160
    %p162 = scmp.ne.s32.totalorder %s154, %s157
    %p163 = scmp.eq.s32.totalorder %s11, 0
    %p164 = por %p162, %p163
    %p165 = scmp.ne.s32.totalorder %s154, %s157
    %p166 = scmp.eq.s32.totalorder %s16, 1
    %p167 = por %p165, %p166
    %p168 = scmp.ne.s32.totalorder %s157, %s158
    %p169 = scmp.eq.s32.totalorder %s16, 0
    %p170 = por %p168, %p169
    %p171 = scmp.ne.s32.totalorder %s157, %s158
    %p172 = scmp.eq.s32.totalorder %s17, 1
    %p173 = por %p171, %p172
    %p175 = scmp.ne.s32.totalorder %s158, %s174
    %p176 = scmp.eq.s32.totalorder %s17, 0
    %p177 = por %p175, %p176
    %p178 = scmp.le.s32.totalorder 1, %s11
    %p179 = scmp.lt.s32.totalorder %s11, 3
    %p180 = pnand %p178, %p179
    %p181 = pneg %p180
    // Predicated region
    $region9: #{rsu4_forward.14} parent=5 // pred_check
      _
    $region10: #{rsu4_forward.14} parent=5 // pred_check_branch
      %183 = sbr.rel (%p180) target = $region12
    $region11: #{rsu4_forward.14} parent=5 // pred_region
      %s184 = ssub.s32 %s11, 1
      // Predicated region
      $region13: #{rsu4_forward.14} parent=11 // pred_check
        %p185 = pneg %p100
      $region14: #{rsu4_forward.14} parent=11 // pred_check_branch
        %187 = sbr.rel (%p185) target = $region16
      $region15: #{rsu4_forward.14} parent=11 // pred_region
        _
      $region16: #{rsu4_forward.14} parent=11 // pred_fallthru
        _
      // Predicated region
      $region17: #{rsu4_forward.14} parent=11 // pred_check
        %p188 = pneg %p121
      $region18: #{rsu4_forward.14} parent=11 // pred_check_branch
        %190 = sbr.rel (%p188) target = $region20
      $region19: #{rsu4_forward.14} parent=11 // pred_region
        _
      $region20: #{rsu4_forward.14} parent=11 // pred_fallthru
        _
      // Predicated region
      $region21: #{rsu4_forward.14} parent=11 // pred_check
        %p191 = pneg %p142
      $region22: #{rsu4_forward.14} parent=11 // pred_check_branch
        %193 = sbr.rel (%p191) target = $region24
      $region23: #{rsu4_forward.14} parent=11 // pred_region
        _
      $region24: #{rsu4_forward.14} parent=11 // pred_fallthru
        _
    $region12: #{rsu4_forward.14} parent=5 // pred_fallthru
      _
    %p194 = scmp.lt.s32.totalorder %s11, 2
    // Predicated region
    $region25: #{rsu4_forward.14} parent=5 // pred_check
      %p195 = pneg %p194
    $region26: #{rsu4_forward.14} parent=5 // pred_check_branch
      %197 = sbr.rel (%p195) target = $region28
    $region27: #{rsu4_forward.14} parent=5 // pred_region
      // Predicated region
      $region29: #{rsu4_forward.14} parent=27 // pred_check
        %p198 = pneg %p45
      $region30: #{rsu4_forward.14} parent=27 // pred_check_branch
        %200 = sbr.rel (%p198) target = $region32
      $region31: #{rsu4_forward.14} parent=27 // pred_region
        %p201 = scmp.lt.s32.totalorder %s18, 1
        %s202 = scalar_select %p201, %s18, 1
        %p203 = scmp.lt.s32.totalorder %s19, 0
        %s204 = scalar_select %p203, %s19, 0
        %s205 = smul.addr %s202, 9
        %s206 = sadd.s32 %s204, %s205
        %s207 = smul.addr %s206, 4
        %s208 = scalar_lea.vmem %s0, %s207
      $region32: #{rsu4_forward.14} parent=27 // pred_fallthru
        _
      // Predicated region
      $region33: #{rsu4_forward.14} parent=27 // pred_check
        %p209 = pneg %p73
      $region34: #{rsu4_forward.14} parent=27 // pred_check_branch
        %211 = sbr.rel (%p209) target = $region36
      $region35: #{rsu4_forward.14} parent=27 // pred_region
        %p212 = scmp.lt.s32.totalorder %s18, 1
        %s213 = scalar_select %p212, %s18, 1
        %p214 = scmp.lt.s32.totalorder %s19, 0
        %s215 = scalar_select %p214, %s19, 0
        %s216 = smul.addr %s213, 9
        %s217 = sadd.s32 %s215, %s216
        %s218 = smul.addr %s217, 4
        %s219 = scalar_lea.vmem %s1, %s218
      $region36: #{rsu4_forward.14} parent=27 // pred_fallthru
        _
    $region28: #{rsu4_forward.14} parent=5 // pred_fallthru
      _
    %p220 = scmp.le.s32.totalorder 1, %s11
    %p221 = scmp.lt.s32.totalorder %s11, 3
    %p222 = pnand %p220, %p221
    %p223 = pneg %p222
    // Predicated region
    $region37: #{rsu4_forward.14} parent=5 // pred_check
      _
    $region38: #{rsu4_forward.14} parent=5 // pred_check_branch
      %225 = sbr.rel (%p222) target = $region40
    $region39: #{rsu4_forward.14} parent=5 // pred_region
      %s226 = ssub.s32 %s11, 1
      %p227 = scmp.lt.s32.totalorder %s20, 1
      %s228 = scalar_select %p227, %s20, 1
      %p229 = scmp.lt.s32.totalorder %s21, 0
      %s230 = scalar_select %p229, %s21, 0
      %s231 = smul.addr %s228, 9
      %s232 = sadd.s32 %s230, %s231
      %s233 = smul.addr %s232, 4
      %s234 = scalar_lea.vmem %s0, %s233
      %p235 = pneg %p51
      %p236 = pneg %p48
      %p237 = scmp.lt.s32.totalorder %s20, 1
      %s238 = scalar_select %p237, %s20, 1
      %p239 = scmp.lt.s32.totalorder %s21, 0
      %s240 = scalar_select %p239, %s21, 0
      %s241 = smul.addr %s238, 9
      %s242 = sadd.s32 %s240, %s241
      %s243 = smul.addr %s242, 4
      %s244 = scalar_lea.vmem %s1, %s243
      %p245 = pneg %p79
      %p246 = pneg %p76
      %p247 = pneg %p100
      %p248 = pneg %p97
      %p249 = pneg %p121
      %p250 = pneg %p118
      %p251 = pneg %p142
      %p252 = pneg %p139
      %p253 = pneg %p170
      %p254 = pneg %p167
      %p255 = scmp.lt.s32.totalorder %s20, 1
      %s256 = scalar_select %p255, %s20, 1
      %p257 = scmp.lt.s32.totalorder %s21, 0
      %s258 = scalar_select %p257, %s21, 0
      %s259 = sadd.s32 %s258, %s256
      %s260 = smul.addr %s259, 8
      %s261 = scalar_lea.vmem %s5, %s260
      %p262 = scmp.lt.s32.totalorder %s20, 1
      %s263 = scalar_select %p262, %s20, 1
      %p264 = scmp.lt.s32.totalorder %s21, 0
      %s265 = scalar_select %p264, %s21, 0
      %s266 = smul.addr %s263, 9
      %s267 = sadd.s32 %s265, %s266
      %s268 = smul.addr %s267, 4
      %s269 = scalar_lea.vmem %s0, %s268
      %p270 = scmp.lt.s32.totalorder %s20, 1
      %s271 = scalar_select %p270, %s20, 1
      %p272 = scmp.lt.s32.totalorder %s21, 0
      %s273 = scalar_select %p272, %s21, 0
      %s274 = smul.addr %s271, 9
      %s275 = sadd.s32 %s273, %s274
      %s276 = smul.addr %s275, 4
      %s277 = scalar_lea.vmem %s1, %s276
      %p278 = scmp.lt.s32.totalorder %s20, 1
      %s279 = scalar_select %p278, %s20, 1
      %p280 = scmp.lt.s32.totalorder %s21, 0
      %s281 = scalar_select %p280, %s21, 0
      %s282 = sadd.s32 %s281, %s279
      %s283 = smul.addr %s282, 8
      %s284 = scalar_lea.vmem %s5, %s283
      %v286 = vld [vmem:[%s4] sm:$0xff]
      %v287 = vld [vmem:[%s2] sm:$0xf]
      %v288 = vld [vmem:[%s269] sm:$0xf]
      %v289 = vld [vmem:[%s269 + $0x4] sm:$0xf]
      %v290 = vld [vmem:[%s269 + $0x8] sm:$0xf]
      %v291 = vld [vmem:[%s269 + $0xc] sm:$0xf]
      %v292 = vld [vmem:[%s269 + $0x10] sm:$0xf]
      %v293 = vld [vmem:[%s269 + $0x14] sm:$0xf]
      %v294 = vld [vmem:[%s269 + $0x18] sm:$0xf]
      %v295 = vld [vmem:[%s269 + $0x1c] sm:$0xf]
      %v296 = vld [vmem:[%s269 + $0x20] sm:$0xf]
      %v297 = vld [vmem:[%s3] sm:$0xf]
      %v298 = vld [vmem:[%s277] sm:$0xf]
      %v299 = vld [vmem:[%s277 + $0x4] sm:$0xf]
      %v300 = vld [vmem:[%s277 + $0x8] sm:$0xf]
      %v301 = vld [vmem:[%s277 + $0xc] sm:$0xf]
      %v302 = vld [vmem:[%s277 + $0x10] sm:$0xf]
      %v303 = vld [vmem:[%s277 + $0x14] sm:$0xf]
      %v304 = vld [vmem:[%s277 + $0x18] sm:$0xf]
      %v305 = vld [vmem:[%s277 + $0x1c] sm:$0xf]
      %v306 = vld [vmem:[%s277 + $0x20] sm:$0xf]
      %v316 = vunpack.c.l.b16 %v298
      %v317 = vunpack.c.l.b16 %v299
      %v318 = vunpack.c.l.b16 %v300
      %v319 = vunpack.c.l.b16 %v301
      %v320 = vunpack.c.l.b16 %v302
      %v321 = vunpack.c.l.b16 %v303
      %v322 = vunpack.c.l.b16 %v304
      %v323 = vunpack.c.l.b16 %v305
      %v324 = vunpack.c.l.b16 %v306
      %v325 = vpack.c.b16 %v317, %v316
      %v326 = vpack.c.b16 %v319, %v318
      %v327 = vpack.c.b16 %v321, %v320
      %v328 = vpack.c.b16 %v323, %v322
      %v329 = vpack.c.b16 %v324, %v324
      %vm334 = vcmask 588800
      %v336 = vsel %vm334, %v297, 0
      %vm338 = vcmask 1043456
      %v340 = vsel %vm338, %v329, 0
      %342 = vmatpush.bf16.msra.mxu0 0
      %343 = vmatpush.bf16.msra.mxu0 0
      %344 = vmatpush.bf16.msra.mxu0 0
      %345 = vmatpush.bf16.msra.mxu0 %v340
      %346 = vmatpush.bf16.msra.mxu0 %v328
      %347 = vmatpush.bf16.msra.mxu0 %v327
      %348 = vmatpush.bf16.msra.mxu0 %v326
      %349 = vmatpush.bf16.msra.mxu0 %v325
      %350 = vmatmul.bf16.gmra.mxu0 %v336
      %v351 = vpop.f32.mrf.mxu0
      %v352 = vadd.f32 0.0, %v351
      %v353 = vpop.f32.mrf.mxu0
      %354 = vdwg.mxu0
      %v364 = vunpack.c.l.b16 %v288
      %v365 = vunpack.c.l.b16 %v289
      %v366 = vunpack.c.l.b16 %v290
      %v367 = vunpack.c.l.b16 %v291
      %v368 = vunpack.c.l.b16 %v292
      %v369 = vunpack.c.l.b16 %v293
      %v370 = vunpack.c.l.b16 %v294
      %v371 = vunpack.c.l.b16 %v295
      %v372 = vunpack.c.l.b16 %v296
      %v373 = vpack.c.b16 %v365, %v364
      %v374 = vpack.c.b16 %v367, %v366
      %v375 = vpack.c.b16 %v369, %v368
      %v376 = vpack.c.b16 %v371, %v370
      %v377 = vpack.c.b16 %v372, %v372
      %v383 = vsel %vm334, %v287, 0
      %v386 = vsel %vm338, %v377, 0
      %388 = vmatpush.bf16.msra.mxu0 0
      %389 = vmatpush.bf16.msra.mxu0 0
      %390 = vmatpush.bf16.msra.mxu0 0
      %391 = vmatpush.bf16.msra.mxu0 %v386
      %392 = vmatpush.bf16.msra.mxu0 %v376
      %393 = vmatpush.bf16.msra.mxu0 %v375
      %394 = vmatpush.bf16.msra.mxu0 %v374
      %395 = vmatpush.bf16.msra.mxu0 %v373
      %396 = vmatmul.bf16.gmra.mxu0 %v383
      %v397 = vpop.f32.mrf.mxu0
      %v398 = vadd.f32 %v352, %v397
      %v399 = vpop.f32.mrf.mxu0
      %400 = vdwg.mxu0
      %402 = vset.pattern.permute.xlu0 0
      %403 = vperm.xlu0 %402, %v286
      %v404 = vpop.permute.xlu0 %403
      %v406 = vadd.f32 %v398, %v404
      %v407 = vmax.f32 %v406, 0.0
      %vm408 = vcmask 523264
      %409 = vst.msk [vmem:[%s284] sm:$0xff] %vm408, %v407
      %p410 = scmp.lt.s32.totalorder %s20, 1
      %s411 = scalar_select %p410, %s20, 1
      %p412 = scmp.lt.s32.totalorder %s21, 0
      %s413 = scalar_select %p412, %s21, 0
      %s414 = sadd.s32 %s413, %s411
      %s415 = smul.addr %s414, 8
      %s416 = scalar_lea.vmem %s5, %s415
      // Predicated region
      $region41: #{rsu4_forward.14} parent=39 // pred_check
        %p417 = pneg %p167
      $region42: #{rsu4_forward.14} parent=39 // pred_check_branch
        %419 = sbr.rel (%p417) target = $region44
      $region43: #{rsu4_forward.14} parent=39 // pred_region
        _
      $region44: #{rsu4_forward.14} parent=39 // pred_fallthru
        _
    $region40: #{rsu4_forward.14} parent=5 // pred_fallthru
      _
    %p420 = scmp.le.s32.totalorder 2, %s11
    // Predicated region
    $region45: #{rsu4_forward.14} parent=5 // pred_check
      %p421 = pneg %p420
    $region46: #{rsu4_forward.14} parent=5 // pred_check_branch
      %423 = sbr.rel (%p421) target = $region48
    $region47: #{rsu4_forward.14} parent=5 // pred_region
      %s424 = ssub.s32 %s11, 2
      // Predicated region
      $region49: #{rsu4_forward.14} parent=47 // pred_check
        %p425 = pneg %p173
      $region50: #{rsu4_forward.14} parent=47 // pred_check_branch
        %427 = sbr.rel (%p425) target = $region52
      $region51: #{rsu4_forward.14} parent=47 // pred_region
        %p428 = scmp.lt.s32.totalorder %s22, 1
        %s429 = scalar_select %p428, %s22, 1
        %p430 = scmp.lt.s32.totalorder %s23, 0
        %s431 = scalar_select %p430, %s23, 0
        %s432 = sadd.s32 %s431, %s429
        %s433 = smul.addr %s432, 8
        %s434 = scalar_lea.vmem %s5, %s433
      $region52: #{rsu4_forward.14} parent=47 // pred_fallthru
        _
    $region48: #{rsu4_forward.14} parent=5 // pred_fallthru
      _
  $region6: #{rsu4_forward.14} parent=0 // loop_footer
    %s15 = sadd.s32 1, %s11
  $region7: #{rsu4_forward.14} parent=0 // loop_footer_branch
    %10 = sbr.rel target = $region3
  $region8: #{rsu4_forward.14} parent=0 // loop_exit
    _

// kernel: rsu4_forward.15
$region0: #{rsu4_forward.15}
  #allocation0 [shape = 'u32[]', space=smem, size = 0x4, offset = 0x4, fixed_abs, tag = 'smem constant byte address 0x4 - core index']
  #allocation1 [shape = 'u32[72,128]{1,0:T(1,128)}', space=vmem, size = 0x9000, scoped, tag = 'internal scratch']
  %s0 = inlined_call_operand.vmem [shape: bf16[2,72,256], index: 0, kind: input, shape index: {}]
  %s1 = inlined_call_operand.vmem [shape: bf16[2,72,256], index: 1, kind: input, shape index: {}]
  %s2 = inlined_call_operand.vmem [shape: bf16[4,72], index: 2, kind: input, shape index: {}]
  %s3 = inlined_call_operand.vmem [shape: bf16[4,72], index: 3, kind: input, shape index: {}]
  %s4 = inlined_call_operand.vmem [shape: f32[4,1], index: 4, kind: input, shape index: {}]
  %s5 = inlined_call_operand.vmem [shape: f32[2,4,256], index: 5, kind: input, shape index: {}]
  %s6 = inlined_call_operand.vmem [shape: f32[2,4,256], index: 6, kind: output, shape index: {}]
  %s7 = sld [smem:[#allocation0]]
  $region57: #{rsu4_forward.15} parent=0
    _
  %s9 = ssub.s32 1, %s7
  %s10 = scalar_select 0, %s9, %s7
  loop: start=0, step=1, limit=4
  $region2: #{rsu4_forward.15} parent=0 // loop_pre_header
    _
  $region3: #{rsu4_forward.15} parent=0 // loop_header
    %s12 = sphi 0, %s16
    %p13 = scmp.ge.s32.totalorder %s12, 4
    %s19 = sphi 0, %s31
    %s20 = sphi 0, %s27
    %s21 = sphi 0, %s19
    %s22 = sphi 0, %s20
    %s23 = sphi 0, %s21
    %s24 = sphi 0, %s22
    %s36 = sphi 0, %s38
    %s39 = sphi 0, %s36
    %s40 = sphi 0, %s39
    %s56 = sphi 0, %s40
    %s64 = sphi 0, %s66
    %s67 = sphi 0, %s64
    %s68 = sphi 0, %s67
    %s84 = sphi 0, %s68
    %s88 = sphi 0, %s88
    %s90 = sphi 0, %s88
    %s91 = sphi 0, %s90
    %s105 = sphi 0, %s91
    %s109 = sphi 0, %s109
    %s111 = sphi 0, %s109
    %s112 = sphi 0, %s111
    %s126 = sphi 0, %s112
    %s130 = sphi 0, %s130
    %s132 = sphi 0, %s130
    %s133 = sphi 0, %s132
    %s147 = sphi 0, %s133
    %s155 = sphi 0, %s157
    %s158 = sphi 0, %s155
    %s159 = sphi 0, %s158
    %s175 = sphi 0, %s159
    %s183 = sphi 0, %s185
    %s186 = sphi 0, %s183
    %s187 = sphi 0, %s186
    %s203 = sphi 0, %s187
  $region4: #{rsu4_forward.15} parent=0 // loop_header_branch
    %15 = sbr.rel (%p13) target = $region8
  $region5: #{rsu4_forward.15} parent=0 // loop_body
    %s17 = ssub.s32 %s12, 1
    %s18 = ssub.s32 %s12, 2
    %s25 = sadd.s32 1, %s20
    %p26 = scmp.ge.s32.totalorder %s25, 1
    %s27 = scalar_select %p26, 0, %s25
    %s28 = sadd.s32 1, %s19
    %s29 = scalar_select %p26, %s28, %s19
    %p30 = scmp.ge.s32.totalorder %s29, 2
    %s31 = scalar_select %p30, 0, %s29
    %s32 = ssub.s32 %s19, %s31
    %s33 = ssub.s32 %s20, %s27
    %s34 = sor.u32 %s32, %s33
    %p35 = scmp.eq.s32.totalorder %s34, 0
    %s37 = sadd.s32 %s36, 1
    %s38 = scalar_select %p35, %s36, %s37
    %p41 = pneg %p35
    %p42 = scmp.eq.s32.totalorder %s12, 1
    %p43 = por %p41, %p42
    %p44 = scmp.ne.s32.totalorder %s36, %s39
    %p45 = scmp.eq.s32.totalorder %s12, 0
    %p46 = por %p44, %p45
    %p47 = scmp.ne.s32.totalorder %s36, %s39
    %p48 = scmp.eq.s32.totalorder %s17, 1
    %p49 = por %p47, %p48
    %p50 = scmp.ne.s32.totalorder %s39, %s40
    %p51 = scmp.eq.s32.totalorder %s17, 0
    %p52 = por %p50, %p51
    %p53 = scmp.ne.s32.totalorder %s39, %s40
    %p54 = scmp.eq.s32.totalorder %s18, 1
    %p55 = por %p53, %p54
    %p57 = scmp.ne.s32.totalorder %s40, %s56
    %p58 = scmp.eq.s32.totalorder %s18, 0
    %p59 = por %p57, %p58
    %s60 = ssub.s32 %s19, %s31
    %s61 = ssub.s32 %s20, %s27
    %s62 = sor.u32 %s60, %s61
    %p63 = scmp.eq.s32.totalorder %s62, 0
    %s65 = sadd.s32 %s64, 1
    %s66 = scalar_select %p63, %s64, %s65
    %p69 = pneg %p63
    %p70 = scmp.eq.s32.totalorder %s12, 1
    %p71 = por %p69, %p70
    %p72 = scmp.ne.s32.totalorder %s64, %s67
    %p73 = scmp.eq.s32.totalorder %s12, 0
    %p74 = por %p72, %p73
    %p75 = scmp.ne.s32.totalorder %s64, %s67
    %p76 = scmp.eq.s32.totalorder %s17, 1
    %p77 = por %p75, %p76
    %p78 = scmp.ne.s32.totalorder %s67, %s68
    %p79 = scmp.eq.s32.totalorder %s17, 0
    %p80 = por %p78, %p79
    %p81 = scmp.ne.s32.totalorder %s67, %s68
    %p82 = scmp.eq.s32.totalorder %s18, 1
    %p83 = por %p81, %p82
    %p85 = scmp.ne.s32.totalorder %s68, %s84
    %p86 = scmp.eq.s32.totalorder %s18, 0
    %p87 = por %p85, %p86
    %s89 = sadd.s32 %s88, 1
    %p92 = scmp.eq.s32.totalorder %s12, 1
    %p93 = scmp.ne.s32.totalorder %s88, %s90
    %p94 = scmp.eq.s32.totalorder %s12, 0
    %p95 = por %p93, %p94
    %p96 = scmp.ne.s32.totalorder %s88, %s90
    %p97 = scmp.eq.s32.totalorder %s17, 1
    %p98 = por %p96, %p97
    %p99 = scmp.ne.s32.totalorder %s90, %s91
    %p100 = scmp.eq.s32.totalorder %s17, 0
    %p101 = por %p99, %p100
    %p102 = scmp.ne.s32.totalorder %s90, %s91
    %p103 = scmp.eq.s32.totalorder %s18, 1
    %p104 = por %p102, %p103
    %p106 = scmp.ne.s32.totalorder %s91, %s105
    %p107 = scmp.eq.s32.totalorder %s18, 0
    %p108 = por %p106, %p107
    %s110 = sadd.s32 %s109, 1
    %p113 = scmp.eq.s32.totalorder %s12, 1
    %p114 = scmp.ne.s32.totalorder %s109, %s111
    %p115 = scmp.eq.s32.totalorder %s12, 0
    %p116 = por %p114, %p115
    %p117 = scmp.ne.s32.totalorder %s109, %s111
    %p118 = scmp.eq.s32.totalorder %s17, 1
    %p119 = por %p117, %p118
    %p120 = scmp.ne.s32.totalorder %s111, %s112
    %p121 = scmp.eq.s32.totalorder %s17, 0
    %p122 = por %p120, %p121
    %p123 = scmp.ne.s32.totalorder %s111, %s112
    %p124 = scmp.eq.s32.totalorder %s18, 1
    %p125 = por %p123, %p124
    %p127 = scmp.ne.s32.totalorder %s112, %s126
    %p128 = scmp.eq.s32.totalorder %s18, 0
    %p129 = por %p127, %p128
    %s131 = sadd.s32 %s130, 1
    %p134 = scmp.eq.s32.totalorder %s12, 1
    %p135 = scmp.ne.s32.totalorder %s130, %s132
    %p136 = scmp.eq.s32.totalorder %s12, 0
    %p137 = por %p135, %p136
    %p138 = scmp.ne.s32.totalorder %s130, %s132
    %p139 = scmp.eq.s32.totalorder %s17, 1
    %p140 = por %p138, %p139
    %p141 = scmp.ne.s32.totalorder %s132, %s133
    %p142 = scmp.eq.s32.totalorder %s17, 0
    %p143 = por %p141, %p142
    %p144 = scmp.ne.s32.totalorder %s132, %s133
    %p145 = scmp.eq.s32.totalorder %s18, 1
    %p146 = por %p144, %p145
    %p148 = scmp.ne.s32.totalorder %s133, %s147
    %p149 = scmp.eq.s32.totalorder %s18, 0
    %p150 = por %p148, %p149
    %s151 = ssub.s32 %s19, %s31
    %s152 = ssub.s32 %s20, %s27
    %s153 = sor.u32 %s151, %s152
    %p154 = scmp.eq.s32.totalorder %s153, 0
    %s156 = sadd.s32 %s155, 1
    %s157 = scalar_select %p154, %s155, %s156
    %p160 = pneg %p154
    %p161 = scmp.eq.s32.totalorder %s12, 1
    %p162 = por %p160, %p161
    %p163 = scmp.ne.s32.totalorder %s155, %s158
    %p164 = scmp.eq.s32.totalorder %s12, 0
    %p165 = por %p163, %p164
    %p166 = scmp.ne.s32.totalorder %s155, %s158
    %p167 = scmp.eq.s32.totalorder %s17, 1
    %p168 = por %p166, %p167
    %p169 = scmp.ne.s32.totalorder %s158, %s159
    %p170 = scmp.eq.s32.totalorder %s17, 0
    %p171 = por %p169, %p170
    %p172 = scmp.ne.s32.totalorder %s158, %s159
    %p173 = scmp.eq.s32.totalorder %s18, 1
    %p174 = por %p172, %p173
    %p176 = scmp.ne.s32.totalorder %s159, %s175
    %p177 = scmp.eq.s32.totalorder %s18, 0
    %p178 = por %p176, %p177
    %s179 = ssub.s32 %s19, %s31
    %s180 = ssub.s32 %s20, %s27
    %s181 = sor.u32 %s179, %s180
    %p182 = scmp.eq.s32.totalorder %s181, 0
    %s184 = sadd.s32 %s183, 1
    %s185 = scalar_select %p182, %s183, %s184
    %p188 = pneg %p182
    %p189 = scmp.eq.s32.totalorder %s12, 1
    %p190 = por %p188, %p189
    %p191 = scmp.ne.s32.totalorder %s183, %s186
    %p192 = scmp.eq.s32.totalorder %s12, 0
    %p193 = por %p191, %p192
    %p194 = scmp.ne.s32.totalorder %s183, %s186
    %p195 = scmp.eq.s32.totalorder %s17, 1
    %p196 = por %p194, %p195
    %p197 = scmp.ne.s32.totalorder %s186, %s187
    %p198 = scmp.eq.s32.totalorder %s17, 0
    %p199 = por %p197, %p198
    %p200 = scmp.ne.s32.totalorder %s186, %s187
    %p201 = scmp.eq.s32.totalorder %s18, 1
    %p202 = por %p200, %p201
    %p204 = scmp.ne.s32.totalorder %s187, %s203
    %p205 = scmp.eq.s32.totalorder %s18, 0
    %p206 = por %p204, %p205
    %p207 = scmp.le.s32.totalorder 1, %s12
    %p208 = scmp.lt.s32.totalorder %s12, 3
    %p209 = pnand %p207, %p208
    %p210 = pneg %p209
    // Predicated region
    $region9: #{rsu4_forward.15} parent=5 // pred_check
      _
    $region10: #{rsu4_forward.15} parent=5 // pred_check_branch
      %212 = sbr.rel (%p209) target = $region12
    $region11: #{rsu4_forward.15} parent=5 // pred_region
      %s213 = ssub.s32 %s12, 1
      // Predicated region
      $region13: #{rsu4_forward.15} parent=11 // pred_check
        %p214 = pneg %p101
      $region14: #{rsu4_forward.15} parent=11 // pred_check_branch
        %216 = sbr.rel (%p214) target = $region16
      $region15: #{rsu4_forward.15} parent=11 // pred_region
        _
      $region16: #{rsu4_forward.15} parent=11 // pred_fallthru
        _
      // Predicated region
      $region17: #{rsu4_forward.15} parent=11 // pred_check
        %p217 = pneg %p122
      $region18: #{rsu4_forward.15} parent=11 // pred_check_branch
        %219 = sbr.rel (%p217) target = $region20
      $region19: #{rsu4_forward.15} parent=11 // pred_region
        _
      $region20: #{rsu4_forward.15} parent=11 // pred_fallthru
        _
      // Predicated region
      $region21: #{rsu4_forward.15} parent=11 // pred_check
        %p220 = pneg %p143
      $region22: #{rsu4_forward.15} parent=11 // pred_check_branch
        %222 = sbr.rel (%p220) target = $region24
      $region23: #{rsu4_forward.15} parent=11 // pred_region
        _
      $region24: #{rsu4_forward.15} parent=11 // pred_fallthru
        _
    $region12: #{rsu4_forward.15} parent=5 // pred_fallthru
      _
    %p223 = scmp.lt.s32.totalorder %s12, 2
    // Predicated region
    $region25: #{rsu4_forward.15} parent=5 // pred_check
      %p224 = pneg %p223
    $region26: #{rsu4_forward.15} parent=5 // pred_check_branch
      %226 = sbr.rel (%p224) target = $region28
    $region27: #{rsu4_forward.15} parent=5 // pred_region
      // Predicated region
      $region29: #{rsu4_forward.15} parent=27 // pred_check
        %p227 = pneg %p46
      $region30: #{rsu4_forward.15} parent=27 // pred_check_branch
        %229 = sbr.rel (%p227) target = $region32
      $region31: #{rsu4_forward.15} parent=27 // pred_region
        %s230 = smul.u32 2, %s20
        %p231 = scmp.lt.s32.totalorder %s19, 1
        %s232 = scalar_select %p231, %s19, 1
        %p233 = scmp.lt.s32.totalorder %s230, 1
        %s234 = scalar_select %p233, %s230, 1
        %s235 = smul.addr %s232, 18
        %s236 = sadd.s32 %s234, %s235
        %s237 = smul.addr %s236, 4
        %s238 = scalar_lea.vmem %s0, %s237
        %s239 = smul.u32 2, %s20
      $region32: #{rsu4_forward.15} parent=27 // pred_fallthru
        _
      // Predicated region
      $region33: #{rsu4_forward.15} parent=27 // pred_check
        %p240 = pneg %p74
      $region34: #{rsu4_forward.15} parent=27 // pred_check_branch
        %242 = sbr.rel (%p240) target = $region36
      $region35: #{rsu4_forward.15} parent=27 // pred_region
        %s243 = smul.u32 2, %s20
        %p244 = scmp.lt.s32.totalorder %s19, 1
        %s245 = scalar_select %p244, %s19, 1
        %p246 = scmp.lt.s32.totalorder %s243, 1
        %s247 = scalar_select %p246, %s243, 1
        %s248 = smul.addr %s245, 18
        %s249 = sadd.s32 %s247, %s248
        %s250 = smul.addr %s249, 4
        %s251 = scalar_lea.vmem %s1, %s250
        %s252 = smul.u32 2, %s20
      $region36: #{rsu4_forward.15} parent=27 // pred_fallthru
        _
      // Predicated region
      $region37: #{rsu4_forward.15} parent=27 // pred_check
        %p253 = pneg %p165
      $region38: #{rsu4_forward.15} parent=27 // pred_check_branch
        %255 = sbr.rel (%p253) target = $region40
      $region39: #{rsu4_forward.15} parent=27 // pred_region
        %s256 = smul.u32 2, %s20
        %p257 = scmp.lt.s32.totalorder %s19, 1
        %s258 = scalar_select %p257, %s19, 1
        %p259 = scmp.lt.s32.totalorder %s256, 1
        %s260 = scalar_select %p259, %s256, 1
        %s261 = smul.addr %s258, 2
        %s262 = sadd.s32 %s260, %s261
        %s263 = smul.addr %s262, 4
        %s264 = scalar_lea.vmem %s5, %s263
        %s265 = smul.u32 2, %s20
      $region40: #{rsu4_forward.15} parent=27 // pred_fallthru
        _
    $region28: #{rsu4_forward.15} parent=5 // pred_fallthru
      _
    %p266 = scmp.le.s32.totalorder 1, %s12
    %p267 = scmp.lt.s32.totalorder %s12, 3
    %p268 = pnand %p266, %p267
    %p269 = pneg %p268
    // Predicated region
    $region41: #{rsu4_forward.15} parent=5 // pred_check
      _
    $region42: #{rsu4_forward.15} parent=5 // pred_check_branch
      %271 = sbr.rel (%p268) target = $region44
    $region43: #{rsu4_forward.15} parent=5 // pred_region
      %s272 = ssub.s32 %s12, 1
      %s273 = smul.u32 2, %s22
      %p274 = scmp.lt.s32.totalorder %s21, 1
      %s275 = scalar_select %p274, %s21, 1
      %p276 = scmp.lt.s32.totalorder %s273, 1
      %s277 = scalar_select %p276, %s273, 1
      %s278 = smul.addr %s275, 18
      %s279 = sadd.s32 %s277, %s278
      %s280 = smul.addr %s279, 4
      %s281 = scalar_lea.vmem %s0, %s280
      %p282 = pneg %p52
      %p283 = pneg %p49
      %s284 = smul.u32 2, %s22
      %p285 = scmp.lt.s32.totalorder %s21, 1
      %s286 = scalar_select %p285, %s21, 1
      %p287 = scmp.lt.s32.totalorder %s284, 1
      %s288 = scalar_select %p287, %s284, 1
      %s289 = smul.addr %s286, 18
      %s290 = sadd.s32 %s288, %s289
      %s291 = smul.addr %s290, 4
      %s292 = scalar_lea.vmem %s1, %s291
      %p293 = pneg %p80
      %p294 = pneg %p77
      %p295 = pneg %p101
      %p296 = pneg %p98
      %p297 = pneg %p122
      %p298 = pneg %p119
      %p299 = pneg %p143
      %p300 = pneg %p140
      %s301 = smul.u32 2, %s22
      %p302 = scmp.lt.s32.totalorder %s21, 1
      %s303 = scalar_select %p302, %s21, 1
      %p304 = scmp.lt.s32.totalorder %s301, 1
      %s305 = scalar_select %p304, %s301, 1
      %s306 = smul.addr %s303, 2
      %s307 = sadd.s32 %s305, %s306
      %s308 = smul.addr %s307, 4
      %s309 = scalar_lea.vmem %s5, %s308
      %p310 = pneg %p171
      %p311 = pneg %p168
      %p312 = pneg %p199
      %p313 = pneg %p196
      %s314 = smul.u32 2, %s22
      %p315 = scmp.lt.s32.totalorder %s21, 1
      %s316 = scalar_select %p315, %s21, 1
      %p317 = scmp.lt.s32.totalorder %s314, 1
      %s318 = scalar_select %p317, %s314, 1
      %s319 = smul.addr %s316, 2
      %s320 = sadd.s32 %s318, %s319
      %s321 = smul.addr %s320, 4
      %s322 = scalar_lea.vmem %s6, %s321
      %s323 = smul.u32 2, %s22
      %p324 = scmp.lt.s32.totalorder %s21, 1
      %s325 = scalar_select %p324, %s21, 1
      %p326 = scmp.lt.s32.totalorder %s323, 1
      %s327 = scalar_select %p326, %s323, 1
      %s328 = smul.addr %s325, 18
      %s329 = sadd.s32 %s327, %s328
      %s330 = smul.addr %s329, 4
      %s331 = scalar_lea.vmem %s0, %s330
      %s332 = smul.u32 2, %s22
      %s333 = smul.u32 2, %s22
      %p334 = scmp.lt.s32.totalorder %s21, 1
      %s335 = scalar_select %p334, %s21, 1
      %p336 = scmp.lt.s32.totalorder %s333, 1
      %s337 = scalar_select %p336, %s333, 1
      %s338 = smul.addr %s335, 18
      %s339 = sadd.s32 %s337, %s338
      %s340 = smul.addr %s339, 4
      %s341 = scalar_lea.vmem %s1, %s340
      %s342 = smul.u32 2, %s22
      %s343 = smul.u32 2, %s22
      %p344 = scmp.lt.s32.totalorder %s21, 1
      %s345 = scalar_select %p344, %s21, 1
      %p346 = scmp.lt.s32.totalorder %s343, 1
      %s347 = scalar_select %p346, %s343, 1
      %s348 = smul.addr %s345, 2
      %s349 = sadd.s32 %s347, %s348
      %s350 = smul.addr %s349, 4
      %s351 = scalar_lea.vmem %s5, %s350
      %s352 = smul.u32 2, %s22
      %s353 = smul.u32 2, %s22
      %p354 = scmp.lt.s32.totalorder %s21, 1
      %s355 = scalar_select %p354, %s21, 1
      %p356 = scmp.lt.s32.totalorder %s353, 1
      %s357 = scalar_select %p356, %s353, 1
      %s358 = smul.addr %s355, 2
      %s359 = sadd.s32 %s357, %s358
      %s360 = smul.addr %s359, 4
      %s361 = scalar_lea.vmem %s6, %s360
      %s362 = smul.u32 2, %s22
      %v364 = vld [vmem:[%s4] sm:$0xf]
      %v365 = vld [vmem:[%s2] sm:$0x3]
      %v366 = vld [vmem:[%s331] sm:$0xff]
      %v367 = vld [vmem:[%s331 + $0x8] sm:$0xff]
      %v368 = vld [vmem:[%s331 + $0x10] sm:$0xff]
      %v369 = vld [vmem:[%s331 + $0x18] sm:$0xff]
      %v370 = vld [vmem:[%s331 + $0x20] sm:$0xff]
      %v371 = vld [vmem:[%s331 + $0x28] sm:$0xff]
      %v372 = vld [vmem:[%s331 + $0x30] sm:$0xff]
      %v373 = vld [vmem:[%s331 + $0x38] sm:$0xff]
      %v374 = vld [vmem:[%s331 + $0x40] sm:$0xff]
      %v375 = vld [vmem:[%s3] sm:$0x3]
      %v376 = vld [vmem:[%s341] sm:$0xff]
      %v377 = vld [vmem:[%s341 + $0x8] sm:$0xff]
      %v378 = vld [vmem:[%s341 + $0x10] sm:$0xff]
      %v379 = vld [vmem:[%s341 + $0x18] sm:$0xff]
      %v380 = vld [vmem:[%s341 + $0x20] sm:$0xff]
      %v381 = vld [vmem:[%s341 + $0x28] sm:$0xff]
      %v382 = vld [vmem:[%s341 + $0x30] sm:$0xff]
      %v383 = vld [vmem:[%s341 + $0x38] sm:$0xff]
      %v384 = vld [vmem:[%s341 + $0x40] sm:$0xff]
      %v394 = vunpack.c.l.b16 %v376
      %v395 = vunpack.c.h.b16 %v376
      %v396 = vunpack.c.l.b16 %v377
      %v397 = vunpack.c.h.b16 %v377
      %v398 = vunpack.c.l.b16 %v378
      %v399 = vunpack.c.h.b16 %v378
      %v400 = vunpack.c.l.b16 %v379
      %v401 = vunpack.c.h.b16 %v379
      %v402 = vunpack.c.l.b16 %v380
      %v403 = vunpack.c.h.b16 %v380
      %v404 = vunpack.c.l.b16 %v381
      %v405 = vunpack.c.h.b16 %v381
      %v406 = vunpack.c.l.b16 %v382
      %v407 = vunpack.c.h.b16 %v382
      %v408 = vunpack.c.l.b16 %v383
      %v409 = vunpack.c.h.b16 %v383
      %v410 = vunpack.c.l.b16 %v384
      %v411 = vunpack.c.h.b16 %v384
      %v412 = vpack.c.b16 %v396, %v394
      %v413 = vpack.c.b16 %v397, %v395
      %v414 = vpack.c.b16 %v400, %v398
      %v415 = vpack.c.b16 %v401, %v399
      %v416 = vpack.c.b16 %v404, %v402
      %v417 = vpack.c.b16 %v405, %v403
      %v418 = vpack.c.b16 %v408, %v406
      %v419 = vpack.c.b16 %v409, %v407
      %v420 = vpack.c.b16 %v410, %v410
      %v421 = vpack.c.b16 %v411, %v411
      %vm430 = vcmask 588800
      %v432 = vsel %vm430, %v375, 0
      %vm434 = vcmask 1043456
      %v436 = vsel %vm434, %v420, 0
      %v439 = vsel %vm434, %v421, 0
      %441 = vmatpush.bf16.msra.mxu0 0
      %442 = vmatpush.bf16.msra.mxu0 0
      %443 = vmatpush.bf16.msra.mxu0 0
      %444 = vmatpush.bf16.msra.mxu0 %v436
      %445 = vmatpush.bf16.msra.mxu0 %v418
      %446 = vmatpush.bf16.msra.mxu0 %v416
      %447 = vmatpush.bf16.msra.mxu0 %v414
      %448 = vmatpush.bf16.msra.mxu0 %v412
      %449 = vmatmul.bf16.gmra.mxu0 %v432
      %v450 = vpop.f32.mrf.mxu0
      %v451 = vadd.f32 0.0, %v450
      %v452 = vpop.f32.mrf.mxu0
      %453 = vdwg.mxu0
      %454 = vmatpush.bf16.msra.mxu0 0
      %455 = vmatpush.bf16.msra.mxu0 0
      %456 = vmatpush.bf16.msra.mxu0 0
      %457 = vmatpush.bf16.msra.mxu0 %v439
      %458 = vmatpush.bf16.msra.mxu0 %v419
      %459 = vmatpush.bf16.msra.mxu0 %v417
      %460 = vmatpush.bf16.msra.mxu0 %v415
      %461 = vmatpush.bf16.msra.mxu0 %v413
      %462 = vmatmul.bf16.gmra.mxu0 %v432
      %v463 = vpop.f32.mrf.mxu0
      %v464 = vadd.f32 0.0, %v463
      %v465 = vpop.f32.mrf.mxu0
      %466 = vdwg.mxu0
      %v476 = vunpack.c.l.b16 %v366
      %v477 = vunpack.c.h.b16 %v366
      %v478 = vunpack.c.l.b16 %v367
      %v479 = vunpack.c.h.b16 %v367
      %v480 = vunpack.c.l.b16 %v368
      %v481 = vunpack.c.h.b16 %v368
      %v482 = vunpack.c.l.b16 %v369
      %v483 = vunpack.c.h.b16 %v369
      %v484 = vunpack.c.l.b16 %v370
      %v485 = vunpack.c.h.b16 %v370
      %v486 = vunpack.c.l.b16 %v371
      %v487 = vunpack.c.h.b16 %v371
      %v488 = vunpack.c.l.b16 %v372
      %v489 = vunpack.c.h.b16 %v372
      %v490 = vunpack.c.l.b16 %v373
      %v491 = vunpack.c.h.b16 %v373
      %v492 = vunpack.c.l.b16 %v374
      %v493 = vunpack.c.h.b16 %v374
      %v494 = vpack.c.b16 %v478, %v476
      %v495 = vpack.c.b16 %v479, %v477
      %v496 = vpack.c.b16 %v482, %v480
      %v497 = vpack.c.b16 %v483, %v481
      %v498 = vpack.c.b16 %v486, %v484
      %v499 = vpack.c.b16 %v487, %v485
      %v500 = vpack.c.b16 %v490, %v488
      %v501 = vpack.c.b16 %v491, %v489
      %v502 = vpack.c.b16 %v492, %v492
      %v503 = vpack.c.b16 %v493, %v493
      %v513 = vsel %vm430, %v365, 0
      %v516 = vsel %vm434, %v502, 0
      %v519 = vsel %vm434, %v503, 0
      %521 = vmatpush.bf16.msra.mxu0 0
      %522 = vmatpush.bf16.msra.mxu0 0
      %523 = vmatpush.bf16.msra.mxu0 0
      %524 = vmatpush.bf16.msra.mxu0 %v516
      %525 = vmatpush.bf16.msra.mxu0 %v500
      %526 = vmatpush.bf16.msra.mxu0 %v498
      %527 = vmatpush.bf16.msra.mxu0 %v496
      %528 = vmatpush.bf16.msra.mxu0 %v494
      %529 = vmatmul.bf16.gmra.mxu0 %v513
      %v530 = vpop.f32.mrf.mxu0
      %v531 = vadd.f32 %v451, %v530
      %v532 = vpop.f32.mrf.mxu0
      %533 = vdwg.mxu0
      %534 = vmatpush.bf16.msra.mxu0 0
      %535 = vmatpush.bf16.msra.mxu0 0
      %536 = vmatpush.bf16.msra.mxu0 0
      %537 = vmatpush.bf16.msra.mxu0 %v519
      %538 = vmatpush.bf16.msra.mxu0 %v501
      %539 = vmatpush.bf16.msra.mxu0 %v499
      %540 = vmatpush.bf16.msra.mxu0 %v497
      %541 = vmatpush.bf16.msra.mxu0 %v495
      %542 = vmatmul.bf16.gmra.mxu0 %v513
      %v543 = vpop.f32.mrf.mxu0
      %v544 = vadd.f32 %v464, %v543
      %v545 = vpop.f32.mrf.mxu0
      %546 = vdwg.mxu0
      %548 = vset.pattern.permute.xlu0 0
      %549 = vperm.xlu0 %548, %v364
      %v550 = vpop.permute.xlu0 %549
      %v552 = vadd.f32 %v531, %v550
      %v553 = vadd.f32 %v544, %v550
      %v554 = vmax.f32 %v552, 0.0
      %v555 = vmax.f32 %v553, 0.0
      %v556 = vld [vmem:[%s351] sm:$0xff]
      %558 = vst [vmem:[#allocation1] ss:$2 sm:$0xff] %v556
      %v559 = vld.sshfl [vmem:[#allocation1] sm:$0xff pattern:$0x75316420]
      %v560 = vld.sshfl [vmem:[#allocation1 + $0x8] sm:$0xff pattern:$0x75316420]
      %v563 = vadd.f32 %v554, %v559
      %v564 = vadd.f32 %v555, %v560
      %v567 = vrot.slane %v564, 4
      %v568 = vsel %vm434, %v563, %v567
      %570 = vst [vmem:[%s361] sm:$0xff] %v568
      %s571 = smul.u32 2, %s22
      %p572 = scmp.lt.s32.totalorder %s21, 1
      %s573 = scalar_select %p572, %s21, 1
      %p574 = scmp.lt.s32.totalorder %s571, 1
      %s575 = scalar_select %p574, %s571, 1
      %s576 = smul.addr %s573, 2
      %s577 = sadd.s32 %s575, %s576
      %s578 = smul.addr %s577, 4
      %s579 = scalar_lea.vmem %s6, %s578
      // Predicated region
      $region45: #{rsu4_forward.15} parent=43 // pred_check
        %p580 = pneg %p196
      $region46: #{rsu4_forward.15} parent=43 // pred_check_branch
        %582 = sbr.rel (%p580) target = $region48
      $region47: #{rsu4_forward.15} parent=43 // pred_region
        %s583 = smul.u32 2, %s22
      $region48: #{rsu4_forward.15} parent=43 // pred_fallthru
        _
    $region44: #{rsu4_forward.15} parent=5 // pred_fallthru
      _
    %p584 = scmp.le.s32.totalorder 2, %s12
    // Predicated region
    $region49: #{rsu4_forward.15} parent=5 // pred_check
      %p585 = pneg %p584
    $region50: #{rsu4_forward.15} parent=5 // pred_check_branch
      %587 = sbr.rel (%p585) target = $region52
    $region51: #{rsu4_forward.15} parent=5 // pred_region
      %s588 = ssub.s32 %s12, 2
      // Predicated region
      $region53: #{rsu4_forward.15} parent=51 // pred_check
        %p589 = pneg %p202
      $region54: #{rsu4_forward.15} parent=51 // pred_check_branch
        %591 = sbr.rel (%p589) target = $region56
      $region55: #{rsu4_forward.15} parent=51 // pred_region
        %s592 = smul.u32 2, %s24
        %p593 = scmp.lt.s32.totalorder %s23, 1
        %s594 = scalar_select %p593, %s23, 1
        %p595 = scmp.lt.s32.totalorder %s592, 1
        %s596 = scalar_select %p595, %s592, 1
        %s597 = smul.addr %s594, 2
        %s598 = sadd.s32 %s596, %s597
        %s599 = smul.addr %s598, 4
        %s600 = scalar_lea.vmem %s6, %s599
      $region56: #{rsu4_forward.15} parent=51 // pred_fallthru
        _
    $region52: #{rsu4_forward.15} parent=5 // pred_fallthru
      _
  $region6: #{rsu4_forward.15} parent=0 // loop_footer
    %s16 = sadd.s32 1, %s12
  $region7: #{rsu4_forward.15} parent=0 // loop_footer_branch
    %11 = sbr.rel target = $region3
  $region8: #{rsu4_forward.15} parent=0 // loop_exit
    _

</llo_original>
